<compile_context>
chip_gen: v7x
topology: tpu7x:2x2x1
jax: 0.10.0
libtpu: 0.0.40
codegen_flags: <defaults>
</compile_context>

<pallas_src>
import functools

import jax
import jax.numpy as jnp
from jax.experimental import pallas as pl
from jax.experimental.pallas import tpu as pltpu


# --------------------------------------------------------------------------
# Pallas kernel: one batch block, full sequence.
# --------------------------------------------------------------------------
def lstm_head_kernel(x_ref, wih_ref, whh_ref, b_ref,
                     w0_ref, b0_ref, w1r_ref, b1_ref,
                     out_ref, xg_s, h_all_s, *opt_scratch,
                     seq_len, batch_block, matmul_dtype=None):
    T, Bb = seq_len, batch_block
    H = whh_ref.shape[0]

    def mm(a, w):
        if matmul_dtype is not None:
            a = a.astype(matmul_dtype)
            w = w.astype(matmul_dtype)
        return jnp.dot(a, w, preferred_element_type=jnp.float32)

    # ---- hoisted input projection -> VMEM scratch (never a live value) -----
    xg_s[...] = mm(x_ref[...], wih_ref[...]) + b_ref[...]          # (T*Bb, 4H)

    # ---- recurrent weights: stream from a ref, never hold as a value -------
    if matmul_dtype is None:
        whh_src = whh_ref
    else:
        whh_s, = opt_scratch
        whh_s[...] = whh_ref[...].astype(matmul_dtype)             # cast once
        whh_src = whh_s
    # TODO(synk): hold W_hh resident in the MXU across the recurrence via
    # pltpu.matmul_push_rhs/matmul_acc_lhs/matmul_pop (removes T-1 weight
    # loads from the serial chain); omitted here for lowering portability.

    # ---- LSTM recurrence: only h/c live across steps ------------------------
    def step(t, carry):
        h, c = carry
        row = pl.multiple_of(t * Bb, Bb)
        h_op = h if matmul_dtype is None else h.astype(matmul_dtype)
        gates = xg_s[pl.ds(row, Bb), :] + jnp.dot(
            h_op, whh_src[...], preferred_element_type=jnp.float32)
        # PyTorch gate order: input, forget, cell(g), output
        i = jax.nn.sigmoid(gates[:, 0 * H:1 * H])
        f = jax.nn.sigmoid(gates[:, 1 * H:2 * H])
        g = jnp.tanh(gates[:, 2 * H:3 * H])
        o = jax.nn.sigmoid(gates[:, 3 * H:4 * H])
        c = f * c + i * g
        h = o * jnp.tanh(c)
        h_all_s[pl.ds(row, Bb), :] = h
        return h, c

    h0 = jnp.zeros((Bb, H), jnp.float32)
    c0 = jnp.zeros((Bb, H), jnp.float32)
    jax.lax.fori_loop(0, T, step, (h0, c0), unroll=True)
    # TODO(synk): for long sequences, chunk the time axis into an "arbitrary"
    # grid dim (h/c carried in VMEM scratch) so xg_s stays within scoped VMEM.

    # ---- MLP head, hoisted over all time steps ------------------------------
    z = jnp.maximum(mm(h_all_s[...], w0_ref[...]) + b0_ref[...], 0.0)
    # linear1 is (H2 -> 1): VPU multiply + lane reduction, not an N=1 matmul.
    y = jnp.tanh(jnp.sum(z * w1r_ref[...], axis=-1, keepdims=True) + b1_ref[...])
    out_ref[...] = y


# --------------------------------------------------------------------------
# Wrapper
# --------------------------------------------------------------------------
def torque_lstm_forward(x, params, matmul_dtype=jnp.bfloat16):
    """x: (B, T, D) float32. Returns (B, T, 1) float32."""
    B, T, D = x.shape
    wih, whh, b, w0, b0, w1, b1 = params
    H = whh.shape[0]
    H2 = w0.shape[1]
    assert wih.shape == (D, 4 * H)

    # Batch blocks of 8 sublanes; every block is an independent grid point.
    Bb = 8
    Bp = ((B + Bb - 1) // Bb) * Bb
    nb = Bp // Bb
    if Bp != B:
        x = jnp.pad(x, ((0, Bp - B), (0, 0), (0, 0)))

    # Per-block time-major flat layout: row (t*Bb + r) of block i = x[i*Bb+r, t].
    x_blk = (x.reshape(nb, Bb, T, D)
              .transpose(0, 2, 1, 3)
              .reshape(nb, T * Bb, D))

    w1_row = w1.reshape(1, H2)   # (H2,1) -> lane-dense row for the VPU reduce

    def wspec(shape):
        return pl.BlockSpec(shape, lambda i, s=shape: (0,) * len(s))

    kernel = functools.partial(lstm_head_kernel, seq_len=T, batch_block=Bb,
                               matmul_dtype=matmul_dtype)

    scratch = [pltpu.VMEM((T * Bb, 4 * H), jnp.float32),      # xg
               pltpu.VMEM((T * Bb, H), jnp.float32)]          # h_all
    if matmul_dtype is not None:
        scratch.append(pltpu.VMEM((H, 4 * H), matmul_dtype))  # whh cast

    flops_per_blk = 2 * T * Bb * (D * 4 * H + H * 4 * H + H * H2 + H2)
    cost = pl.CostEstimate(
        flops=nb * flops_per_blk,
        transcendentals=nb * T * Bb * (5 * H + 1),
        bytes_accessed=4 * (x_blk.size + wih.size + whh.size + b.size
                            + w0.size + b0.size + w1.size + b1.size
                            + nb * T * Bb))

    out_blk = pl.pallas_call(
        kernel,
        out_shape=jax.ShapeDtypeStruct((nb, T * Bb, 1), jnp.float32),
        grid=(nb,),
        in_specs=[
            pl.BlockSpec((None, T * Bb, D), lambda i: (i, 0, 0)),  # x block
            wspec((D, 4 * H)),     # W_ih^T
            wspec((H, 4 * H)),     # W_hh^T
            wspec((1, 4 * H)),     # b_ih + b_hh
            wspec((H, H2)),        # linear0 W^T
            wspec((1, H2)),        # linear0 b
            wspec((1, H2)),        # linear1 W as a lane-dense row
            wspec((1, 1)),         # linear1 b
        ],
        out_specs=pl.BlockSpec((None, T * Bb, 1), lambda i: (i, 0, 0)),
        scratch_shapes=scratch,
        compiler_params=pltpu.CompilerParams(
            dimension_semantics=("parallel",)),
        cost_estimate=cost,
    )(x_blk, wih, whh, b, w0, b0, w1_row, b1)

    out = (out_blk.reshape(nb, T, Bb, 1)
                  .transpose(0, 2, 1, 3)
                  .reshape(Bp, T, 1))
    return out[:B]


# --------------------------------------------------------------------------
# Pure-JAX reference (correctness check)
# --------------------------------------------------------------------------
def reference_forward(x, params):
    wih, whh, b, w0, b0, w1, b1 = params
    B = x.shape[0]
    H = whh.shape[0]

    def step(carry, x_t):
        h, c = carry
        gates = x_t @ wih + h @ whh + b[0]
        i = jax.nn.sigmoid(gates[:, 0 * H:1 * H])
        f = jax.nn.sigmoid(gates[:, 1 * H:2 * H])
        g = jnp.tanh(gates[:, 2 * H:3 * H])
        o = jax.nn.sigmoid(gates[:, 3 * H:4 * H])
        c = f * c + i * g
        h = o * jnp.tanh(c)
        y = jnp.tanh(jnp.maximum(h @ w0 + b0[0], 0.0) @ w1 + b1[0])
        return (h, c), y

    init = (jnp.zeros((B, H), jnp.float32), jnp.zeros((B, H), jnp.float32))
    _, ys = jax.lax.scan(step, init, jnp.transpose(x, (1, 0, 2)))
    return jnp.transpose(ys, (1, 0, 2))


# --------------------------------------------------------------------------
# Deterministic parameter init (shapes from the module's __init__)
# --------------------------------------------------------------------------
def init_params(key, joints=6, hidden_dim=128):
    D = joints * 2
    H = hidden_dim
    H2 = H // 2
    ks = jax.random.split(key, 8)
    u = lambda k, shape, scale: jax.random.uniform(
        k, shape, jnp.float32, minval=-scale, maxval=scale)

    s_lstm = 1.0 / jnp.sqrt(H)
    wih = u(ks[0], (D, 4 * H), s_lstm)                                # W_ih^T
    whh = u(ks[1], (H, 4 * H), s_lstm)                                # W_hh^T
    b = u(ks[2], (1, 4 * H), s_lstm) + u(ks[3], (1, 4 * H), s_lstm)   # b_ih+b_hh

    s0 = 1.0 / jnp.sqrt(H)
    w0 = u(ks[4], (H, H2), s0)
    b0 = u(ks[5], (1, H2), s0)
    s1 = 1.0 / jnp.sqrt(H2)
    w1 = u(ks[6], (H2, 1), s1)
    b1 = u(ks[7], (1, 1), s1)
    return (wih, whh, b, w0, b0, w1, b1)


if __name__ == "__main__":
    key = jax.random.PRNGKey(0)
    k_param, k_x = jax.random.split(key)

    batch, seq, joints, hidden = 2, 8, 6, 128
    params = init_params(k_param, joints=joints, hidden_dim=hidden)
    x = jax.random.normal(k_x, (batch, seq, joints * 2), jnp.float32)

    ref = reference_forward(x, params)

    # fp32 matmul operands: bit-tight against the reference.
    out_fp32 = jax.block_until_ready(
        torque_lstm_forward(x, params, matmul_dtype=None))
    assert out_fp32.shape == (batch, seq, 1)
    assert jnp.allclose(out_fp32, ref, rtol=1e-5, atol=2e-5), "fp32 mismatch"

    # Default path: bf16 weight operands, fp32 accumulation + fp32 gate math.
    out = jax.block_until_ready(torque_lstm_forward(x, params))
    assert out.shape == (batch, seq, 1)
    assert jnp.allclose(out, ref, rtol=5e-2, atol=5e-2), "bf16 mismatch"

    print("KERNEL_OK")
</pallas_src>

<mosaic_0001>
module attributes {stable_mosaic.version = 11 : i64} {
  func.func @lstm_head_kernel(%arg0: i32, %arg1: memref<1x64x12xf32, #tpu.memory_space<vmem>>, %arg2: memref<12x512xf32, #tpu.memory_space<vmem>>, %arg3: memref<128x512xf32, #tpu.memory_space<vmem>>, %arg4: memref<1x512xf32, #tpu.memory_space<vmem>>, %arg5: memref<128x64xf32, #tpu.memory_space<vmem>>, %arg6: memref<1x64xf32, #tpu.memory_space<vmem>>, %arg7: memref<1x64xf32, #tpu.memory_space<vmem>>, %arg8: memref<1x1xf32, #tpu.memory_space<vmem>>, %arg9: memref<1x64x1xf32, #tpu.memory_space<vmem>>, %arg10: memref<64x512xf32, #tpu.memory_space<vmem>>, %arg11: memref<64x128xf32, #tpu.memory_space<vmem>>) attributes {dimension_semantics = [#tpu.dimension_semantics<parallel>], iteration_bounds = array<i64: 1>, scalar_prefetch = 0 : i64, scratch_operands = 2 : i64, tpu.core_type = #tpu.core_type<tc>, window_params = [{transform_indices = @transform_0, window_bounds = array<i64: 1, 64, 12>}, {pipeline_mode = #tpu.pipeline_mode<synchronous>, transform_indices = @transform_1, window_bounds = array<i64: 12, 512>}, {pipeline_mode = #tpu.pipeline_mode<synchronous>, transform_indices = @transform_2, window_bounds = array<i64: 128, 512>}, {pipeline_mode = #tpu.pipeline_mode<synchronous>, transform_indices = @transform_3, window_bounds = array<i64: 1, 512>}, {pipeline_mode = #tpu.pipeline_mode<synchronous>, transform_indices = @transform_4, window_bounds = array<i64: 128, 64>}, {pipeline_mode = #tpu.pipeline_mode<synchronous>, transform_indices = @transform_5, window_bounds = array<i64: 1, 64>}, {pipeline_mode = #tpu.pipeline_mode<synchronous>, transform_indices = @transform_6, window_bounds = array<i64: 1, 64>}, {pipeline_mode = #tpu.pipeline_mode<synchronous>, transform_indices = @transform_7, window_bounds = array<i64: 1, 1>}, {transform_indices = @transform_8, window_bounds = array<i64: 1, 64, 1>}]} {
    %c0 = arith.constant 0 : index
    %c0_0 = arith.constant 0 : index
    %c0_1 = arith.constant 0 : index
    %0 = vector.load %arg1[%c0, %c0_0, %c0_1] : memref<1x64x12xf32, #tpu.memory_space<vmem>>, vector<1x64x12xf32>
    %1 = vector.shape_cast %0 : vector<1x64x12xf32> to vector<64x12xf32>
    %c0_2 = arith.constant 0 : index
    %c0_3 = arith.constant 0 : index
    %2 = vector.load %arg2[%c0_2, %c0_3] : memref<12x512xf32, #tpu.memory_space<vmem>>, vector<12x512xf32>
    %cst = arith.constant dense<0.000000e+00> : vector<64x512xf32>
    %3 = tpu.matmul %1, %2, %cst {dimension_numbers = #tpu.dot_dimension_numbers<[1], [0], [0], [1], [0, 0, 1, 1], [], []>} : vector<64x12xf32>, vector<12x512xf32>, vector<64x512xf32> -> vector<64x512xf32>
    %c0_4 = arith.constant 0 : index
    %c0_5 = arith.constant 0 : index
    %4 = vector.load %arg4[%c0_4, %c0_5] : memref<1x512xf32, #tpu.memory_space<vmem>>, vector<1x512xf32>
    %5 = vector.broadcast %4 : vector<1x512xf32> to vector<64x512xf32>
    %6 = arith.addf %3, %5 : vector<64x512xf32>
    %c0_6 = arith.constant 0 : index
    %c0_7 = arith.constant 0 : index
    %7 = vector.load %arg10[%c0_6, %c0_7] : memref<64x512xf32, #tpu.memory_space<vmem>>, vector<64x512xf32>
    tpu.vector_store %arg10[%c0_6, %c0_7], %6 {strides = array<i32>} : memref<64x512xf32, #tpu.memory_space<vmem>>, vector<64x512xf32>,
    %cst_8 = arith.constant 0.000000e+00 : f32
    %8 = vector.broadcast %cst_8 : f32 to vector<8x128xf32>
    %cst_9 = arith.constant 0.000000e+00 : f32
    %9 = vector.broadcast %cst_9 : f32 to vector<8x128xf32>
    %c0_i32 = arith.constant 0 : i32
    %c8_i32 = arith.constant 8 : i32
    %10 = arith.muli %c0_i32, %c8_i32 : i32
    %11 = tpu.assume_multiple %10, 8 : i32
    %12 = arith.index_cast %11 : i32 to index
    %c0_10 = arith.constant 0 : index
    %13 = vector.load %arg10[%12, %c0_10] : memref<64x512xf32, #tpu.memory_space<vmem>>, vector<8x512xf32>
    %c0_11 = arith.constant 0 : index
    %c0_12 = arith.constant 0 : index
    %14 = vector.load %arg3[%c0_11, %c0_12] : memref<128x512xf32, #tpu.memory_space<vmem>>, vector<128x512xf32>
    %cst_13 = arith.constant dense<0.000000e+00> : vector<8x512xf32>
    %15 = tpu.matmul %8, %14, %cst_13 {dimension_numbers = #tpu.dot_dimension_numbers<[1], [0], [0], [1], [0, 0, 1, 1], [], []>} : vector<8x128xf32>, vector<128x512xf32>, vector<8x512xf32> -> vector<8x512xf32>
    %16 = arith.addf %13, %15 : vector<8x512xf32>
    %17 = vector.extract_strided_slice %16 {offsets = [0, 0], sizes = [8, 128], strides = [1, 1]} : vector<8x512xf32> to vector<8x128xf32>
    %18 = arith.negf %17 : vector<8x128xf32>
    %19 = math.exp %18 : vector<8x128xf32>
    %cst_14 = arith.constant 1.000000e+00 : f32
    %20 = vector.broadcast %cst_14 : f32 to vector<8x128xf32>
    %21 = arith.addf %20, %19 : vector<8x128xf32>
    %22 = arith.divf %20, %21 : vector<8x128xf32>
    %23 = vector.extract_strided_slice %16 {offsets = [0, 128], sizes = [8, 128], strides = [1, 1]} : vector<8x512xf32> to vector<8x128xf32>
    %24 = arith.negf %23 : vector<8x128xf32>
    %25 = math.exp %24 : vector<8x128xf32>
    %cst_15 = arith.constant 1.000000e+00 : f32
    %26 = vector.broadcast %cst_15 : f32 to vector<8x128xf32>
    %27 = arith.addf %26, %25 : vector<8x128xf32>
    %28 = arith.divf %26, %27 : vector<8x128xf32>
    %29 = vector.extract_strided_slice %16 {offsets = [0, 256], sizes = [8, 128], strides = [1, 1]} : vector<8x512xf32> to vector<8x128xf32>
    %30 = math.tanh %29 : vector<8x128xf32>
    %31 = vector.extract_strided_slice %16 {offsets = [0, 384], sizes = [8, 128], strides = [1, 1]} : vector<8x512xf32> to vector<8x128xf32>
    %32 = arith.negf %31 : vector<8x128xf32>
    %33 = math.exp %32 : vector<8x128xf32>
    %cst_16 = arith.constant 1.000000e+00 : f32
    %34 = vector.broadcast %cst_16 : f32 to vector<8x128xf32>
    %35 = arith.addf %34, %33 : vector<8x128xf32>
    %36 = arith.divf %34, %35 : vector<8x128xf32>
    %37 = arith.mulf %28, %9 : vector<8x128xf32>
    %38 = arith.mulf %22, %30 : vector<8x128xf32>
    %39 = arith.addf %37, %38 : vector<8x128xf32>
    %40 = math.tanh %39 : vector<8x128xf32>
    %41 = arith.mulf %36, %40 : vector<8x128xf32>
    %42 = arith.index_cast %11 : i32 to index
    %c0_17 = arith.constant 0 : index
    %43 = vector.load %arg11[%42, %c0_17] : memref<64x128xf32, #tpu.memory_space<vmem>>, vector<8x128xf32>
    tpu.vector_store %arg11[%42, %c0_17], %41 {strides = array<i32>} : memref<64x128xf32, #tpu.memory_space<vmem>>, vector<8x128xf32>,
    %c1_i32 = arith.constant 1 : i32
    %c8_i32_18 = arith.constant 8 : i32
    %44 = arith.muli %c1_i32, %c8_i32_18 : i32
    %45 = tpu.assume_multiple %44, 8 : i32
    %46 = arith.index_cast %45 : i32 to index
    %c0_19 = arith.constant 0 : index
    %47 = vector.load %arg10[%46, %c0_19] : memref<64x512xf32, #tpu.memory_space<vmem>>, vector<8x512xf32>
    %c0_20 = arith.constant 0 : index
    %c0_21 = arith.constant 0 : index
    %48 = vector.load %arg3[%c0_20, %c0_21] : memref<128x512xf32, #tpu.memory_space<vmem>>, vector<128x512xf32>
    %cst_22 = arith.constant dense<0.000000e+00> : vector<8x512xf32>
    %49 = tpu.matmul %41, %48, %cst_22 {dimension_numbers = #tpu.dot_dimension_numbers<[1], [0], [0], [1], [0, 0, 1, 1], [], []>} : vector<8x128xf32>, vector<128x512xf32>, vector<8x512xf32> -> vector<8x512xf32>
    %50 = arith.addf %47, %49 : vector<8x512xf32>
    %51 = vector.extract_strided_slice %50 {offsets = [0, 0], sizes = [8, 128], strides = [1, 1]} : vector<8x512xf32> to vector<8x128xf32>
    %52 = arith.negf %51 : vector<8x128xf32>
    %53 = math.exp %52 : vector<8x128xf32>
    %cst_23 = arith.constant 1.000000e+00 : f32
    %54 = vector.broadcast %cst_23 : f32 to vector<8x128xf32>
    %55 = arith.addf %54, %53 : vector<8x128xf32>
    %56 = arith.divf %54, %55 : vector<8x128xf32>
    %57 = vector.extract_strided_slice %50 {offsets = [0, 128], sizes = [8, 128], strides = [1, 1]} : vector<8x512xf32> to vector<8x128xf32>
    %58 = arith.negf %57 : vector<8x128xf32>
    %59 = math.exp %58 : vector<8x128xf32>
    %cst_24 = arith.constant 1.000000e+00 : f32
    %60 = vector.broadcast %cst_24 : f32 to vector<8x128xf32>
    %61 = arith.addf %60, %59 : vector<8x128xf32>
    %62 = arith.divf %60, %61 : vector<8x128xf32>
    %63 = vector.extract_strided_slice %50 {offsets = [0, 256], sizes = [8, 128], strides = [1, 1]} : vector<8x512xf32> to vector<8x128xf32>
    %64 = math.tanh %63 : vector<8x128xf32>
    %65 = vector.extract_strided_slice %50 {offsets = [0, 384], sizes = [8, 128], strides = [1, 1]} : vector<8x512xf32> to vector<8x128xf32>
    %66 = arith.negf %65 : vector<8x128xf32>
    %67 = math.exp %66 : vector<8x128xf32>
    %cst_25 = arith.constant 1.000000e+00 : f32
    %68 = vector.broadcast %cst_25 : f32 to vector<8x128xf32>
    %69 = arith.addf %68, %67 : vector<8x128xf32>
    %70 = arith.divf %68, %69 : vector<8x128xf32>
    %71 = arith.mulf %62, %39 : vector<8x128xf32>
    %72 = arith.mulf %56, %64 : vector<8x128xf32>
    %73 = arith.addf %71, %72 : vector<8x128xf32>
    %74 = math.tanh %73 : vector<8x128xf32>
    %75 = arith.mulf %70, %74 : vector<8x128xf32>
    %76 = arith.index_cast %45 : i32 to index
    %c0_26 = arith.constant 0 : index
    %77 = vector.load %arg11[%76, %c0_26] : memref<64x128xf32, #tpu.memory_space<vmem>>, vector<8x128xf32>
    tpu.vector_store %arg11[%76, %c0_26], %75 {strides = array<i32>} : memref<64x128xf32, #tpu.memory_space<vmem>>, vector<8x128xf32>,
    %c2_i32 = arith.constant 2 : i32
    %c8_i32_27 = arith.constant 8 : i32
    %78 = arith.muli %c2_i32, %c8_i32_27 : i32
    %79 = tpu.assume_multiple %78, 8 : i32
    %80 = arith.index_cast %79 : i32 to index
    %c0_28 = arith.constant 0 : index
    %81 = vector.load %arg10[%80, %c0_28] : memref<64x512xf32, #tpu.memory_space<vmem>>, vector<8x512xf32>
    %c0_29 = arith.constant 0 : index
    %c0_30 = arith.constant 0 : index
    %82 = vector.load %arg3[%c0_29, %c0_30] : memref<128x512xf32, #tpu.memory_space<vmem>>, vector<128x512xf32>
    %cst_31 = arith.constant dense<0.000000e+00> : vector<8x512xf32>
    %83 = tpu.matmul %75, %82, %cst_31 {dimension_numbers = #tpu.dot_dimension_numbers<[1], [0], [0], [1], [0, 0, 1, 1], [], []>} : vector<8x128xf32>, vector<128x512xf32>, vector<8x512xf32> -> vector<8x512xf32>
    %84 = arith.addf %81, %83 : vector<8x512xf32>
    %85 = vector.extract_strided_slice %84 {offsets = [0, 0], sizes = [8, 128], strides = [1, 1]} : vector<8x512xf32> to vector<8x128xf32>
    %86 = arith.negf %85 : vector<8x128xf32>
    %87 = math.exp %86 : vector<8x128xf32>
    %cst_32 = arith.constant 1.000000e+00 : f32
    %88 = vector.broadcast %cst_32 : f32 to vector<8x128xf32>
    %89 = arith.addf %88, %87 : vector<8x128xf32>
    %90 = arith.divf %88, %89 : vector<8x128xf32>
    %91 = vector.extract_strided_slice %84 {offsets = [0, 128], sizes = [8, 128], strides = [1, 1]} : vector<8x512xf32> to vector<8x128xf32>
    %92 = arith.negf %91 : vector<8x128xf32>
    %93 = math.exp %92 : vector<8x128xf32>
    %cst_33 = arith.constant 1.000000e+00 : f32
    %94 = vector.broadcast %cst_33 : f32 to vector<8x128xf32>
    %95 = arith.addf %94, %93 : vector<8x128xf32>
    %96 = arith.divf %94, %95 : vector<8x128xf32>
    %97 = vector.extract_strided_slice %84 {offsets = [0, 256], sizes = [8, 128], strides = [1, 1]} : vector<8x512xf32> to vector<8x128xf32>
    %98 = math.tanh %97 : vector<8x128xf32>
    %99 = vector.extract_strided_slice %84 {offsets = [0, 384], sizes = [8, 128], strides = [1, 1]} : vector<8x512xf32> to vector<8x128xf32>
    %100 = arith.negf %99 : vector<8x128xf32>
    %101 = math.exp %100 : vector<8x128xf32>
    %cst_34 = arith.constant 1.000000e+00 : f32
    %102 = vector.broadcast %cst_34 : f32 to vector<8x128xf32>
    %103 = arith.addf %102, %101 : vector<8x128xf32>
    %104 = arith.divf %102, %103 : vector<8x128xf32>
    %105 = arith.mulf %96, %73 : vector<8x128xf32>
    %106 = arith.mulf %90, %98 : vector<8x128xf32>
    %107 = arith.addf %105, %106 : vector<8x128xf32>
    %108 = math.tanh %107 : vector<8x128xf32>
    %109 = arith.mulf %104, %108 : vector<8x128xf32>
    %110 = arith.index_cast %79 : i32 to index
    %c0_35 = arith.constant 0 : index
    %111 = vector.load %arg11[%110, %c0_35] : memref<64x128xf32, #tpu.memory_space<vmem>>, vector<8x128xf32>
    tpu.vector_store %arg11[%110, %c0_35], %109 {strides = array<i32>} : memref<64x128xf32, #tpu.memory_space<vmem>>, vector<8x128xf32>,
    %c3_i32 = arith.constant 3 : i32
    %c8_i32_36 = arith.constant 8 : i32
    %112 = arith.muli %c3_i32, %c8_i32_36 : i32
    %113 = tpu.assume_multiple %112, 8 : i32
    %114 = arith.index_cast %113 : i32 to index
    %c0_37 = arith.constant 0 : index
    %115 = vector.load %arg10[%114, %c0_37] : memref<64x512xf32, #tpu.memory_space<vmem>>, vector<8x512xf32>
    %c0_38 = arith.constant 0 : index
    %c0_39 = arith.constant 0 : index
    %116 = vector.load %arg3[%c0_38, %c0_39] : memref<128x512xf32, #tpu.memory_space<vmem>>, vector<128x512xf32>
    %cst_40 = arith.constant dense<0.000000e+00> : vector<8x512xf32>
    %117 = tpu.matmul %109, %116, %cst_40 {dimension_numbers = #tpu.dot_dimension_numbers<[1], [0], [0], [1], [0, 0, 1, 1], [], []>} : vector<8x128xf32>, vector<128x512xf32>, vector<8x512xf32> -> vector<8x512xf32>
    %118 = arith.addf %115, %117 : vector<8x512xf32>
    %119 = vector.extract_strided_slice %118 {offsets = [0, 0], sizes = [8, 128], strides = [1, 1]} : vector<8x512xf32> to vector<8x128xf32>
    %120 = arith.negf %119 : vector<8x128xf32>
    %121 = math.exp %120 : vector<8x128xf32>
    %cst_41 = arith.constant 1.000000e+00 : f32
    %122 = vector.broadcast %cst_41 : f32 to vector<8x128xf32>
    %123 = arith.addf %122, %121 : vector<8x128xf32>
    %124 = arith.divf %122, %123 : vector<8x128xf32>
    %125 = vector.extract_strided_slice %118 {offsets = [0, 128], sizes = [8, 128], strides = [1, 1]} : vector<8x512xf32> to vector<8x128xf32>
    %126 = arith.negf %125 : vector<8x128xf32>
    %127 = math.exp %126 : vector<8x128xf32>
    %cst_42 = arith.constant 1.000000e+00 : f32
    %128 = vector.broadcast %cst_42 : f32 to vector<8x128xf32>
    %129 = arith.addf %128, %127 : vector<8x128xf32>
    %130 = arith.divf %128, %129 : vector<8x128xf32>
    %131 = vector.extract_strided_slice %118 {offsets = [0, 256], sizes = [8, 128], strides = [1, 1]} : vector<8x512xf32> to vector<8x128xf32>
    %132 = math.tanh %131 : vector<8x128xf32>
    %133 = vector.extract_strided_slice %118 {offsets = [0, 384], sizes = [8, 128], strides = [1, 1]} : vector<8x512xf32> to vector<8x128xf32>
    %134 = arith.negf %133 : vector<8x128xf32>
    %135 = math.exp %134 : vector<8x128xf32>
    %cst_43 = arith.constant 1.000000e+00 : f32
    %136 = vector.broadcast %cst_43 : f32 to vector<8x128xf32>
    %137 = arith.addf %136, %135 : vector<8x128xf32>
    %138 = arith.divf %136, %137 : vector<8x128xf32>
    %139 = arith.mulf %130, %107 : vector<8x128xf32>
    %140 = arith.mulf %124, %132 : vector<8x128xf32>
    %141 = arith.addf %139, %140 : vector<8x128xf32>
    %142 = math.tanh %141 : vector<8x128xf32>
    %143 = arith.mulf %138, %142 : vector<8x128xf32>
    %144 = arith.index_cast %113 : i32 to index
    %c0_44 = arith.constant 0 : index
    %145 = vector.load %arg11[%144, %c0_44] : memref<64x128xf32, #tpu.memory_space<vmem>>, vector<8x128xf32>
    tpu.vector_store %arg11[%144, %c0_44], %143 {strides = array<i32>} : memref<64x128xf32, #tpu.memory_space<vmem>>, vector<8x128xf32>,
    %c4_i32 = arith.constant 4 : i32
    %c8_i32_45 = arith.constant 8 : i32
    %146 = arith.muli %c4_i32, %c8_i32_45 : i32
    %147 = tpu.assume_multiple %146, 8 : i32
    %148 = arith.index_cast %147 : i32 to index
    %c0_46 = arith.constant 0 : index
    %149 = vector.load %arg10[%148, %c0_46] : memref<64x512xf32, #tpu.memory_space<vmem>>, vector<8x512xf32>
    %c0_47 = arith.constant 0 : index
    %c0_48 = arith.constant 0 : index
    %150 = vector.load %arg3[%c0_47, %c0_48] : memref<128x512xf32, #tpu.memory_space<vmem>>, vector<128x512xf32>
    %cst_49 = arith.constant dense<0.000000e+00> : vector<8x512xf32>
    %151 = tpu.matmul %143, %150, %cst_49 {dimension_numbers = #tpu.dot_dimension_numbers<[1], [0], [0], [1], [0, 0, 1, 1], [], []>} : vector<8x128xf32>, vector<128x512xf32>, vector<8x512xf32> -> vector<8x512xf32>
    %152 = arith.addf %149, %151 : vector<8x512xf32>
    %153 = vector.extract_strided_slice %152 {offsets = [0, 0], sizes = [8, 128], strides = [1, 1]} : vector<8x512xf32> to vector<8x128xf32>
    %154 = arith.negf %153 : vector<8x128xf32>
    %155 = math.exp %154 : vector<8x128xf32>
    %cst_50 = arith.constant 1.000000e+00 : f32
    %156 = vector.broadcast %cst_50 : f32 to vector<8x128xf32>
    %157 = arith.addf %156, %155 : vector<8x128xf32>
    %158 = arith.divf %156, %157 : vector<8x128xf32>
    %159 = vector.extract_strided_slice %152 {offsets = [0, 128], sizes = [8, 128], strides = [1, 1]} : vector<8x512xf32> to vector<8x128xf32>
    %160 = arith.negf %159 : vector<8x128xf32>
    %161 = math.exp %160 : vector<8x128xf32>
    %cst_51 = arith.constant 1.000000e+00 : f32
    %162 = vector.broadcast %cst_51 : f32 to vector<8x128xf32>
    %163 = arith.addf %162, %161 : vector<8x128xf32>
    %164 = arith.divf %162, %163 : vector<8x128xf32>
    %165 = vector.extract_strided_slice %152 {offsets = [0, 256], sizes = [8, 128], strides = [1, 1]} : vector<8x512xf32> to vector<8x128xf32>
    %166 = math.tanh %165 : vector<8x128xf32>
    %167 = vector.extract_strided_slice %152 {offsets = [0, 384], sizes = [8, 128], strides = [1, 1]} : vector<8x512xf32> to vector<8x128xf32>
    %168 = arith.negf %167 : vector<8x128xf32>
    %169 = math.exp %168 : vector<8x128xf32>
    %cst_52 = arith.constant 1.000000e+00 : f32
    %170 = vector.broadcast %cst_52 : f32 to vector<8x128xf32>
    %171 = arith.addf %170, %169 : vector<8x128xf32>
    %172 = arith.divf %170, %171 : vector<8x128xf32>
    %173 = arith.mulf %164, %141 : vector<8x128xf32>
    %174 = arith.mulf %158, %166 : vector<8x128xf32>
    %175 = arith.addf %173, %174 : vector<8x128xf32>
    %176 = math.tanh %175 : vector<8x128xf32>
    %177 = arith.mulf %172, %176 : vector<8x128xf32>
    %178 = arith.index_cast %147 : i32 to index
    %c0_53 = arith.constant 0 : index
    %179 = vector.load %arg11[%178, %c0_53] : memref<64x128xf32, #tpu.memory_space<vmem>>, vector<8x128xf32>
    tpu.vector_store %arg11[%178, %c0_53], %177 {strides = array<i32>} : memref<64x128xf32, #tpu.memory_space<vmem>>, vector<8x128xf32>,
    %c5_i32 = arith.constant 5 : i32
    %c8_i32_54 = arith.constant 8 : i32
    %180 = arith.muli %c5_i32, %c8_i32_54 : i32
    %181 = tpu.assume_multiple %180, 8 : i32
    %182 = arith.index_cast %181 : i32 to index
    %c0_55 = arith.constant 0 : index
    %183 = vector.load %arg10[%182, %c0_55] : memref<64x512xf32, #tpu.memory_space<vmem>>, vector<8x512xf32>
    %c0_56 = arith.constant 0 : index
    %c0_57 = arith.constant 0 : index
    %184 = vector.load %arg3[%c0_56, %c0_57] : memref<128x512xf32, #tpu.memory_space<vmem>>, vector<128x512xf32>
    %cst_58 = arith.constant dense<0.000000e+00> : vector<8x512xf32>
    %185 = tpu.matmul %177, %184, %cst_58 {dimension_numbers = #tpu.dot_dimension_numbers<[1], [0], [0], [1], [0, 0, 1, 1], [], []>} : vector<8x128xf32>, vector<128x512xf32>, vector<8x512xf32> -> vector<8x512xf32>
    %186 = arith.addf %183, %185 : vector<8x512xf32>
    %187 = vector.extract_strided_slice %186 {offsets = [0, 0], sizes = [8, 128], strides = [1, 1]} : vector<8x512xf32> to vector<8x128xf32>
    %188 = arith.negf %187 : vector<8x128xf32>
    %189 = math.exp %188 : vector<8x128xf32>
    %cst_59 = arith.constant 1.000000e+00 : f32
    %190 = vector.broadcast %cst_59 : f32 to vector<8x128xf32>
    %191 = arith.addf %190, %189 : vector<8x128xf32>
    %192 = arith.divf %190, %191 : vector<8x128xf32>
    %193 = vector.extract_strided_slice %186 {offsets = [0, 128], sizes = [8, 128], strides = [1, 1]} : vector<8x512xf32> to vector<8x128xf32>
    %194 = arith.negf %193 : vector<8x128xf32>
    %195 = math.exp %194 : vector<8x128xf32>
    %cst_60 = arith.constant 1.000000e+00 : f32
    %196 = vector.broadcast %cst_60 : f32 to vector<8x128xf32>
    %197 = arith.addf %196, %195 : vector<8x128xf32>
    %198 = arith.divf %196, %197 : vector<8x128xf32>
    %199 = vector.extract_strided_slice %186 {offsets = [0, 256], sizes = [8, 128], strides = [1, 1]} : vector<8x512xf32> to vector<8x128xf32>
    %200 = math.tanh %199 : vector<8x128xf32>
    %201 = vector.extract_strided_slice %186 {offsets = [0, 384], sizes = [8, 128], strides = [1, 1]} : vector<8x512xf32> to vector<8x128xf32>
    %202 = arith.negf %201 : vector<8x128xf32>
    %203 = math.exp %202 : vector<8x128xf32>
    %cst_61 = arith.constant 1.000000e+00 : f32
    %204 = vector.broadcast %cst_61 : f32 to vector<8x128xf32>
    %205 = arith.addf %204, %203 : vector<8x128xf32>
    %206 = arith.divf %204, %205 : vector<8x128xf32>
    %207 = arith.mulf %198, %175 : vector<8x128xf32>
    %208 = arith.mulf %192, %200 : vector<8x128xf32>
    %209 = arith.addf %207, %208 : vector<8x128xf32>
    %210 = math.tanh %209 : vector<8x128xf32>
    %211 = arith.mulf %206, %210 : vector<8x128xf32>
    %212 = arith.index_cast %181 : i32 to index
    %c0_62 = arith.constant 0 : index
    %213 = vector.load %arg11[%212, %c0_62] : memref<64x128xf32, #tpu.memory_space<vmem>>, vector<8x128xf32>
    tpu.vector_store %arg11[%212, %c0_62], %211 {strides = array<i32>} : memref<64x128xf32, #tpu.memory_space<vmem>>, vector<8x128xf32>,
    %c6_i32 = arith.constant 6 : i32
    %c8_i32_63 = arith.constant 8 : i32
    %214 = arith.muli %c6_i32, %c8_i32_63 : i32
    %215 = tpu.assume_multiple %214, 8 : i32
    %216 = arith.index_cast %215 : i32 to index
    %c0_64 = arith.constant 0 : index
    %217 = vector.load %arg10[%216, %c0_64] : memref<64x512xf32, #tpu.memory_space<vmem>>, vector<8x512xf32>
    %c0_65 = arith.constant 0 : index
    %c0_66 = arith.constant 0 : index
    %218 = vector.load %arg3[%c0_65, %c0_66] : memref<128x512xf32, #tpu.memory_space<vmem>>, vector<128x512xf32>
    %cst_67 = arith.constant dense<0.000000e+00> : vector<8x512xf32>
    %219 = tpu.matmul %211, %218, %cst_67 {dimension_numbers = #tpu.dot_dimension_numbers<[1], [0], [0], [1], [0, 0, 1, 1], [], []>} : vector<8x128xf32>, vector<128x512xf32>, vector<8x512xf32> -> vector<8x512xf32>
    %220 = arith.addf %217, %219 : vector<8x512xf32>
    %221 = vector.extract_strided_slice %220 {offsets = [0, 0], sizes = [8, 128], strides = [1, 1]} : vector<8x512xf32> to vector<8x128xf32>
    %222 = arith.negf %221 : vector<8x128xf32>
    %223 = math.exp %222 : vector<8x128xf32>
    %cst_68 = arith.constant 1.000000e+00 : f32
    %224 = vector.broadcast %cst_68 : f32 to vector<8x128xf32>
    %225 = arith.addf %224, %223 : vector<8x128xf32>
    %226 = arith.divf %224, %225 : vector<8x128xf32>
    %227 = vector.extract_strided_slice %220 {offsets = [0, 128], sizes = [8, 128], strides = [1, 1]} : vector<8x512xf32> to vector<8x128xf32>
    %228 = arith.negf %227 : vector<8x128xf32>
    %229 = math.exp %228 : vector<8x128xf32>
    %cst_69 = arith.constant 1.000000e+00 : f32
    %230 = vector.broadcast %cst_69 : f32 to vector<8x128xf32>
    %231 = arith.addf %230, %229 : vector<8x128xf32>
    %232 = arith.divf %230, %231 : vector<8x128xf32>
    %233 = vector.extract_strided_slice %220 {offsets = [0, 256], sizes = [8, 128], strides = [1, 1]} : vector<8x512xf32> to vector<8x128xf32>
    %234 = math.tanh %233 : vector<8x128xf32>
    %235 = vector.extract_strided_slice %220 {offsets = [0, 384], sizes = [8, 128], strides = [1, 1]} : vector<8x512xf32> to vector<8x128xf32>
    %236 = arith.negf %235 : vector<8x128xf32>
    %237 = math.exp %236 : vector<8x128xf32>
    %cst_70 = arith.constant 1.000000e+00 : f32
    %238 = vector.broadcast %cst_70 : f32 to vector<8x128xf32>
    %239 = arith.addf %238, %237 : vector<8x128xf32>
    %240 = arith.divf %238, %239 : vector<8x128xf32>
    %241 = arith.mulf %232, %209 : vector<8x128xf32>
    %242 = arith.mulf %226, %234 : vector<8x128xf32>
    %243 = arith.addf %241, %242 : vector<8x128xf32>
    %244 = math.tanh %243 : vector<8x128xf32>
    %245 = arith.mulf %240, %244 : vector<8x128xf32>
    %246 = arith.index_cast %215 : i32 to index
    %c0_71 = arith.constant 0 : index
    %247 = vector.load %arg11[%246, %c0_71] : memref<64x128xf32, #tpu.memory_space<vmem>>, vector<8x128xf32>
    tpu.vector_store %arg11[%246, %c0_71], %245 {strides = array<i32>} : memref<64x128xf32, #tpu.memory_space<vmem>>, vector<8x128xf32>,
    %c7_i32 = arith.constant 7 : i32
    %c8_i32_72 = arith.constant 8 : i32
    %248 = arith.muli %c7_i32, %c8_i32_72 : i32
    %249 = tpu.assume_multiple %248, 8 : i32
    %250 = arith.index_cast %249 : i32 to index
    %c0_73 = arith.constant 0 : index
    %251 = vector.load %arg10[%250, %c0_73] : memref<64x512xf32, #tpu.memory_space<vmem>>, vector<8x512xf32>
    %c0_74 = arith.constant 0 : index
    %c0_75 = arith.constant 0 : index
    %252 = vector.load %arg3[%c0_74, %c0_75] : memref<128x512xf32, #tpu.memory_space<vmem>>, vector<128x512xf32>
    %cst_76 = arith.constant dense<0.000000e+00> : vector<8x512xf32>
    %253 = tpu.matmul %245, %252, %cst_76 {dimension_numbers = #tpu.dot_dimension_numbers<[1], [0], [0], [1], [0, 0, 1, 1], [], []>} : vector<8x128xf32>, vector<128x512xf32>, vector<8x512xf32> -> vector<8x512xf32>
    %254 = arith.addf %251, %253 : vector<8x512xf32>
    %255 = vector.extract_strided_slice %254 {offsets = [0, 0], sizes = [8, 128], strides = [1, 1]} : vector<8x512xf32> to vector<8x128xf32>
    %256 = arith.negf %255 : vector<8x128xf32>
    %257 = math.exp %256 : vector<8x128xf32>
    %cst_77 = arith.constant 1.000000e+00 : f32
    %258 = vector.broadcast %cst_77 : f32 to vector<8x128xf32>
    %259 = arith.addf %258, %257 : vector<8x128xf32>
    %260 = arith.divf %258, %259 : vector<8x128xf32>
    %261 = vector.extract_strided_slice %254 {offsets = [0, 128], sizes = [8, 128], strides = [1, 1]} : vector<8x512xf32> to vector<8x128xf32>
    %262 = arith.negf %261 : vector<8x128xf32>
    %263 = math.exp %262 : vector<8x128xf32>
    %cst_78 = arith.constant 1.000000e+00 : f32
    %264 = vector.broadcast %cst_78 : f32 to vector<8x128xf32>
    %265 = arith.addf %264, %263 : vector<8x128xf32>
    %266 = arith.divf %264, %265 : vector<8x128xf32>
    %267 = vector.extract_strided_slice %254 {offsets = [0, 256], sizes = [8, 128], strides = [1, 1]} : vector<8x512xf32> to vector<8x128xf32>
    %268 = math.tanh %267 : vector<8x128xf32>
    %269 = vector.extract_strided_slice %254 {offsets = [0, 384], sizes = [8, 128], strides = [1, 1]} : vector<8x512xf32> to vector<8x128xf32>
    %270 = arith.negf %269 : vector<8x128xf32>
    %271 = math.exp %270 : vector<8x128xf32>
    %cst_79 = arith.constant 1.000000e+00 : f32
    %272 = vector.broadcast %cst_79 : f32 to vector<8x128xf32>
    %273 = arith.addf %272, %271 : vector<8x128xf32>
    %274 = arith.divf %272, %273 : vector<8x128xf32>
    %275 = arith.mulf %266, %243 : vector<8x128xf32>
    %276 = arith.mulf %260, %268 : vector<8x128xf32>
    %277 = arith.addf %275, %276 : vector<8x128xf32>
    %278 = math.tanh %277 : vector<8x128xf32>
    %279 = arith.mulf %274, %278 : vector<8x128xf32>
    %280 = arith.index_cast %249 : i32 to index
    %c0_80 = arith.constant 0 : index
    %281 = vector.load %arg11[%280, %c0_80] : memref<64x128xf32, #tpu.memory_space<vmem>>, vector<8x128xf32>
    tpu.vector_store %arg11[%280, %c0_80], %279 {strides = array<i32>} : memref<64x128xf32, #tpu.memory_space<vmem>>, vector<8x128xf32>,
    %c8_i32_81 = arith.constant 8 : i32
    %c0_82 = arith.constant 0 : index
    %c0_83 = arith.constant 0 : index
    %282 = vector.load %arg11[%c0_82, %c0_83] : memref<64x128xf32, #tpu.memory_space<vmem>>, vector<64x128xf32>
    %c0_84 = arith.constant 0 : index
    %c0_85 = arith.constant 0 : index
    %283 = vector.load %arg5[%c0_84, %c0_85] : memref<128x64xf32, #tpu.memory_space<vmem>>, vector<128x64xf32>
    %cst_86 = arith.constant dense<0.000000e+00> : vector<64x64xf32>
    %284 = tpu.matmul %282, %283, %cst_86 {dimension_numbers = #tpu.dot_dimension_numbers<[1], [0], [0], [1], [0, 0, 1, 1], [], []>} : vector<64x128xf32>, vector<128x64xf32>, vector<64x64xf32> -> vector<64x64xf32>
    %c0_87 = arith.constant 0 : index
    %c0_88 = arith.constant 0 : index
    %285 = vector.load %arg6[%c0_87, %c0_88] : memref<1x64xf32, #tpu.memory_space<vmem>>, vector<1x64xf32>
    %286 = vector.broadcast %285 : vector<1x64xf32> to vector<64x64xf32>
    %287 = arith.addf %284, %286 : vector<64x64xf32>
    %cst_89 = arith.constant 0.000000e+00 : f32
    %288 = vector.broadcast %cst_89 : f32 to vector<64x64xf32>
    %289 = arith.maximumf %287, %288 : vector<64x64xf32>
    %c0_90 = arith.constant 0 : index
    %c0_91 = arith.constant 0 : index
    %290 = vector.load %arg7[%c0_90, %c0_91] : memref<1x64xf32, #tpu.memory_space<vmem>>, vector<1x64xf32>
    %291 = vector.broadcast %290 : vector<1x64xf32> to vector<64x64xf32>
    %292 = arith.mulf %289, %291 : vector<64x64xf32>
    %cst_92 = arith.constant dense<0.000000e+00> : vector<64xf32>
    %293 = vector.multi_reduction <add>, %292, %cst_92 [1] : vector<64x64xf32> to vector<64xf32>
    %294 = vector.shape_cast %293 : vector<64xf32> to vector<64x1xf32>
    %c0_93 = arith.constant 0 : index
    %c0_94 = arith.constant 0 : index
    %295 = vector.load %arg8[%c0_93, %c0_94] : memref<1x1xf32, #tpu.memory_space<vmem>>, vector<1x1xf32>
    %296 = vector.broadcast %295 : vector<1x1xf32> to vector<64x1xf32>
    %297 = arith.addf %294, %296 : vector<64x1xf32>
    %298 = math.tanh %297 : vector<64x1xf32>
    %c0_95 = arith.constant 0 : index
    %c0_96 = arith.constant 0 : index
    %c0_97 = arith.constant 0 : index
    %299 = vector.load %arg9[%c0_95, %c0_96, %c0_97] : memref<1x64x1xf32, #tpu.memory_space<vmem>>, vector<1x64x1xf32>
    %300 = vector.shape_cast %299 : vector<1x64x1xf32> to vector<64x1xf32>
    %301 = vector.shape_cast %298 : vector<64x1xf32> to vector<1x64x1xf32>
    tpu.vector_store %arg9[%c0_95, %c0_96, %c0_97], %301 {strides = array<i32>} : memref<1x64x1xf32, #tpu.memory_space<vmem>>, vector<1x64x1xf32>,
    return
  }
  func.func @transform_0(%arg0: i32) -> (i32, i32, i32) {
    %c0_i32 = arith.constant 0 : i32
    %c0_i32_0 = arith.constant 0 : i32
    %c0_i32_1 = arith.constant 0 : i32
    return %arg0, %c0_i32, %c0_i32_0 : i32, i32, i32
  }
  func.func @transform_1(%arg0: i32) -> (i32, i32) {
    %c0_i32 = arith.constant 0 : i32
    %c0_i32_0 = arith.constant 0 : i32
    %c0_i32_1 = arith.constant 0 : i32
    return %c0_i32, %c0_i32_0 : i32, i32
  }
  func.func @transform_2(%arg0: i32) -> (i32, i32) {
    %c0_i32 = arith.constant 0 : i32
    %c0_i32_0 = arith.constant 0 : i32
    %c0_i32_1 = arith.constant 0 : i32
    return %c0_i32, %c0_i32_0 : i32, i32
  }
  func.func @transform_3(%arg0: i32) -> (i32, i32) {
    %c0_i32 = arith.constant 0 : i32
    %c0_i32_0 = arith.constant 0 : i32
    %c0_i32_1 = arith.constant 0 : i32
    return %c0_i32, %c0_i32_0 : i32, i32
  }
  func.func @transform_4(%arg0: i32) -> (i32, i32) {
    %c0_i32 = arith.constant 0 : i32
    %c0_i32_0 = arith.constant 0 : i32
    %c0_i32_1 = arith.constant 0 : i32
    return %c0_i32, %c0_i32_0 : i32, i32
  }
  func.func @transform_5(%arg0: i32) -> (i32, i32) {
    %c0_i32 = arith.constant 0 : i32
    %c0_i32_0 = arith.constant 0 : i32
    %c0_i32_1 = arith.constant 0 : i32
    return %c0_i32, %c0_i32_0 : i32, i32
  }
  func.func @transform_6(%arg0: i32) -> (i32, i32) {
    %c0_i32 = arith.constant 0 : i32
    %c0_i32_0 = arith.constant 0 : i32
    %c0_i32_1 = arith.constant 0 : i32
    return %c0_i32, %c0_i32_0 : i32, i32
  }
  func.func @transform_7(%arg0: i32) -> (i32, i32) {
    %c0_i32 = arith.constant 0 : i32
    %c0_i32_0 = arith.constant 0 : i32
    %c0_i32_1 = arith.constant 0 : i32
    return %c0_i32, %c0_i32_0 : i32, i32
  }
  func.func @transform_8(%arg0: i32) -> (i32, i32, i32) {
    %c0_i32 = arith.constant 0 : i32
    %c0_i32_0 = arith.constant 0 : i32
    %c0_i32_1 = arith.constant 0 : i32
    return %arg0, %c0_i32, %c0_i32_0 : i32, i32, i32
  }
}

</mosaic_0001>

<llo_original>
// kernel: tpu_custom_call.1
$region0: #{tpu_custom_call.1}
  #allocation0 [shape = 'u32[]', space=smem, size = 0x4, offset = 0x4, fixed_abs, tag = 'smem constant byte address 0x4 - core index']
  #allocation1 [shape = 'u32[144,128]{1,0:T(1,128)}', space=vmem, size = 0x12000, scoped, tag = 'internal scratch']
  #allocation2 [shape = 'f32[64,512]{1,0:T(8,128)}', space=vmem, size = 0x20000, scoped, tag = 'scratch operand']
  #allocation3 [shape = 'f32[64,128]{1,0:T(8,128)}', space=vmem, size = 0x8000, scoped, tag = 'scratch operand']
  #allocation4 [shape = 'f32[1,1]{1,0:T(1,128)S(1)}', space=vmem, size = 0x200, scoped, tag = 'scoped memory for tpu_custom_call.1']
  %s0 = inlined_call_operand.vmem [shape: f32[1,64,12], index: 0, kind: input, shape index: {}]
  %s1 = inlined_call_operand.vmem [shape: f32[12,512], index: 1, kind: input, shape index: {}]
  %s2 = inlined_call_operand.hbm [shape: f32[128,512], index: 2, kind: input, shape index: {}]
  %s3 = inlined_call_operand.vmem [shape: f32[1,512], index: 3, kind: input, shape index: {}]
  %s4 = inlined_call_operand.vmem [shape: f32[128,64], index: 4, kind: input, shape index: {}]
  %s5 = inlined_call_operand.vmem [shape: f32[1,64], index: 5, kind: input, shape index: {}]
  %s6 = inlined_call_operand.vmem [shape: f32[1,64], index: 6, kind: input, shape index: {}]
  %s7 = inlined_call_operand.<no memory space> [shape: f32[1,1], index: 7, kind: input, shape index: {}]
  %s8 = inlined_call_operand.vmem [shape: f32[1,64,1], index: 8, kind: output, shape index: {}]
  %s9 = sld [smem:[#allocation0]]
  $region46: #{tpu_custom_call.1} parent=0
    _
  %s11 = ssub.s32 1, %s9
  %s12 = scalar_select 0, %s11, %s9
  %v13 = vstv %s7
  %14 = vst [vmem:[#allocation4] sm:$0x1] %v13
  $region1: #{tpu_custom_call.1} parent=0
    #allocation5 [shape = 'u8[262144]{0}', space=vmem, size = 0x40000, scoped, tag = 'input window, operand 2, single buffered']
    #allocation6 [shape = 's32[1]{0}', space=sflag, size = 0x4, scoped, tag = 'scoped memory for tpu_custom_call.1']
    %15 = vsyncpa [#allocation6], 0
    // Predicated region
    $region2: #{tpu_custom_call.1} parent=1 // pred_check
      _
    $region3: #{tpu_custom_call.1} parent=1 // pred_check_branch
      %17 = sbr.rel (0) target = $region5
    $region4: #{tpu_custom_call.1} parent=1 // pred_region
      _
    $region5: #{tpu_custom_call.1} parent=1 // pred_fallthru
      _
    // Predicated region
    $region6: #{tpu_custom_call.1} parent=1 // pred_check
      _
    $region7: #{tpu_custom_call.1} parent=1 // pred_check_branch
      %19 = sbr.rel (0) target = $region9
    $region8: #{tpu_custom_call.1} parent=1 // pred_region
      _
    $region9: #{tpu_custom_call.1} parent=1 // pred_fallthru
      _
    // Predicated region
    $region10: #{tpu_custom_call.1} parent=1 // pred_check
      _
    $region11: #{tpu_custom_call.1} parent=1 // pred_check_branch
      %21 = sbr.rel (0) target = $region13
    $region12: #{tpu_custom_call.1} parent=1 // pred_region
      %s23 = ssub.s32 8192, 8192
      %24 = vsyncadd [#allocation6], %s23
      %s25 = sshll.u32 [#allocation5], 4
      %s26 = int_to_ptr.vmem [resolvable:$true] %s25
      %31 = dma.hbm_to_vmem [thread:$0]  %s2, 8192, %s26, [#allocation6], 512, 512, 32
    $region13: #{tpu_custom_call.1} parent=1 // pred_fallthru
      _
    // Predicated region
    $region14: #{tpu_custom_call.1} parent=1 // pred_check
      _
    $region15: #{tpu_custom_call.1} parent=1 // pred_check_branch
      %33 = sbr.rel (0) target = $region17
    $region16: #{tpu_custom_call.1} parent=1 // pred_region
      _
    $region17: #{tpu_custom_call.1} parent=1 // pred_fallthru
      _
    // Predicated region
    $region18: #{tpu_custom_call.1} parent=1 // pred_check
      _
    $region19: #{tpu_custom_call.1} parent=1 // pred_check_branch
      %35 = sbr.rel (0) target = $region21
    $region20: #{tpu_custom_call.1} parent=1 // pred_region
      _
    $region21: #{tpu_custom_call.1} parent=1 // pred_fallthru
      _
    // Predicated region
    $region22: #{tpu_custom_call.1} parent=1 // pred_check
      _
    $region23: #{tpu_custom_call.1} parent=1 // pred_check_branch
      %37 = sbr.rel (0) target = $region25
    $region24: #{tpu_custom_call.1} parent=1 // pred_region
      _
    $region25: #{tpu_custom_call.1} parent=1 // pred_fallthru
      _
    // Predicated region
    $region26: #{tpu_custom_call.1} parent=1 // pred_check
      _
    $region27: #{tpu_custom_call.1} parent=1 // pred_check_branch
      %39 = sbr.rel (0) target = $region29
    $region28: #{tpu_custom_call.1} parent=1 // pred_region
      _
    $region29: #{tpu_custom_call.1} parent=1 // pred_fallthru
      _
    // Predicated region
    $region30: #{tpu_custom_call.1} parent=1 // pred_check
      _
    $region31: #{tpu_custom_call.1} parent=1 // pred_check_branch
      %41 = sbr.rel (0) target = $region33
    $region32: #{tpu_custom_call.1} parent=1 // pred_region
      _
    $region33: #{tpu_custom_call.1} parent=1 // pred_fallthru
      _
    // Predicated region
    $region34: #{tpu_custom_call.1} parent=1 // pred_check
      _
    $region35: #{tpu_custom_call.1} parent=1 // pred_check_branch
      %43 = sbr.rel (0) target = $region37
    $region36: #{tpu_custom_call.1} parent=1 // pred_region
      %44 = dma.done [#allocation6], 8192
    $region37: #{tpu_custom_call.1} parent=1 // pred_fallthru
      _
    %v45 = vld [vmem:[%s0] sm:$0xff]
    %v46 = vld [vmem:[%s0 + $0x8] sm:$0xff]
    %v47 = vld [vmem:[%s0 + $0x10] sm:$0xff]
    %v48 = vld [vmem:[%s0 + $0x18] sm:$0xff]
    %v49 = vld [vmem:[%s0 + $0x20] sm:$0xff]
    %v50 = vld [vmem:[%s0 + $0x28] sm:$0xff]
    %v51 = vld [vmem:[%s0 + $0x30] sm:$0xff]
    %v52 = vld [vmem:[%s0 + $0x38] sm:$0xff]
    %v53 = vld [vmem:[%s1] sm:$0xff]
    %v54 = vld [vmem:[%s1 + $0x8] sm:$0xff]
    %v55 = vld [vmem:[%s1 + $0x10] sm:$0xff]
    %v56 = vld [vmem:[%s1 + $0x18] sm:$0xff]
    %v57 = vld [vmem:[%s1 + $0x20] sm:$0xf]
    %v58 = vld [vmem:[%s1 + $0x28] sm:$0xf]
    %v59 = vld [vmem:[%s1 + $0x30] sm:$0xf]
    %v60 = vld [vmem:[%s1 + $0x38] sm:$0xf]
    %v61 = vld [vmem:[%s3] sm:$0xf]
    %v63 = vlaneseq
    %v64 = vshrl.u32 %v63, 7
    %v65 = vsub.s32 0, %v64
    %v66 = vrot.slane %v61, %v65
    %v67 = vlaneseq
    %v68 = vshrl.u32 %v67, 7
    %v69 = vsub.s32 1, %v68
    %v70 = vrot.slane %v61, %v69
    %v71 = vlaneseq
    %v72 = vshrl.u32 %v71, 7
    %v73 = vsub.s32 2, %v72
    %v74 = vrot.slane %v61, %v73
    %v75 = vlaneseq
    %v76 = vshrl.u32 %v75, 7
    %v77 = vsub.s32 3, %v76
    %v78 = vrot.slane %v61, %v77
    %vm83 = vcmask 97280
    %v85 = vsel %vm83, %v45, 0
    %v88 = vsel %vm83, %v46, 0
    %v91 = vsel %vm83, %v47, 0
    %v94 = vsel %vm83, %v48, 0
    %v97 = vsel %vm83, %v49, 0
    %v100 = vsel %vm83, %v50, 0
    %v103 = vsel %vm83, %v51, 0
    %v106 = vsel %vm83, %v52, 0
    %vm108 = vcmask 1043456
    %v110 = vsel %vm108, %v57, 0
    %v113 = vsel %vm108, %v58, 0
    %v116 = vsel %vm108, %v59, 0
    %v119 = vsel %vm108, %v60, 0
    %121 = vmatprep.subr.mxu0 %v54
    %122 = vmatpush1.msra.mxu0 %v53
    %123 = vmatprep.subr.mxu0 %v113
    %124 = vmatpush1.msra.mxu0 %v110
    %125 = vmatprep.subr.mxu0 0.0
    %126 = vmatpush1.msra.mxu0 0.0
    %127 = vmatprep.subr.mxu0 0.0
    %128 = vmatpush1.msra.mxu0 0.0
    %129 = vmatprep.subr.mxu0 0.0
    %130 = vmatpush1.msra.mxu0 0.0
    %131 = vmatprep.subr.mxu0 0.0
    %132 = vmatpush1.msra.mxu0 0.0
    %133 = vmatprep.subr.mxu0 0.0
    %134 = vmatpush1.msra.mxu0 0.0
    %135 = vmatprep.subr.mxu0 0.0
    %136 = vmatpush1.msra.mxu0 0.0
    %137 = vmatprep.subr.mxu0 0.0
    %138 = vmatpush1.msra.mxu0 0.0
    %139 = vmatprep.subr.mxu0 0.0
    %140 = vmatpush1.msra.mxu0 0.0
    %141 = vmatprep.subr.mxu0 0.0
    %142 = vmatpush1.msra.mxu0 0.0
    %143 = vmatprep.subr.mxu0 0.0
    %144 = vmatpush1.msra.mxu0 0.0
    %145 = vmatprep.subr.mxu0 0.0
    %146 = vmatpush1.msra.mxu0 0.0
    %147 = vmatprep.subr.mxu0 0.0
    %148 = vmatpush1.msra.mxu0 0.0
    %149 = vmatprep.subr.mxu0 0.0
    %150 = vmatpush1.msra.mxu0 0.0
    %151 = vmatprep.subr.mxu0 0.0
    %152 = vmatpush1.msra.mxu0 0.0
    %153 = vmatprep.subr.mxu0 0.0
    %154 = vmatpush1.msra.mxu0 0.0
    %155 = vmatprep.subr.mxu0 0.0
    %156 = vmatpush1.msra.mxu0 0.0
    %157 = vmatprep.subr.mxu0 0.0
    %158 = vmatpush1.msra.mxu0 0.0
    %159 = vmatprep.subr.mxu0 0.0
    %160 = vmatpush1.msra.mxu0 0.0
    %161 = vmatprep.subr.mxu0 0.0
    %162 = vmatpush1.msra.mxu0 0.0
    %163 = vmatprep.subr.mxu0 0.0
    %164 = vmatpush1.msra.mxu0 0.0
    %165 = vmatprep.subr.mxu0 0.0
    %166 = vmatpush1.msra.mxu0 0.0
    %167 = vmatprep.subr.mxu0 0.0
    %168 = vmatpush1.msra.mxu0 0.0
    %169 = vmatprep.subr.mxu0 0.0
    %170 = vmatpush1.msra.mxu0 0.0
    %171 = vmatprep.subr.mxu0 0.0
    %172 = vmatpush1.msra.mxu0 0.0
    %173 = vmatprep.subr.mxu0 0.0
    %174 = vmatpush1.msra.mxu0 0.0
    %175 = vmatprep.subr.mxu0 0.0
    %176 = vmatpush1.msra.mxu0 0.0
    %177 = vmatprep.subr.mxu0 0.0
    %178 = vmatpush1.msra.mxu0 0.0
    %179 = vmatprep.subr.mxu0 0.0
    %180 = vmatpush1.msra.mxu0 0.0
    %181 = vmatprep.subr.mxu0 0.0
    %182 = vmatpush1.msra.mxu0 0.0
    %183 = vmatprep.subr.mxu0 0.0
    %184 = vmatpush1.msra.mxu0 0.0
    %185 = vmatprep.mubr.f32.mxu0 0.0
    %186 = vmatmul.mubr.f32.gmra.mrb[0].mxu0 %v85
    %v187 = vpop.f32.mrb[0].mxu0
    %v188 = vadd.f32 %v66, %v187
    %v189 = vpop.f32.mrb[0].mxu0
    %v190 = vadd.f32 %v70, %v189
    %191 = vmatprep.mubr.f32.mxu0 0.0
    %192 = vmatmul.mubr.f32.gmra.mrb[0].mxu0 %v88
    %v193 = vpop.f32.mrb[0].mxu0
    %v194 = vadd.f32 %v66, %v193
    %v195 = vpop.f32.mrb[0].mxu0
    %v196 = vadd.f32 %v70, %v195
    %197 = vmatprep.mubr.f32.mxu0 0.0
    %198 = vmatmul.mubr.f32.gmra.mrb[0].mxu0 %v91
    %v199 = vpop.f32.mrb[0].mxu0
    %v200 = vadd.f32 %v66, %v199
    %v201 = vpop.f32.mrb[0].mxu0
    %v202 = vadd.f32 %v70, %v201
    %203 = vmatprep.mubr.f32.mxu0 0.0
    %204 = vmatmul.mubr.f32.gmra.mrb[0].mxu0 %v94
    %v205 = vpop.f32.mrb[0].mxu0
    %v206 = vadd.f32 %v66, %v205
    %v207 = vpop.f32.mrb[0].mxu0
    %v208 = vadd.f32 %v70, %v207
    %209 = vmatprep.mubr.f32.mxu0 0.0
    %210 = vmatmul.mubr.f32.gmra.mrb[0].mxu0 %v97
    %v211 = vpop.f32.mrb[0].mxu0
    %v212 = vadd.f32 %v66, %v211
    %v213 = vpop.f32.mrb[0].mxu0
    %v214 = vadd.f32 %v70, %v213
    %215 = vmatprep.mubr.f32.mxu0 0.0
    %216 = vmatmul.mubr.f32.gmra.mrb[0].mxu0 %v100
    %v217 = vpop.f32.mrb[0].mxu0
    %v218 = vadd.f32 %v66, %v217
    %v219 = vpop.f32.mrb[0].mxu0
    %v220 = vadd.f32 %v70, %v219
    %221 = vmatprep.mubr.f32.mxu0 0.0
    %222 = vmatmul.mubr.f32.gmra.mrb[0].mxu0 %v103
    %v223 = vpop.f32.mrb[0].mxu0
    %v224 = vadd.f32 %v66, %v223
    %v225 = vpop.f32.mrb[0].mxu0
    %v226 = vadd.f32 %v70, %v225
    %227 = vmatprep.mubr.f32.mxu0 0.0
    %228 = vmatmul.mubr.f32.gmra.mrb[0].mxu0 %v106
    %v229 = vpop.f32.mrb[0].mxu0
    %v230 = vadd.f32 %v66, %v229
    %v231 = vpop.f32.mrb[0].mxu0
    %v232 = vadd.f32 %v70, %v231
    %233 = vdwg.mxu0
    %234 = vmatprep.subr.mxu0 %v56
    %235 = vmatpush1.msra.mxu0 %v55
    %236 = vmatprep.subr.mxu0 %v119
    %237 = vmatpush1.msra.mxu0 %v116
    %238 = vmatprep.subr.mxu0 0.0
    %239 = vmatpush1.msra.mxu0 0.0
    %240 = vmatprep.subr.mxu0 0.0
    %241 = vmatpush1.msra.mxu0 0.0
    %242 = vmatprep.subr.mxu0 0.0
    %243 = vmatpush1.msra.mxu0 0.0
    %244 = vmatprep.subr.mxu0 0.0
    %245 = vmatpush1.msra.mxu0 0.0
    %246 = vmatprep.subr.mxu0 0.0
    %247 = vmatpush1.msra.mxu0 0.0
    %248 = vmatprep.subr.mxu0 0.0
    %249 = vmatpush1.msra.mxu0 0.0
    %250 = vmatprep.subr.mxu0 0.0
    %251 = vmatpush1.msra.mxu0 0.0
    %252 = vmatprep.subr.mxu0 0.0
    %253 = vmatpush1.msra.mxu0 0.0
    %254 = vmatprep.subr.mxu0 0.0
    %255 = vmatpush1.msra.mxu0 0.0
    %256 = vmatprep.subr.mxu0 0.0
    %257 = vmatpush1.msra.mxu0 0.0
    %258 = vmatprep.subr.mxu0 0.0
    %259 = vmatpush1.msra.mxu0 0.0
    %260 = vmatprep.subr.mxu0 0.0
    %261 = vmatpush1.msra.mxu0 0.0
    %262 = vmatprep.subr.mxu0 0.0
    %263 = vmatpush1.msra.mxu0 0.0
    %264 = vmatprep.subr.mxu0 0.0
    %265 = vmatpush1.msra.mxu0 0.0
    %266 = vmatprep.subr.mxu0 0.0
    %267 = vmatpush1.msra.mxu0 0.0
    %268 = vmatprep.subr.mxu0 0.0
    %269 = vmatpush1.msra.mxu0 0.0
    %270 = vmatprep.subr.mxu0 0.0
    %271 = vmatpush1.msra.mxu0 0.0
    %272 = vmatprep.subr.mxu0 0.0
    %273 = vmatpush1.msra.mxu0 0.0
    %274 = vmatprep.subr.mxu0 0.0
    %275 = vmatpush1.msra.mxu0 0.0
    %276 = vmatprep.subr.mxu0 0.0
    %277 = vmatpush1.msra.mxu0 0.0
    %278 = vmatprep.subr.mxu0 0.0
    %279 = vmatpush1.msra.mxu0 0.0
    %280 = vmatprep.subr.mxu0 0.0
    %281 = vmatpush1.msra.mxu0 0.0
    %282 = vmatprep.subr.mxu0 0.0
    %283 = vmatpush1.msra.mxu0 0.0
    %284 = vmatprep.subr.mxu0 0.0
    %285 = vmatpush1.msra.mxu0 0.0
    %286 = vmatprep.subr.mxu0 0.0
    %287 = vmatpush1.msra.mxu0 0.0
    %288 = vmatprep.subr.mxu0 0.0
    %289 = vmatpush1.msra.mxu0 0.0
    %290 = vmatprep.subr.mxu0 0.0
    %291 = vmatpush1.msra.mxu0 0.0
    %292 = vmatprep.subr.mxu0 0.0
    %293 = vmatpush1.msra.mxu0 0.0
    %294 = vmatprep.subr.mxu0 0.0
    %295 = vmatpush1.msra.mxu0 0.0
    %296 = vmatprep.subr.mxu0 0.0
    %297 = vmatpush1.msra.mxu0 0.0
    %298 = vmatprep.mubr.f32.mxu0 0.0
    %299 = vmatmul.mubr.f32.gmra.mrb[0].mxu0 %v85
    %v300 = vpop.f32.mrb[0].mxu0
    %v301 = vadd.f32 %v74, %v300
    %v302 = vpop.f32.mrb[0].mxu0
    %v303 = vadd.f32 %v78, %v302
    %304 = vmatprep.mubr.f32.mxu0 0.0
    %305 = vmatmul.mubr.f32.gmra.mrb[0].mxu0 %v88
    %v306 = vpop.f32.mrb[0].mxu0
    %v307 = vadd.f32 %v74, %v306
    %v308 = vpop.f32.mrb[0].mxu0
    %v309 = vadd.f32 %v78, %v308
    %310 = vmatprep.mubr.f32.mxu0 0.0
    %311 = vmatmul.mubr.f32.gmra.mrb[0].mxu0 %v91
    %v312 = vpop.f32.mrb[0].mxu0
    %v313 = vadd.f32 %v74, %v312
    %v314 = vpop.f32.mrb[0].mxu0
    %v315 = vadd.f32 %v78, %v314
    %316 = vmatprep.mubr.f32.mxu0 0.0
    %317 = vmatmul.mubr.f32.gmra.mrb[0].mxu0 %v94
    %v318 = vpop.f32.mrb[0].mxu0
    %v319 = vadd.f32 %v74, %v318
    %v320 = vpop.f32.mrb[0].mxu0
    %v321 = vadd.f32 %v78, %v320
    %322 = vmatprep.mubr.f32.mxu0 0.0
    %323 = vmatmul.mubr.f32.gmra.mrb[0].mxu0 %v97
    %v324 = vpop.f32.mrb[0].mxu0
    %v325 = vadd.f32 %v74, %v324
    %v326 = vpop.f32.mrb[0].mxu0
    %v327 = vadd.f32 %v78, %v326
    %328 = vmatprep.mubr.f32.mxu0 0.0
    %329 = vmatmul.mubr.f32.gmra.mrb[0].mxu0 %v100
    %v330 = vpop.f32.mrb[0].mxu0
    %v331 = vadd.f32 %v74, %v330
    %v332 = vpop.f32.mrb[0].mxu0
    %v333 = vadd.f32 %v78, %v332
    %334 = vmatprep.mubr.f32.mxu0 0.0
    %335 = vmatmul.mubr.f32.gmra.mrb[0].mxu0 %v103
    %v336 = vpop.f32.mrb[0].mxu0
    %v337 = vadd.f32 %v74, %v336
    %v338 = vpop.f32.mrb[0].mxu0
    %v339 = vadd.f32 %v78, %v338
    %340 = vmatprep.mubr.f32.mxu0 0.0
    %341 = vmatmul.mubr.f32.gmra.mrb[0].mxu0 %v106
    %v342 = vpop.f32.mrb[0].mxu0
    %v343 = vadd.f32 %v74, %v342
    %v344 = vpop.f32.mrb[0].mxu0
    %v345 = vadd.f32 %v78, %v344
    %346 = vdwg.mxu0
    %347 = vst [vmem:[#allocation2] sm:$0xff] %v188
    %348 = vst [vmem:[#allocation2 + $0x8] sm:$0xff] %v190
    %349 = vst [vmem:[#allocation2 + $0x10] sm:$0xff] %v301
    %350 = vst [vmem:[#allocation2 + $0x18] sm:$0xff] %v303
    %351 = vst [vmem:[#allocation2 + $0x20] sm:$0xff] %v194
    %352 = vst [vmem:[#allocation2 + $0x28] sm:$0xff] %v196
    %353 = vst [vmem:[#allocation2 + $0x30] sm:$0xff] %v307
    %354 = vst [vmem:[#allocation2 + $0x38] sm:$0xff] %v309
    %355 = vst [vmem:[#allocation2 + $0x40] sm:$0xff] %v200
    %356 = vst [vmem:[#allocation2 + $0x48] sm:$0xff] %v202
    %357 = vst [vmem:[#allocation2 + $0x50] sm:$0xff] %v313
    %358 = vst [vmem:[#allocation2 + $0x58] sm:$0xff] %v315
    %359 = vst [vmem:[#allocation2 + $0x60] sm:$0xff] %v206
    %360 = vst [vmem:[#allocation2 + $0x68] sm:$0xff] %v208
    %361 = vst [vmem:[#allocation2 + $0x70] sm:$0xff] %v319
    %362 = vst [vmem:[#allocation2 + $0x78] sm:$0xff] %v321
    %363 = vst [vmem:[#allocation2 + $0x80] sm:$0xff] %v212
    %364 = vst [vmem:[#allocation2 + $0x88] sm:$0xff] %v214
    %365 = vst [vmem:[#allocation2 + $0x90] sm:$0xff] %v325
    %366 = vst [vmem:[#allocation2 + $0x98] sm:$0xff] %v327
    %367 = vst [vmem:[#allocation2 + $0xa0] sm:$0xff] %v218
    %368 = vst [vmem:[#allocation2 + $0xa8] sm:$0xff] %v220
    %369 = vst [vmem:[#allocation2 + $0xb0] sm:$0xff] %v331
    %370 = vst [vmem:[#allocation2 + $0xb8] sm:$0xff] %v333
    %371 = vst [vmem:[#allocation2 + $0xc0] sm:$0xff] %v224
    %372 = vst [vmem:[#allocation2 + $0xc8] sm:$0xff] %v226
    %373 = vst [vmem:[#allocation2 + $0xd0] sm:$0xff] %v337
    %374 = vst [vmem:[#allocation2 + $0xd8] sm:$0xff] %v339
    %375 = vst [vmem:[#allocation2 + $0xe0] sm:$0xff] %v230
    %376 = vst [vmem:[#allocation2 + $0xe8] sm:$0xff] %v232
    %377 = vst [vmem:[#allocation2 + $0xf0] sm:$0xff] %v343
    %378 = vst [vmem:[#allocation2 + $0xf8] sm:$0xff] %v345
    %s379 = smul.u32 0, 4
    %s380 = smul.addr %s379, 8
    %s381 = scalar_lea.vmem [#allocation2], %s380
    %v382 = vld [vmem:[%s381] sm:$0xff]
    %v383 = vld [vmem:[%s381 + $0x8] sm:$0xff]
    %v384 = vld [vmem:[%s381 + $0x10] sm:$0xff]
    %v385 = vld [vmem:[%s381 + $0x18] sm:$0xff]
    %v386 = vld [vmem:[#allocation5] sm:$0xff]
    %v387 = vld [vmem:[#allocation5 + $0x8] sm:$0xff]
    %v388 = vld [vmem:[#allocation5 + $0x10] sm:$0xff]
    %v389 = vld [vmem:[#allocation5 + $0x18] sm:$0xff]
    %v390 = vld [vmem:[#allocation5 + $0x20] sm:$0xff]
    %v391 = vld [vmem:[#allocation5 + $0x28] sm:$0xff]
    %v392 = vld [vmem:[#allocation5 + $0x30] sm:$0xff]
    %v393 = vld [vmem:[#allocation5 + $0x38] sm:$0xff]
    %v394 = vld [vmem:[#allocation5 + $0x40] sm:$0xff]
    %v395 = vld [vmem:[#allocation5 + $0x48] sm:$0xff]
    %v396 = vld [vmem:[#allocation5 + $0x50] sm:$0xff]
    %v397 = vld [vmem:[#allocation5 + $0x58] sm:$0xff]
    %v398 = vld [vmem:[#allocation5 + $0x60] sm:$0xff]
    %v399 = vld [vmem:[#allocation5 + $0x68] sm:$0xff]
    %v400 = vld [vmem:[#allocation5 + $0x70] sm:$0xff]
    %v401 = vld [vmem:[#allocation5 + $0x78] sm:$0xff]
    %v402 = vld [vmem:[#allocation5 + $0x80] sm:$0xff]
    %v403 = vld [vmem:[#allocation5 + $0x88] sm:$0xff]
    %v404 = vld [vmem:[#allocation5 + $0x90] sm:$0xff]
    %v405 = vld [vmem:[#allocation5 + $0x98] sm:$0xff]
    %v406 = vld [vmem:[#allocation5 + $0xa0] sm:$0xff]
    %v407 = vld [vmem:[#allocation5 + $0xa8] sm:$0xff]
    %v408 = vld [vmem:[#allocation5 + $0xb0] sm:$0xff]
    %v409 = vld [vmem:[#allocation5 + $0xb8] sm:$0xff]
    %v410 = vld [vmem:[#allocation5 + $0xc0] sm:$0xff]
    %v411 = vld [vmem:[#allocation5 + $0xc8] sm:$0xff]
    %v412 = vld [vmem:[#allocation5 + $0xd0] sm:$0xff]
    %v413 = vld [vmem:[#allocation5 + $0xd8] sm:$0xff]
    %v414 = vld [vmem:[#allocation5 + $0xe0] sm:$0xff]
    %v415 = vld [vmem:[#allocation5 + $0xe8] sm:$0xff]
    %v416 = vld [vmem:[#allocation5 + $0xf0] sm:$0xff]
    %v417 = vld [vmem:[#allocation5 + $0xf8] sm:$0xff]
    %v418 = vld [vmem:[#allocation5 + $0x100] sm:$0xff]
    %v419 = vld [vmem:[#allocation5 + $0x108] sm:$0xff]
    %v420 = vld [vmem:[#allocation5 + $0x110] sm:$0xff]
    %v421 = vld [vmem:[#allocation5 + $0x118] sm:$0xff]
    %v422 = vld [vmem:[#allocation5 + $0x120] sm:$0xff]
    %v423 = vld [vmem:[#allocation5 + $0x128] sm:$0xff]
    %v424 = vld [vmem:[#allocation5 + $0x130] sm:$0xff]
    %v425 = vld [vmem:[#allocation5 + $0x138] sm:$0xff]
    %v426 = vld [vmem:[#allocation5 + $0x140] sm:$0xff]
    %v427 = vld [vmem:[#allocation5 + $0x148] sm:$0xff]
    %v428 = vld [vmem:[#allocation5 + $0x150] sm:$0xff]
    %v429 = vld [vmem:[#allocation5 + $0x158] sm:$0xff]
    %v430 = vld [vmem:[#allocation5 + $0x160] sm:$0xff]
    %v431 = vld [vmem:[#allocation5 + $0x168] sm:$0xff]
    %v432 = vld [vmem:[#allocation5 + $0x170] sm:$0xff]
    %v433 = vld [vmem:[#allocation5 + $0x178] sm:$0xff]
    %v434 = vld [vmem:[#allocation5 + $0x180] sm:$0xff]
    %v435 = vld [vmem:[#allocation5 + $0x188] sm:$0xff]
    %v436 = vld [vmem:[#allocation5 + $0x190] sm:$0xff]
    %v437 = vld [vmem:[#allocation5 + $0x198] sm:$0xff]
    %v438 = vld [vmem:[#allocation5 + $0x1a0] sm:$0xff]
    %v439 = vld [vmem:[#allocation5 + $0x1a8] sm:$0xff]
    %v440 = vld [vmem:[#allocation5 + $0x1b0] sm:$0xff]
    %v441 = vld [vmem:[#allocation5 + $0x1b8] sm:$0xff]
    %v442 = vld [vmem:[#allocation5 + $0x1c0] sm:$0xff]
    %v443 = vld [vmem:[#allocation5 + $0x1c8] sm:$0xff]
    %v444 = vld [vmem:[#allocation5 + $0x1d0] sm:$0xff]
    %v445 = vld [vmem:[#allocation5 + $0x1d8] sm:$0xff]
    %v446 = vld [vmem:[#allocation5 + $0x1e0] sm:$0xff]
    %v447 = vld [vmem:[#allocation5 + $0x1e8] sm:$0xff]
    %v448 = vld [vmem:[#allocation5 + $0x1f0] sm:$0xff]
    %v449 = vld [vmem:[#allocation5 + $0x1f8] sm:$0xff]
    %450 = vmatprep.subr.mxu0 %v387
    %451 = vmatpush1.msra.mxu0 %v386
    %452 = vmatprep.subr.mxu0 %v391
    %453 = vmatpush1.msra.mxu0 %v390
    %454 = vmatprep.subr.mxu0 %v395
    %455 = vmatpush1.msra.mxu0 %v394
    %456 = vmatprep.subr.mxu0 %v399
    %457 = vmatpush1.msra.mxu0 %v398
    %458 = vmatprep.subr.mxu0 %v403
    %459 = vmatpush1.msra.mxu0 %v402
    %460 = vmatprep.subr.mxu0 %v407
    %461 = vmatpush1.msra.mxu0 %v406
    %462 = vmatprep.subr.mxu0 %v411
    %463 = vmatpush1.msra.mxu0 %v410
    %464 = vmatprep.subr.mxu0 %v415
    %465 = vmatpush1.msra.mxu0 %v414
    %466 = vmatprep.subr.mxu0 %v419
    %467 = vmatpush1.msra.mxu0 %v418
    %468 = vmatprep.subr.mxu0 %v423
    %469 = vmatpush1.msra.mxu0 %v422
    %470 = vmatprep.subr.mxu0 %v427
    %471 = vmatpush1.msra.mxu0 %v426
    %472 = vmatprep.subr.mxu0 %v431
    %473 = vmatpush1.msra.mxu0 %v430
    %474 = vmatprep.subr.mxu0 %v435
    %475 = vmatpush1.msra.mxu0 %v434
    %476 = vmatprep.subr.mxu0 %v439
    %477 = vmatpush1.msra.mxu0 %v438
    %478 = vmatprep.subr.mxu0 %v443
    %479 = vmatpush1.msra.mxu0 %v442
    %480 = vmatprep.subr.mxu0 %v447
    %481 = vmatpush1.msra.mxu0 %v446
    %482 = vmatprep.subr.mxu0 0.0
    %483 = vmatpush1.msra.mxu0 0.0
    %484 = vmatprep.subr.mxu0 0.0
    %485 = vmatpush1.msra.mxu0 0.0
    %486 = vmatprep.subr.mxu0 0.0
    %487 = vmatpush1.msra.mxu0 0.0
    %488 = vmatprep.subr.mxu0 0.0
    %489 = vmatpush1.msra.mxu0 0.0
    %490 = vmatprep.subr.mxu0 0.0
    %491 = vmatpush1.msra.mxu0 0.0
    %492 = vmatprep.subr.mxu0 0.0
    %493 = vmatpush1.msra.mxu0 0.0
    %494 = vmatprep.subr.mxu0 0.0
    %495 = vmatpush1.msra.mxu0 0.0
    %496 = vmatprep.subr.mxu0 0.0
    %497 = vmatpush1.msra.mxu0 0.0
    %498 = vmatprep.subr.mxu0 0.0
    %499 = vmatpush1.msra.mxu0 0.0
    %500 = vmatprep.subr.mxu0 0.0
    %501 = vmatpush1.msra.mxu0 0.0
    %502 = vmatprep.subr.mxu0 0.0
    %503 = vmatpush1.msra.mxu0 0.0
    %504 = vmatprep.subr.mxu0 0.0
    %505 = vmatpush1.msra.mxu0 0.0
    %506 = vmatprep.subr.mxu0 0.0
    %507 = vmatpush1.msra.mxu0 0.0
    %508 = vmatprep.subr.mxu0 0.0
    %509 = vmatpush1.msra.mxu0 0.0
    %510 = vmatprep.subr.mxu0 0.0
    %511 = vmatpush1.msra.mxu0 0.0
    %512 = vmatprep.subr.mxu0 0.0
    %513 = vmatpush1.msra.mxu0 0.0
    %514 = vmatprep.mubr.f32.mxu0 0.0
    %515 = vmatmul.mubr.f32.gmra.mrb[0].mxu0 0.0
    %v516 = vpop.f32.mrb[0].mxu0
    %v517 = vadd.f32 0.0, %v516
    %v518 = vpop.f32.mrb[0].mxu0
    %v519 = vadd.f32 0.0, %v518
    %520 = vdwg.mxu0
    %521 = vmatprep.subr.mxu0 %v389
    %522 = vmatpush1.msra.mxu0 %v388
    %523 = vmatprep.subr.mxu0 %v393
    %524 = vmatpush1.msra.mxu0 %v392
    %525 = vmatprep.subr.mxu0 %v397
    %526 = vmatpush1.msra.mxu0 %v396
    %527 = vmatprep.subr.mxu0 %v401
    %528 = vmatpush1.msra.mxu0 %v400
    %529 = vmatprep.subr.mxu0 %v405
    %530 = vmatpush1.msra.mxu0 %v404
    %531 = vmatprep.subr.mxu0 %v409
    %532 = vmatpush1.msra.mxu0 %v408
    %533 = vmatprep.subr.mxu0 %v413
    %534 = vmatpush1.msra.mxu0 %v412
    %535 = vmatprep.subr.mxu0 %v417
    %536 = vmatpush1.msra.mxu0 %v416
    %537 = vmatprep.subr.mxu0 %v421
    %538 = vmatpush1.msra.mxu0 %v420
    %539 = vmatprep.subr.mxu0 %v425
    %540 = vmatpush1.msra.mxu0 %v424
    %541 = vmatprep.subr.mxu0 %v429
    %542 = vmatpush1.msra.mxu0 %v428
    %543 = vmatprep.subr.mxu0 %v433
    %544 = vmatpush1.msra.mxu0 %v432
    %545 = vmatprep.subr.mxu0 %v437
    %546 = vmatpush1.msra.mxu0 %v436
    %547 = vmatprep.subr.mxu0 %v441
    %548 = vmatpush1.msra.mxu0 %v440
    %549 = vmatprep.subr.mxu0 %v445
    %550 = vmatpush1.msra.mxu0 %v444
    %551 = vmatprep.subr.mxu0 %v449
    %552 = vmatpush1.msra.mxu0 %v448
    %553 = vmatprep.subr.mxu0 0.0
    %554 = vmatpush1.msra.mxu0 0.0
    %555 = vmatprep.subr.mxu0 0.0
    %556 = vmatpush1.msra.mxu0 0.0
    %557 = vmatprep.subr.mxu0 0.0
    %558 = vmatpush1.msra.mxu0 0.0
    %559 = vmatprep.subr.mxu0 0.0
    %560 = vmatpush1.msra.mxu0 0.0
    %561 = vmatprep.subr.mxu0 0.0
    %562 = vmatpush1.msra.mxu0 0.0
    %563 = vmatprep.subr.mxu0 0.0
    %564 = vmatpush1.msra.mxu0 0.0
    %565 = vmatprep.subr.mxu0 0.0
    %566 = vmatpush1.msra.mxu0 0.0
    %567 = vmatprep.subr.mxu0 0.0
    %568 = vmatpush1.msra.mxu0 0.0
    %569 = vmatprep.subr.mxu0 0.0
    %570 = vmatpush1.msra.mxu0 0.0
    %571 = vmatprep.subr.mxu0 0.0
    %572 = vmatpush1.msra.mxu0 0.0
    %573 = vmatprep.subr.mxu0 0.0
    %574 = vmatpush1.msra.mxu0 0.0
    %575 = vmatprep.subr.mxu0 0.0
    %576 = vmatpush1.msra.mxu0 0.0
    %577 = vmatprep.subr.mxu0 0.0
    %578 = vmatpush1.msra.mxu0 0.0
    %579 = vmatprep.subr.mxu0 0.0
    %580 = vmatpush1.msra.mxu0 0.0
    %581 = vmatprep.subr.mxu0 0.0
    %582 = vmatpush1.msra.mxu0 0.0
    %583 = vmatprep.subr.mxu0 0.0
    %584 = vmatpush1.msra.mxu0 0.0
    %585 = vmatprep.mubr.f32.mxu0 0.0
    %586 = vmatmul.mubr.f32.gmra.mrb[0].mxu0 0.0
    %v587 = vpop.f32.mrb[0].mxu0
    %v588 = vadd.f32 0.0, %v587
    %v589 = vpop.f32.mrb[0].mxu0
    %v590 = vadd.f32 0.0, %v589
    %591 = vdwg.mxu0
    %v592 = vadd.f32 %v382, %v517
    %v593 = vadd.f32 %v383, %v519
    %v594 = vadd.f32 %v384, %v588
    %v595 = vadd.f32 %v385, %v590
    %v596 = vxor.u32 %v592, 2147483648
    %v597 = vmul.f32 %v596, 1.442695
    %v598 = vpow.pop %v597
    %v599 = vadd.f32 %v598, 1.0
    %v600 = vrcp.pop %v599
    %v601 = vmul.f32 1.0, %v600
    %v602 = vxor.u32 %v593, 2147483648
    %v603 = vmul.f32 %v602, 1.442695
    %v604 = vpow.pop %v603
    %v605 = vadd.f32 %v604, 1.0
    %v606 = vrcp.pop %v605
    %v607 = vmul.f32 1.0, %v606
    %v608 = vtanh.pop %v594
    %v609 = vxor.u32 %v595, 2147483648
    %v610 = vmul.f32 %v609, 1.442695
    %v611 = vpow.pop %v610
    %v612 = vadd.f32 %v611, 1.0
    %v613 = vrcp.pop %v612
    %v614 = vmul.f32 1.0, %v613
    %v615 = vmul.f32 %v607, 0.0
    %v616 = vmul.f32 %v601, %v608
    %v617 = vadd.f32 %v615, %v616
    %v618 = vtanh.pop %v617
    %v619 = vmul.f32 %v614, %v618
    %620 = vst [vmem:[#allocation3] sm:$0xff] %v619
    %s621 = smul.u32 1, 4
    %s622 = smul.addr %s621, 8
    %s623 = scalar_lea.vmem [#allocation2], %s622
    %v624 = vld [vmem:[%s623] sm:$0xff]
    %v625 = vld [vmem:[%s623 + $0x8] sm:$0xff]
    %v626 = vld [vmem:[%s623 + $0x10] sm:$0xff]
    %v627 = vld [vmem:[%s623 + $0x18] sm:$0xff]
    %v628 = vld [vmem:[#allocation5] sm:$0xff]
    %v629 = vld [vmem:[#allocation5 + $0x8] sm:$0xff]
    %v630 = vld [vmem:[#allocation5 + $0x10] sm:$0xff]
    %v631 = vld [vmem:[#allocation5 + $0x18] sm:$0xff]
    %v632 = vld [vmem:[#allocation5 + $0x20] sm:$0xff]
    %v633 = vld [vmem:[#allocation5 + $0x28] sm:$0xff]
    %v634 = vld [vmem:[#allocation5 + $0x30] sm:$0xff]
    %v635 = vld [vmem:[#allocation5 + $0x38] sm:$0xff]
    %v636 = vld [vmem:[#allocation5 + $0x40] sm:$0xff]
    %v637 = vld [vmem:[#allocation5 + $0x48] sm:$0xff]
    %v638 = vld [vmem:[#allocation5 + $0x50] sm:$0xff]
    %v639 = vld [vmem:[#allocation5 + $0x58] sm:$0xff]
    %v640 = vld [vmem:[#allocation5 + $0x60] sm:$0xff]
    %v641 = vld [vmem:[#allocation5 + $0x68] sm:$0xff]
    %v642 = vld [vmem:[#allocation5 + $0x70] sm:$0xff]
    %v643 = vld [vmem:[#allocation5 + $0x78] sm:$0xff]
    %v644 = vld [vmem:[#allocation5 + $0x80] sm:$0xff]
    %v645 = vld [vmem:[#allocation5 + $0x88] sm:$0xff]
    %v646 = vld [vmem:[#allocation5 + $0x90] sm:$0xff]
    %v647 = vld [vmem:[#allocation5 + $0x98] sm:$0xff]
    %v648 = vld [vmem:[#allocation5 + $0xa0] sm:$0xff]
    %v649 = vld [vmem:[#allocation5 + $0xa8] sm:$0xff]
    %v650 = vld [vmem:[#allocation5 + $0xb0] sm:$0xff]
    %v651 = vld [vmem:[#allocation5 + $0xb8] sm:$0xff]
    %v652 = vld [vmem:[#allocation5 + $0xc0] sm:$0xff]
    %v653 = vld [vmem:[#allocation5 + $0xc8] sm:$0xff]
    %v654 = vld [vmem:[#allocation5 + $0xd0] sm:$0xff]
    %v655 = vld [vmem:[#allocation5 + $0xd8] sm:$0xff]
    %v656 = vld [vmem:[#allocation5 + $0xe0] sm:$0xff]
    %v657 = vld [vmem:[#allocation5 + $0xe8] sm:$0xff]
    %v658 = vld [vmem:[#allocation5 + $0xf0] sm:$0xff]
    %v659 = vld [vmem:[#allocation5 + $0xf8] sm:$0xff]
    %v660 = vld [vmem:[#allocation5 + $0x100] sm:$0xff]
    %v661 = vld [vmem:[#allocation5 + $0x108] sm:$0xff]
    %v662 = vld [vmem:[#allocation5 + $0x110] sm:$0xff]
    %v663 = vld [vmem:[#allocation5 + $0x118] sm:$0xff]
    %v664 = vld [vmem:[#allocation5 + $0x120] sm:$0xff]
    %v665 = vld [vmem:[#allocation5 + $0x128] sm:$0xff]
    %v666 = vld [vmem:[#allocation5 + $0x130] sm:$0xff]
    %v667 = vld [vmem:[#allocation5 + $0x138] sm:$0xff]
    %v668 = vld [vmem:[#allocation5 + $0x140] sm:$0xff]
    %v669 = vld [vmem:[#allocation5 + $0x148] sm:$0xff]
    %v670 = vld [vmem:[#allocation5 + $0x150] sm:$0xff]
    %v671 = vld [vmem:[#allocation5 + $0x158] sm:$0xff]
    %v672 = vld [vmem:[#allocation5 + $0x160] sm:$0xff]
    %v673 = vld [vmem:[#allocation5 + $0x168] sm:$0xff]
    %v674 = vld [vmem:[#allocation5 + $0x170] sm:$0xff]
    %v675 = vld [vmem:[#allocation5 + $0x178] sm:$0xff]
    %v676 = vld [vmem:[#allocation5 + $0x180] sm:$0xff]
    %v677 = vld [vmem:[#allocation5 + $0x188] sm:$0xff]
    %v678 = vld [vmem:[#allocation5 + $0x190] sm:$0xff]
    %v679 = vld [vmem:[#allocation5 + $0x198] sm:$0xff]
    %v680 = vld [vmem:[#allocation5 + $0x1a0] sm:$0xff]
    %v681 = vld [vmem:[#allocation5 + $0x1a8] sm:$0xff]
    %v682 = vld [vmem:[#allocation5 + $0x1b0] sm:$0xff]
    %v683 = vld [vmem:[#allocation5 + $0x1b8] sm:$0xff]
    %v684 = vld [vmem:[#allocation5 + $0x1c0] sm:$0xff]
    %v685 = vld [vmem:[#allocation5 + $0x1c8] sm:$0xff]
    %v686 = vld [vmem:[#allocation5 + $0x1d0] sm:$0xff]
    %v687 = vld [vmem:[#allocation5 + $0x1d8] sm:$0xff]
    %v688 = vld [vmem:[#allocation5 + $0x1e0] sm:$0xff]
    %v689 = vld [vmem:[#allocation5 + $0x1e8] sm:$0xff]
    %v690 = vld [vmem:[#allocation5 + $0x1f0] sm:$0xff]
    %v691 = vld [vmem:[#allocation5 + $0x1f8] sm:$0xff]
    %692 = vmatprep.subr.mxu0 %v629
    %693 = vmatpush1.msra.mxu0 %v628
    %694 = vmatprep.subr.mxu0 %v633
    %695 = vmatpush1.msra.mxu0 %v632
    %696 = vmatprep.subr.mxu0 %v637
    %697 = vmatpush1.msra.mxu0 %v636
    %698 = vmatprep.subr.mxu0 %v641
    %699 = vmatpush1.msra.mxu0 %v640
    %700 = vmatprep.subr.mxu0 %v645
    %701 = vmatpush1.msra.mxu0 %v644
    %702 = vmatprep.subr.mxu0 %v649
    %703 = vmatpush1.msra.mxu0 %v648
    %704 = vmatprep.subr.mxu0 %v653
    %705 = vmatpush1.msra.mxu0 %v652
    %706 = vmatprep.subr.mxu0 %v657
    %707 = vmatpush1.msra.mxu0 %v656
    %708 = vmatprep.subr.mxu0 %v661
    %709 = vmatpush1.msra.mxu0 %v660
    %710 = vmatprep.subr.mxu0 %v665
    %711 = vmatpush1.msra.mxu0 %v664
    %712 = vmatprep.subr.mxu0 %v669
    %713 = vmatpush1.msra.mxu0 %v668
    %714 = vmatprep.subr.mxu0 %v673
    %715 = vmatpush1.msra.mxu0 %v672
    %716 = vmatprep.subr.mxu0 %v677
    %717 = vmatpush1.msra.mxu0 %v676
    %718 = vmatprep.subr.mxu0 %v681
    %719 = vmatpush1.msra.mxu0 %v680
    %720 = vmatprep.subr.mxu0 %v685
    %721 = vmatpush1.msra.mxu0 %v684
    %722 = vmatprep.subr.mxu0 %v689
    %723 = vmatpush1.msra.mxu0 %v688
    %724 = vmatprep.subr.mxu0 0.0
    %725 = vmatpush1.msra.mxu0 0.0
    %726 = vmatprep.subr.mxu0 0.0
    %727 = vmatpush1.msra.mxu0 0.0
    %728 = vmatprep.subr.mxu0 0.0
    %729 = vmatpush1.msra.mxu0 0.0
    %730 = vmatprep.subr.mxu0 0.0
    %731 = vmatpush1.msra.mxu0 0.0
    %732 = vmatprep.subr.mxu0 0.0
    %733 = vmatpush1.msra.mxu0 0.0
    %734 = vmatprep.subr.mxu0 0.0
    %735 = vmatpush1.msra.mxu0 0.0
    %736 = vmatprep.subr.mxu0 0.0
    %737 = vmatpush1.msra.mxu0 0.0
    %738 = vmatprep.subr.mxu0 0.0
    %739 = vmatpush1.msra.mxu0 0.0
    %740 = vmatprep.subr.mxu0 0.0
    %741 = vmatpush1.msra.mxu0 0.0
    %742 = vmatprep.subr.mxu0 0.0
    %743 = vmatpush1.msra.mxu0 0.0
    %744 = vmatprep.subr.mxu0 0.0
    %745 = vmatpush1.msra.mxu0 0.0
    %746 = vmatprep.subr.mxu0 0.0
    %747 = vmatpush1.msra.mxu0 0.0
    %748 = vmatprep.subr.mxu0 0.0
    %749 = vmatpush1.msra.mxu0 0.0
    %750 = vmatprep.subr.mxu0 0.0
    %751 = vmatpush1.msra.mxu0 0.0
    %752 = vmatprep.subr.mxu0 0.0
    %753 = vmatpush1.msra.mxu0 0.0
    %754 = vmatprep.subr.mxu0 0.0
    %755 = vmatpush1.msra.mxu0 0.0
    %756 = vmatprep.mubr.f32.mxu0 0.0
    %757 = vmatmul.mubr.f32.gmra.mrb[0].mxu0 %v619
    %v758 = vpop.f32.mrb[0].mxu0
    %v759 = vadd.f32 0.0, %v758
    %v760 = vpop.f32.mrb[0].mxu0
    %v761 = vadd.f32 0.0, %v760
    %762 = vdwg.mxu0
    %763 = vmatprep.subr.mxu0 %v631
    %764 = vmatpush1.msra.mxu0 %v630
    %765 = vmatprep.subr.mxu0 %v635
    %766 = vmatpush1.msra.mxu0 %v634
    %767 = vmatprep.subr.mxu0 %v639
    %768 = vmatpush1.msra.mxu0 %v638
    %769 = vmatprep.subr.mxu0 %v643
    %770 = vmatpush1.msra.mxu0 %v642
    %771 = vmatprep.subr.mxu0 %v647
    %772 = vmatpush1.msra.mxu0 %v646
    %773 = vmatprep.subr.mxu0 %v651
    %774 = vmatpush1.msra.mxu0 %v650
    %775 = vmatprep.subr.mxu0 %v655
    %776 = vmatpush1.msra.mxu0 %v654
    %777 = vmatprep.subr.mxu0 %v659
    %778 = vmatpush1.msra.mxu0 %v658
    %779 = vmatprep.subr.mxu0 %v663
    %780 = vmatpush1.msra.mxu0 %v662
    %781 = vmatprep.subr.mxu0 %v667
    %782 = vmatpush1.msra.mxu0 %v666
    %783 = vmatprep.subr.mxu0 %v671
    %784 = vmatpush1.msra.mxu0 %v670
    %785 = vmatprep.subr.mxu0 %v675
    %786 = vmatpush1.msra.mxu0 %v674
    %787 = vmatprep.subr.mxu0 %v679
    %788 = vmatpush1.msra.mxu0 %v678
    %789 = vmatprep.subr.mxu0 %v683
    %790 = vmatpush1.msra.mxu0 %v682
    %791 = vmatprep.subr.mxu0 %v687
    %792 = vmatpush1.msra.mxu0 %v686
    %793 = vmatprep.subr.mxu0 %v691
    %794 = vmatpush1.msra.mxu0 %v690
    %795 = vmatprep.subr.mxu0 0.0
    %796 = vmatpush1.msra.mxu0 0.0
    %797 = vmatprep.subr.mxu0 0.0
    %798 = vmatpush1.msra.mxu0 0.0
    %799 = vmatprep.subr.mxu0 0.0
    %800 = vmatpush1.msra.mxu0 0.0
    %801 = vmatprep.subr.mxu0 0.0
    %802 = vmatpush1.msra.mxu0 0.0
    %803 = vmatprep.subr.mxu0 0.0
    %804 = vmatpush1.msra.mxu0 0.0
    %805 = vmatprep.subr.mxu0 0.0
    %806 = vmatpush1.msra.mxu0 0.0
    %807 = vmatprep.subr.mxu0 0.0
    %808 = vmatpush1.msra.mxu0 0.0
    %809 = vmatprep.subr.mxu0 0.0
    %810 = vmatpush1.msra.mxu0 0.0
    %811 = vmatprep.subr.mxu0 0.0
    %812 = vmatpush1.msra.mxu0 0.0
    %813 = vmatprep.subr.mxu0 0.0
    %814 = vmatpush1.msra.mxu0 0.0
    %815 = vmatprep.subr.mxu0 0.0
    %816 = vmatpush1.msra.mxu0 0.0
    %817 = vmatprep.subr.mxu0 0.0
    %818 = vmatpush1.msra.mxu0 0.0
    %819 = vmatprep.subr.mxu0 0.0
    %820 = vmatpush1.msra.mxu0 0.0
    %821 = vmatprep.subr.mxu0 0.0
    %822 = vmatpush1.msra.mxu0 0.0
    %823 = vmatprep.subr.mxu0 0.0
    %824 = vmatpush1.msra.mxu0 0.0
    %825 = vmatprep.subr.mxu0 0.0
    %826 = vmatpush1.msra.mxu0 0.0
    %827 = vmatprep.mubr.f32.mxu0 0.0
    %828 = vmatmul.mubr.f32.gmra.mrb[0].mxu0 %v619
    %v829 = vpop.f32.mrb[0].mxu0
    %v830 = vadd.f32 0.0, %v829
    %v831 = vpop.f32.mrb[0].mxu0
    %v832 = vadd.f32 0.0, %v831
    %833 = vdwg.mxu0
    %v834 = vadd.f32 %v624, %v759
    %v835 = vadd.f32 %v625, %v761
    %v836 = vadd.f32 %v626, %v830
    %v837 = vadd.f32 %v627, %v832
    %v838 = vxor.u32 %v834, 2147483648
    %v839 = vmul.f32 %v838, 1.442695
    %v840 = vpow.pop %v839
    %v841 = vadd.f32 %v840, 1.0
    %v842 = vrcp.pop %v841
    %v843 = vmul.f32 1.0, %v842
    %v844 = vxor.u32 %v835, 2147483648
    %v845 = vmul.f32 %v844, 1.442695
    %v846 = vpow.pop %v845
    %v847 = vadd.f32 %v846, 1.0
    %v848 = vrcp.pop %v847
    %v849 = vmul.f32 1.0, %v848
    %v850 = vtanh.pop %v836
    %v851 = vxor.u32 %v837, 2147483648
    %v852 = vmul.f32 %v851, 1.442695
    %v853 = vpow.pop %v852
    %v854 = vadd.f32 %v853, 1.0
    %v855 = vrcp.pop %v854
    %v856 = vmul.f32 1.0, %v855
    %v857 = vmul.f32 %v849, %v617
    %v858 = vmul.f32 %v843, %v850
    %v859 = vadd.f32 %v857, %v858
    %v860 = vtanh.pop %v859
    %v861 = vmul.f32 %v856, %v860
    %s862 = scalar_lea.vmem [#allocation3], 8
    %863 = vst [vmem:[%s862] sm:$0xff] %v861
    %s864 = smul.u32 2, 4
    %s865 = smul.addr %s864, 8
    %s866 = scalar_lea.vmem [#allocation2], %s865
    %v867 = vld [vmem:[%s866] sm:$0xff]
    %v868 = vld [vmem:[%s866 + $0x8] sm:$0xff]
    %v869 = vld [vmem:[%s866 + $0x10] sm:$0xff]
    %v870 = vld [vmem:[%s866 + $0x18] sm:$0xff]
    %v871 = vld [vmem:[#allocation5] sm:$0xff]
    %v872 = vld [vmem:[#allocation5 + $0x8] sm:$0xff]
    %v873 = vld [vmem:[#allocation5 + $0x10] sm:$0xff]
    %v874 = vld [vmem:[#allocation5 + $0x18] sm:$0xff]
    %v875 = vld [vmem:[#allocation5 + $0x20] sm:$0xff]
    %v876 = vld [vmem:[#allocation5 + $0x28] sm:$0xff]
    %v877 = vld [vmem:[#allocation5 + $0x30] sm:$0xff]
    %v878 = vld [vmem:[#allocation5 + $0x38] sm:$0xff]
    %v879 = vld [vmem:[#allocation5 + $0x40] sm:$0xff]
    %v880 = vld [vmem:[#allocation5 + $0x48] sm:$0xff]
    %v881 = vld [vmem:[#allocation5 + $0x50] sm:$0xff]
    %v882 = vld [vmem:[#allocation5 + $0x58] sm:$0xff]
    %v883 = vld [vmem:[#allocation5 + $0x60] sm:$0xff]
    %v884 = vld [vmem:[#allocation5 + $0x68] sm:$0xff]
    %v885 = vld [vmem:[#allocation5 + $0x70] sm:$0xff]
    %v886 = vld [vmem:[#allocation5 + $0x78] sm:$0xff]
    %v887 = vld [vmem:[#allocation5 + $0x80] sm:$0xff]
    %v888 = vld [vmem:[#allocation5 + $0x88] sm:$0xff]
    %v889 = vld [vmem:[#allocation5 + $0x90] sm:$0xff]
    %v890 = vld [vmem:[#allocation5 + $0x98] sm:$0xff]
    %v891 = vld [vmem:[#allocation5 + $0xa0] sm:$0xff]
    %v892 = vld [vmem:[#allocation5 + $0xa8] sm:$0xff]
    %v893 = vld [vmem:[#allocation5 + $0xb0] sm:$0xff]
    %v894 = vld [vmem:[#allocation5 + $0xb8] sm:$0xff]
    %v895 = vld [vmem:[#allocation5 + $0xc0] sm:$0xff]
    %v896 = vld [vmem:[#allocation5 + $0xc8] sm:$0xff]
    %v897 = vld [vmem:[#allocation5 + $0xd0] sm:$0xff]
    %v898 = vld [vmem:[#allocation5 + $0xd8] sm:$0xff]
    %v899 = vld [vmem:[#allocation5 + $0xe0] sm:$0xff]
    %v900 = vld [vmem:[#allocation5 + $0xe8] sm:$0xff]
    %v901 = vld [vmem:[#allocation5 + $0xf0] sm:$0xff]
    %v902 = vld [vmem:[#allocation5 + $0xf8] sm:$0xff]
    %v903 = vld [vmem:[#allocation5 + $0x100] sm:$0xff]
    %v904 = vld [vmem:[#allocation5 + $0x108] sm:$0xff]
    %v905 = vld [vmem:[#allocation5 + $0x110] sm:$0xff]
    %v906 = vld [vmem:[#allocation5 + $0x118] sm:$0xff]
    %v907 = vld [vmem:[#allocation5 + $0x120] sm:$0xff]
    %v908 = vld [vmem:[#allocation5 + $0x128] sm:$0xff]
    %v909 = vld [vmem:[#allocation5 + $0x130] sm:$0xff]
    %v910 = vld [vmem:[#allocation5 + $0x138] sm:$0xff]
    %v911 = vld [vmem:[#allocation5 + $0x140] sm:$0xff]
    %v912 = vld [vmem:[#allocation5 + $0x148] sm:$0xff]
    %v913 = vld [vmem:[#allocation5 + $0x150] sm:$0xff]
    %v914 = vld [vmem:[#allocation5 + $0x158] sm:$0xff]
    %v915 = vld [vmem:[#allocation5 + $0x160] sm:$0xff]
    %v916 = vld [vmem:[#allocation5 + $0x168] sm:$0xff]
    %v917 = vld [vmem:[#allocation5 + $0x170] sm:$0xff]
    %v918 = vld [vmem:[#allocation5 + $0x178] sm:$0xff]
    %v919 = vld [vmem:[#allocation5 + $0x180] sm:$0xff]
    %v920 = vld [vmem:[#allocation5 + $0x188] sm:$0xff]
    %v921 = vld [vmem:[#allocation5 + $0x190] sm:$0xff]
    %v922 = vld [vmem:[#allocation5 + $0x198] sm:$0xff]
    %v923 = vld [vmem:[#allocation5 + $0x1a0] sm:$0xff]
    %v924 = vld [vmem:[#allocation5 + $0x1a8] sm:$0xff]
    %v925 = vld [vmem:[#allocation5 + $0x1b0] sm:$0xff]
    %v926 = vld [vmem:[#allocation5 + $0x1b8] sm:$0xff]
    %v927 = vld [vmem:[#allocation5 + $0x1c0] sm:$0xff]
    %v928 = vld [vmem:[#allocation5 + $0x1c8] sm:$0xff]
    %v929 = vld [vmem:[#allocation5 + $0x1d0] sm:$0xff]
    %v930 = vld [vmem:[#allocation5 + $0x1d8] sm:$0xff]
    %v931 = vld [vmem:[#allocation5 + $0x1e0] sm:$0xff]
    %v932 = vld [vmem:[#allocation5 + $0x1e8] sm:$0xff]
    %v933 = vld [vmem:[#allocation5 + $0x1f0] sm:$0xff]
    %v934 = vld [vmem:[#allocation5 + $0x1f8] sm:$0xff]
    %935 = vmatprep.subr.mxu0 %v872
    %936 = vmatpush1.msra.mxu0 %v871
    %937 = vmatprep.subr.mxu0 %v876
    %938 = vmatpush1.msra.mxu0 %v875
    %939 = vmatprep.subr.mxu0 %v880
    %940 = vmatpush1.msra.mxu0 %v879
    %941 = vmatprep.subr.mxu0 %v884
    %942 = vmatpush1.msra.mxu0 %v883
    %943 = vmatprep.subr.mxu0 %v888
    %944 = vmatpush1.msra.mxu0 %v887
    %945 = vmatprep.subr.mxu0 %v892
    %946 = vmatpush1.msra.mxu0 %v891
    %947 = vmatprep.subr.mxu0 %v896
    %948 = vmatpush1.msra.mxu0 %v895
    %949 = vmatprep.subr.mxu0 %v900
    %950 = vmatpush1.msra.mxu0 %v899
    %951 = vmatprep.subr.mxu0 %v904
    %952 = vmatpush1.msra.mxu0 %v903
    %953 = vmatprep.subr.mxu0 %v908
    %954 = vmatpush1.msra.mxu0 %v907
    %955 = vmatprep.subr.mxu0 %v912
    %956 = vmatpush1.msra.mxu0 %v911
    %957 = vmatprep.subr.mxu0 %v916
    %958 = vmatpush1.msra.mxu0 %v915
    %959 = vmatprep.subr.mxu0 %v920
    %960 = vmatpush1.msra.mxu0 %v919
    %961 = vmatprep.subr.mxu0 %v924
    %962 = vmatpush1.msra.mxu0 %v923
    %963 = vmatprep.subr.mxu0 %v928
    %964 = vmatpush1.msra.mxu0 %v927
    %965 = vmatprep.subr.mxu0 %v932
    %966 = vmatpush1.msra.mxu0 %v931
    %967 = vmatprep.subr.mxu0 0.0
    %968 = vmatpush1.msra.mxu0 0.0
    %969 = vmatprep.subr.mxu0 0.0
    %970 = vmatpush1.msra.mxu0 0.0
    %971 = vmatprep.subr.mxu0 0.0
    %972 = vmatpush1.msra.mxu0 0.0
    %973 = vmatprep.subr.mxu0 0.0
    %974 = vmatpush1.msra.mxu0 0.0
    %975 = vmatprep.subr.mxu0 0.0
    %976 = vmatpush1.msra.mxu0 0.0
    %977 = vmatprep.subr.mxu0 0.0
    %978 = vmatpush1.msra.mxu0 0.0
    %979 = vmatprep.subr.mxu0 0.0
    %980 = vmatpush1.msra.mxu0 0.0
    %981 = vmatprep.subr.mxu0 0.0
    %982 = vmatpush1.msra.mxu0 0.0
    %983 = vmatprep.subr.mxu0 0.0
    %984 = vmatpush1.msra.mxu0 0.0
    %985 = vmatprep.subr.mxu0 0.0
    %986 = vmatpush1.msra.mxu0 0.0
    %987 = vmatprep.subr.mxu0 0.0
    %988 = vmatpush1.msra.mxu0 0.0
    %989 = vmatprep.subr.mxu0 0.0
    %990 = vmatpush1.msra.mxu0 0.0
    %991 = vmatprep.subr.mxu0 0.0
    %992 = vmatpush1.msra.mxu0 0.0
    %993 = vmatprep.subr.mxu0 0.0
    %994 = vmatpush1.msra.mxu0 0.0
    %995 = vmatprep.subr.mxu0 0.0
    %996 = vmatpush1.msra.mxu0 0.0
    %997 = vmatprep.subr.mxu0 0.0
    %998 = vmatpush1.msra.mxu0 0.0
    %999 = vmatprep.mubr.f32.mxu0 0.0
    %1000 = vmatmul.mubr.f32.gmra.mrb[0].mxu0 %v861
    %v1001 = vpop.f32.mrb[0].mxu0
    %v1002 = vadd.f32 0.0, %v1001
    %v1003 = vpop.f32.mrb[0].mxu0
    %v1004 = vadd.f32 0.0, %v1003
    %1005 = vdwg.mxu0
    %1006 = vmatprep.subr.mxu0 %v874
    %1007 = vmatpush1.msra.mxu0 %v873
    %1008 = vmatprep.subr.mxu0 %v878
    %1009 = vmatpush1.msra.mxu0 %v877
    %1010 = vmatprep.subr.mxu0 %v882
    %1011 = vmatpush1.msra.mxu0 %v881
    %1012 = vmatprep.subr.mxu0 %v886
    %1013 = vmatpush1.msra.mxu0 %v885
    %1014 = vmatprep.subr.mxu0 %v890
    %1015 = vmatpush1.msra.mxu0 %v889
    %1016 = vmatprep.subr.mxu0 %v894
    %1017 = vmatpush1.msra.mxu0 %v893
    %1018 = vmatprep.subr.mxu0 %v898
    %1019 = vmatpush1.msra.mxu0 %v897
    %1020 = vmatprep.subr.mxu0 %v902
    %1021 = vmatpush1.msra.mxu0 %v901
    %1022 = vmatprep.subr.mxu0 %v906
    %1023 = vmatpush1.msra.mxu0 %v905
    %1024 = vmatprep.subr.mxu0 %v910
    %1025 = vmatpush1.msra.mxu0 %v909
    %1026 = vmatprep.subr.mxu0 %v914
    %1027 = vmatpush1.msra.mxu0 %v913
    %1028 = vmatprep.subr.mxu0 %v918
    %1029 = vmatpush1.msra.mxu0 %v917
    %1030 = vmatprep.subr.mxu0 %v922
    %1031 = vmatpush1.msra.mxu0 %v921
    %1032 = vmatprep.subr.mxu0 %v926
    %1033 = vmatpush1.msra.mxu0 %v925
    %1034 = vmatprep.subr.mxu0 %v930
    %1035 = vmatpush1.msra.mxu0 %v929
    %1036 = vmatprep.subr.mxu0 %v934
    %1037 = vmatpush1.msra.mxu0 %v933
    %1038 = vmatprep.subr.mxu0 0.0
    %1039 = vmatpush1.msra.mxu0 0.0
    %1040 = vmatprep.subr.mxu0 0.0
    %1041 = vmatpush1.msra.mxu0 0.0
    %1042 = vmatprep.subr.mxu0 0.0
    %1043 = vmatpush1.msra.mxu0 0.0
    %1044 = vmatprep.subr.mxu0 0.0
    %1045 = vmatpush1.msra.mxu0 0.0
    %1046 = vmatprep.subr.mxu0 0.0
    %1047 = vmatpush1.msra.mxu0 0.0
    %1048 = vmatprep.subr.mxu0 0.0
    %1049 = vmatpush1.msra.mxu0 0.0
    %1050 = vmatprep.subr.mxu0 0.0
    %1051 = vmatpush1.msra.mxu0 0.0
    %1052 = vmatprep.subr.mxu0 0.0
    %1053 = vmatpush1.msra.mxu0 0.0
    %1054 = vmatprep.subr.mxu0 0.0
    %1055 = vmatpush1.msra.mxu0 0.0
    %1056 = vmatprep.subr.mxu0 0.0
    %1057 = vmatpush1.msra.mxu0 0.0
    %1058 = vmatprep.subr.mxu0 0.0
    %1059 = vmatpush1.msra.mxu0 0.0
    %1060 = vmatprep.subr.mxu0 0.0
    %1061 = vmatpush1.msra.mxu0 0.0
    %1062 = vmatprep.subr.mxu0 0.0
    %1063 = vmatpush1.msra.mxu0 0.0
    %1064 = vmatprep.subr.mxu0 0.0
    %1065 = vmatpush1.msra.mxu0 0.0
    %1066 = vmatprep.subr.mxu0 0.0
    %1067 = vmatpush1.msra.mxu0 0.0
    %1068 = vmatprep.subr.mxu0 0.0
    %1069 = vmatpush1.msra.mxu0 0.0
    %1070 = vmatprep.mubr.f32.mxu0 0.0
    %1071 = vmatmul.mubr.f32.gmra.mrb[0].mxu0 %v861
    %v1072 = vpop.f32.mrb[0].mxu0
    %v1073 = vadd.f32 0.0, %v1072
    %v1074 = vpop.f32.mrb[0].mxu0
    %v1075 = vadd.f32 0.0, %v1074
    %1076 = vdwg.mxu0
    %v1077 = vadd.f32 %v867, %v1002
    %v1078 = vadd.f32 %v868, %v1004
    %v1079 = vadd.f32 %v869, %v1073
    %v1080 = vadd.f32 %v870, %v1075
    %v1081 = vxor.u32 %v1077, 2147483648
    %v1082 = vmul.f32 %v1081, 1.442695
    %v1083 = vpow.pop %v1082
    %v1084 = vadd.f32 %v1083, 1.0
    %v1085 = vrcp.pop %v1084
    %v1086 = vmul.f32 1.0, %v1085
    %v1087 = vxor.u32 %v1078, 2147483648
    %v1088 = vmul.f32 %v1087, 1.442695
    %v1089 = vpow.pop %v1088
    %v1090 = vadd.f32 %v1089, 1.0
    %v1091 = vrcp.pop %v1090
    %v1092 = vmul.f32 1.0, %v1091
    %v1093 = vtanh.pop %v1079
    %v1094 = vxor.u32 %v1080, 2147483648
    %v1095 = vmul.f32 %v1094, 1.442695
    %v1096 = vpow.pop %v1095
    %v1097 = vadd.f32 %v1096, 1.0
    %v1098 = vrcp.pop %v1097
    %v1099 = vmul.f32 1.0, %v1098
    %v1100 = vmul.f32 %v1092, %v859
    %v1101 = vmul.f32 %v1086, %v1093
    %v1102 = vadd.f32 %v1100, %v1101
    %v1103 = vtanh.pop %v1102
    %v1104 = vmul.f32 %v1099, %v1103
    %s1105 = scalar_lea.vmem [#allocation3], 16
    %1106 = vst [vmem:[%s1105] sm:$0xff] %v1104
    %s1107 = smul.u32 3, 4
    %s1108 = smul.addr %s1107, 8
    %s1109 = scalar_lea.vmem [#allocation2], %s1108
    %v1110 = vld [vmem:[%s1109] sm:$0xff]
    %v1111 = vld [vmem:[%s1109 + $0x8] sm:$0xff]
    %v1112 = vld [vmem:[%s1109 + $0x10] sm:$0xff]
    %v1113 = vld [vmem:[%s1109 + $0x18] sm:$0xff]
    %v1114 = vld [vmem:[#allocation5] sm:$0xff]
    %v1115 = vld [vmem:[#allocation5 + $0x8] sm:$0xff]
    %v1116 = vld [vmem:[#allocation5 + $0x10] sm:$0xff]
    %v1117 = vld [vmem:[#allocation5 + $0x18] sm:$0xff]
    %v1118 = vld [vmem:[#allocation5 + $0x20] sm:$0xff]
    %v1119 = vld [vmem:[#allocation5 + $0x28] sm:$0xff]
    %v1120 = vld [vmem:[#allocation5 + $0x30] sm:$0xff]
    %v1121 = vld [vmem:[#allocation5 + $0x38] sm:$0xff]
    %v1122 = vld [vmem:[#allocation5 + $0x40] sm:$0xff]
    %v1123 = vld [vmem:[#allocation5 + $0x48] sm:$0xff]
    %v1124 = vld [vmem:[#allocation5 + $0x50] sm:$0xff]
    %v1125 = vld [vmem:[#allocation5 + $0x58] sm:$0xff]
    %v1126 = vld [vmem:[#allocation5 + $0x60] sm:$0xff]
    %v1127 = vld [vmem:[#allocation5 + $0x68] sm:$0xff]
    %v1128 = vld [vmem:[#allocation5 + $0x70] sm:$0xff]
    %v1129 = vld [vmem:[#allocation5 + $0x78] sm:$0xff]
    %v1130 = vld [vmem:[#allocation5 + $0x80] sm:$0xff]
    %v1131 = vld [vmem:[#allocation5 + $0x88] sm:$0xff]
    %v1132 = vld [vmem:[#allocation5 + $0x90] sm:$0xff]
    %v1133 = vld [vmem:[#allocation5 + $0x98] sm:$0xff]
    %v1134 = vld [vmem:[#allocation5 + $0xa0] sm:$0xff]
    %v1135 = vld [vmem:[#allocation5 + $0xa8] sm:$0xff]
    %v1136 = vld [vmem:[#allocation5 + $0xb0] sm:$0xff]
    %v1137 = vld [vmem:[#allocation5 + $0xb8] sm:$0xff]
    %v1138 = vld [vmem:[#allocation5 + $0xc0] sm:$0xff]
    %v1139 = vld [vmem:[#allocation5 + $0xc8] sm:$0xff]
    %v1140 = vld [vmem:[#allocation5 + $0xd0] sm:$0xff]
    %v1141 = vld [vmem:[#allocation5 + $0xd8] sm:$0xff]
    %v1142 = vld [vmem:[#allocation5 + $0xe0] sm:$0xff]
    %v1143 = vld [vmem:[#allocation5 + $0xe8] sm:$0xff]
    %v1144 = vld [vmem:[#allocation5 + $0xf0] sm:$0xff]
    %v1145 = vld [vmem:[#allocation5 + $0xf8] sm:$0xff]
    %v1146 = vld [vmem:[#allocation5 + $0x100] sm:$0xff]
    %v1147 = vld [vmem:[#allocation5 + $0x108] sm:$0xff]
    %v1148 = vld [vmem:[#allocation5 + $0x110] sm:$0xff]
    %v1149 = vld [vmem:[#allocation5 + $0x118] sm:$0xff]
    %v1150 = vld [vmem:[#allocation5 + $0x120] sm:$0xff]
    %v1151 = vld [vmem:[#allocation5 + $0x128] sm:$0xff]
    %v1152 = vld [vmem:[#allocation5 + $0x130] sm:$0xff]
    %v1153 = vld [vmem:[#allocation5 + $0x138] sm:$0xff]
    %v1154 = vld [vmem:[#allocation5 + $0x140] sm:$0xff]
    %v1155 = vld [vmem:[#allocation5 + $0x148] sm:$0xff]
    %v1156 = vld [vmem:[#allocation5 + $0x150] sm:$0xff]
    %v1157 = vld [vmem:[#allocation5 + $0x158] sm:$0xff]
    %v1158 = vld [vmem:[#allocation5 + $0x160] sm:$0xff]
    %v1159 = vld [vmem:[#allocation5 + $0x168] sm:$0xff]
    %v1160 = vld [vmem:[#allocation5 + $0x170] sm:$0xff]
    %v1161 = vld [vmem:[#allocation5 + $0x178] sm:$0xff]
    %v1162 = vld [vmem:[#allocation5 + $0x180] sm:$0xff]
    %v1163 = vld [vmem:[#allocation5 + $0x188] sm:$0xff]
    %v1164 = vld [vmem:[#allocation5 + $0x190] sm:$0xff]
    %v1165 = vld [vmem:[#allocation5 + $0x198] sm:$0xff]
    %v1166 = vld [vmem:[#allocation5 + $0x1a0] sm:$0xff]
    %v1167 = vld [vmem:[#allocation5 + $0x1a8] sm:$0xff]
    %v1168 = vld [vmem:[#allocation5 + $0x1b0] sm:$0xff]
    %v1169 = vld [vmem:[#allocation5 + $0x1b8] sm:$0xff]
    %v1170 = vld [vmem:[#allocation5 + $0x1c0] sm:$0xff]
    %v1171 = vld [vmem:[#allocation5 + $0x1c8] sm:$0xff]
    %v1172 = vld [vmem:[#allocation5 + $0x1d0] sm:$0xff]
    %v1173 = vld [vmem:[#allocation5 + $0x1d8] sm:$0xff]
    %v1174 = vld [vmem:[#allocation5 + $0x1e0] sm:$0xff]
    %v1175 = vld [vmem:[#allocation5 + $0x1e8] sm:$0xff]
    %v1176 = vld [vmem:[#allocation5 + $0x1f0] sm:$0xff]
    %v1177 = vld [vmem:[#allocation5 + $0x1f8] sm:$0xff]
    %1178 = vmatprep.subr.mxu0 %v1115
    %1179 = vmatpush1.msra.mxu0 %v1114
    %1180 = vmatprep.subr.mxu0 %v1119
    %1181 = vmatpush1.msra.mxu0 %v1118
    %1182 = vmatprep.subr.mxu0 %v1123
    %1183 = vmatpush1.msra.mxu0 %v1122
    %1184 = vmatprep.subr.mxu0 %v1127
    %1185 = vmatpush1.msra.mxu0 %v1126
    %1186 = vmatprep.subr.mxu0 %v1131
    %1187 = vmatpush1.msra.mxu0 %v1130
    %1188 = vmatprep.subr.mxu0 %v1135
    %1189 = vmatpush1.msra.mxu0 %v1134
    %1190 = vmatprep.subr.mxu0 %v1139
    %1191 = vmatpush1.msra.mxu0 %v1138
    %1192 = vmatprep.subr.mxu0 %v1143
    %1193 = vmatpush1.msra.mxu0 %v1142
    %1194 = vmatprep.subr.mxu0 %v1147
    %1195 = vmatpush1.msra.mxu0 %v1146
    %1196 = vmatprep.subr.mxu0 %v1151
    %1197 = vmatpush1.msra.mxu0 %v1150
    %1198 = vmatprep.subr.mxu0 %v1155
    %1199 = vmatpush1.msra.mxu0 %v1154
    %1200 = vmatprep.subr.mxu0 %v1159
    %1201 = vmatpush1.msra.mxu0 %v1158
    %1202 = vmatprep.subr.mxu0 %v1163
    %1203 = vmatpush1.msra.mxu0 %v1162
    %1204 = vmatprep.subr.mxu0 %v1167
    %1205 = vmatpush1.msra.mxu0 %v1166
    %1206 = vmatprep.subr.mxu0 %v1171
    %1207 = vmatpush1.msra.mxu0 %v1170
    %1208 = vmatprep.subr.mxu0 %v1175
    %1209 = vmatpush1.msra.mxu0 %v1174
    %1210 = vmatprep.subr.mxu0 0.0
    %1211 = vmatpush1.msra.mxu0 0.0
    %1212 = vmatprep.subr.mxu0 0.0
    %1213 = vmatpush1.msra.mxu0 0.0
    %1214 = vmatprep.subr.mxu0 0.0
    %1215 = vmatpush1.msra.mxu0 0.0
    %1216 = vmatprep.subr.mxu0 0.0
    %1217 = vmatpush1.msra.mxu0 0.0
    %1218 = vmatprep.subr.mxu0 0.0
    %1219 = vmatpush1.msra.mxu0 0.0
    %1220 = vmatprep.subr.mxu0 0.0
    %1221 = vmatpush1.msra.mxu0 0.0
    %1222 = vmatprep.subr.mxu0 0.0
    %1223 = vmatpush1.msra.mxu0 0.0
    %1224 = vmatprep.subr.mxu0 0.0
    %1225 = vmatpush1.msra.mxu0 0.0
    %1226 = vmatprep.subr.mxu0 0.0
    %1227 = vmatpush1.msra.mxu0 0.0
    %1228 = vmatprep.subr.mxu0 0.0
    %1229 = vmatpush1.msra.mxu0 0.0
    %1230 = vmatprep.subr.mxu0 0.0
    %1231 = vmatpush1.msra.mxu0 0.0
    %1232 = vmatprep.subr.mxu0 0.0
    %1233 = vmatpush1.msra.mxu0 0.0
    %1234 = vmatprep.subr.mxu0 0.0
    %1235 = vmatpush1.msra.mxu0 0.0
    %1236 = vmatprep.subr.mxu0 0.0
    %1237 = vmatpush1.msra.mxu0 0.0
    %1238 = vmatprep.subr.mxu0 0.0
    %1239 = vmatpush1.msra.mxu0 0.0
    %1240 = vmatprep.subr.mxu0 0.0
    %1241 = vmatpush1.msra.mxu0 0.0
    %1242 = vmatprep.mubr.f32.mxu0 0.0
    %1243 = vmatmul.mubr.f32.gmra.mrb[0].mxu0 %v1104
    %v1244 = vpop.f32.mrb[0].mxu0
    %v1245 = vadd.f32 0.0, %v1244
    %v1246 = vpop.f32.mrb[0].mxu0
    %v1247 = vadd.f32 0.0, %v1246
    %1248 = vdwg.mxu0
    %1249 = vmatprep.subr.mxu0 %v1117
    %1250 = vmatpush1.msra.mxu0 %v1116
    %1251 = vmatprep.subr.mxu0 %v1121
    %1252 = vmatpush1.msra.mxu0 %v1120
    %1253 = vmatprep.subr.mxu0 %v1125
    %1254 = vmatpush1.msra.mxu0 %v1124
    %1255 = vmatprep.subr.mxu0 %v1129
    %1256 = vmatpush1.msra.mxu0 %v1128
    %1257 = vmatprep.subr.mxu0 %v1133
    %1258 = vmatpush1.msra.mxu0 %v1132
    %1259 = vmatprep.subr.mxu0 %v1137
    %1260 = vmatpush1.msra.mxu0 %v1136
    %1261 = vmatprep.subr.mxu0 %v1141
    %1262 = vmatpush1.msra.mxu0 %v1140
    %1263 = vmatprep.subr.mxu0 %v1145
    %1264 = vmatpush1.msra.mxu0 %v1144
    %1265 = vmatprep.subr.mxu0 %v1149
    %1266 = vmatpush1.msra.mxu0 %v1148
    %1267 = vmatprep.subr.mxu0 %v1153
    %1268 = vmatpush1.msra.mxu0 %v1152
    %1269 = vmatprep.subr.mxu0 %v1157
    %1270 = vmatpush1.msra.mxu0 %v1156
    %1271 = vmatprep.subr.mxu0 %v1161
    %1272 = vmatpush1.msra.mxu0 %v1160
    %1273 = vmatprep.subr.mxu0 %v1165
    %1274 = vmatpush1.msra.mxu0 %v1164
    %1275 = vmatprep.subr.mxu0 %v1169
    %1276 = vmatpush1.msra.mxu0 %v1168
    %1277 = vmatprep.subr.mxu0 %v1173
    %1278 = vmatpush1.msra.mxu0 %v1172
    %1279 = vmatprep.subr.mxu0 %v1177
    %1280 = vmatpush1.msra.mxu0 %v1176
    %1281 = vmatprep.subr.mxu0 0.0
    %1282 = vmatpush1.msra.mxu0 0.0
    %1283 = vmatprep.subr.mxu0 0.0
    %1284 = vmatpush1.msra.mxu0 0.0
    %1285 = vmatprep.subr.mxu0 0.0
    %1286 = vmatpush1.msra.mxu0 0.0
    %1287 = vmatprep.subr.mxu0 0.0
    %1288 = vmatpush1.msra.mxu0 0.0
    %1289 = vmatprep.subr.mxu0 0.0
    %1290 = vmatpush1.msra.mxu0 0.0
    %1291 = vmatprep.subr.mxu0 0.0
    %1292 = vmatpush1.msra.mxu0 0.0
    %1293 = vmatprep.subr.mxu0 0.0
    %1294 = vmatpush1.msra.mxu0 0.0
    %1295 = vmatprep.subr.mxu0 0.0
    %1296 = vmatpush1.msra.mxu0 0.0
    %1297 = vmatprep.subr.mxu0 0.0
    %1298 = vmatpush1.msra.mxu0 0.0
    %1299 = vmatprep.subr.mxu0 0.0
    %1300 = vmatpush1.msra.mxu0 0.0
    %1301 = vmatprep.subr.mxu0 0.0
    %1302 = vmatpush1.msra.mxu0 0.0
    %1303 = vmatprep.subr.mxu0 0.0
    %1304 = vmatpush1.msra.mxu0 0.0
    %1305 = vmatprep.subr.mxu0 0.0
    %1306 = vmatpush1.msra.mxu0 0.0
    %1307 = vmatprep.subr.mxu0 0.0
    %1308 = vmatpush1.msra.mxu0 0.0
    %1309 = vmatprep.subr.mxu0 0.0
    %1310 = vmatpush1.msra.mxu0 0.0
    %1311 = vmatprep.subr.mxu0 0.0
    %1312 = vmatpush1.msra.mxu0 0.0
    %1313 = vmatprep.mubr.f32.mxu0 0.0
    %1314 = vmatmul.mubr.f32.gmra.mrb[0].mxu0 %v1104
    %v1315 = vpop.f32.mrb[0].mxu0
    %v1316 = vadd.f32 0.0, %v1315
    %v1317 = vpop.f32.mrb[0].mxu0
    %v1318 = vadd.f32 0.0, %v1317
    %1319 = vdwg.mxu0
    %v1320 = vadd.f32 %v1110, %v1245
    %v1321 = vadd.f32 %v1111, %v1247
    %v1322 = vadd.f32 %v1112, %v1316
    %v1323 = vadd.f32 %v1113, %v1318
    %v1324 = vxor.u32 %v1320, 2147483648
    %v1325 = vmul.f32 %v1324, 1.442695
    %v1326 = vpow.pop %v1325
    %v1327 = vadd.f32 %v1326, 1.0
    %v1328 = vrcp.pop %v1327
    %v1329 = vmul.f32 1.0, %v1328
    %v1330 = vxor.u32 %v1321, 2147483648
    %v1331 = vmul.f32 %v1330, 1.442695
    %v1332 = vpow.pop %v1331
    %v1333 = vadd.f32 %v1332, 1.0
    %v1334 = vrcp.pop %v1333
    %v1335 = vmul.f32 1.0, %v1334
    %v1336 = vtanh.pop %v1322
    %v1337 = vxor.u32 %v1323, 2147483648
    %v1338 = vmul.f32 %v1337, 1.442695
    %v1339 = vpow.pop %v1338
    %v1340 = vadd.f32 %v1339, 1.0
    %v1341 = vrcp.pop %v1340
    %v1342 = vmul.f32 1.0, %v1341
    %v1343 = vmul.f32 %v1335, %v1102
    %v1344 = vmul.f32 %v1329, %v1336
    %v1345 = vadd.f32 %v1343, %v1344
    %v1346 = vtanh.pop %v1345
    %v1347 = vmul.f32 %v1342, %v1346
    %s1348 = scalar_lea.vmem [#allocation3], 24
    %1349 = vst [vmem:[%s1348] sm:$0xff] %v1347
    %s1350 = smul.u32 4, 4
    %s1351 = smul.addr %s1350, 8
    %s1352 = scalar_lea.vmem [#allocation2], %s1351
    %v1353 = vld [vmem:[%s1352] sm:$0xff]
    %v1354 = vld [vmem:[%s1352 + $0x8] sm:$0xff]
    %v1355 = vld [vmem:[%s1352 + $0x10] sm:$0xff]
    %v1356 = vld [vmem:[%s1352 + $0x18] sm:$0xff]
    %v1357 = vld [vmem:[#allocation5] sm:$0xff]
    %v1358 = vld [vmem:[#allocation5 + $0x8] sm:$0xff]
    %v1359 = vld [vmem:[#allocation5 + $0x10] sm:$0xff]
    %v1360 = vld [vmem:[#allocation5 + $0x18] sm:$0xff]
    %v1361 = vld [vmem:[#allocation5 + $0x20] sm:$0xff]
    %v1362 = vld [vmem:[#allocation5 + $0x28] sm:$0xff]
    %v1363 = vld [vmem:[#allocation5 + $0x30] sm:$0xff]
    %v1364 = vld [vmem:[#allocation5 + $0x38] sm:$0xff]
    %v1365 = vld [vmem:[#allocation5 + $0x40] sm:$0xff]
    %v1366 = vld [vmem:[#allocation5 + $0x48] sm:$0xff]
    %v1367 = vld [vmem:[#allocation5 + $0x50] sm:$0xff]
    %v1368 = vld [vmem:[#allocation5 + $0x58] sm:$0xff]
    %v1369 = vld [vmem:[#allocation5 + $0x60] sm:$0xff]
    %v1370 = vld [vmem:[#allocation5 + $0x68] sm:$0xff]
    %v1371 = vld [vmem:[#allocation5 + $0x70] sm:$0xff]
    %v1372 = vld [vmem:[#allocation5 + $0x78] sm:$0xff]
    %v1373 = vld [vmem:[#allocation5 + $0x80] sm:$0xff]
    %v1374 = vld [vmem:[#allocation5 + $0x88] sm:$0xff]
    %v1375 = vld [vmem:[#allocation5 + $0x90] sm:$0xff]
    %v1376 = vld [vmem:[#allocation5 + $0x98] sm:$0xff]
    %v1377 = vld [vmem:[#allocation5 + $0xa0] sm:$0xff]
    %v1378 = vld [vmem:[#allocation5 + $0xa8] sm:$0xff]
    %v1379 = vld [vmem:[#allocation5 + $0xb0] sm:$0xff]
    %v1380 = vld [vmem:[#allocation5 + $0xb8] sm:$0xff]
    %v1381 = vld [vmem:[#allocation5 + $0xc0] sm:$0xff]
    %v1382 = vld [vmem:[#allocation5 + $0xc8] sm:$0xff]
    %v1383 = vld [vmem:[#allocation5 + $0xd0] sm:$0xff]
    %v1384 = vld [vmem:[#allocation5 + $0xd8] sm:$0xff]
    %v1385 = vld [vmem:[#allocation5 + $0xe0] sm:$0xff]
    %v1386 = vld [vmem:[#allocation5 + $0xe8] sm:$0xff]
    %v1387 = vld [vmem:[#allocation5 + $0xf0] sm:$0xff]
    %v1388 = vld [vmem:[#allocation5 + $0xf8] sm:$0xff]
    %v1389 = vld [vmem:[#allocation5 + $0x100] sm:$0xff]
    %v1390 = vld [vmem:[#allocation5 + $0x108] sm:$0xff]
    %v1391 = vld [vmem:[#allocation5 + $0x110] sm:$0xff]
    %v1392 = vld [vmem:[#allocation5 + $0x118] sm:$0xff]
    %v1393 = vld [vmem:[#allocation5 + $0x120] sm:$0xff]
    %v1394 = vld [vmem:[#allocation5 + $0x128] sm:$0xff]
    %v1395 = vld [vmem:[#allocation5 + $0x130] sm:$0xff]
    %v1396 = vld [vmem:[#allocation5 + $0x138] sm:$0xff]
    %v1397 = vld [vmem:[#allocation5 + $0x140] sm:$0xff]
    %v1398 = vld [vmem:[#allocation5 + $0x148] sm:$0xff]
    %v1399 = vld [vmem:[#allocation5 + $0x150] sm:$0xff]
    %v1400 = vld [vmem:[#allocation5 + $0x158] sm:$0xff]
    %v1401 = vld [vmem:[#allocation5 + $0x160] sm:$0xff]
    %v1402 = vld [vmem:[#allocation5 + $0x168] sm:$0xff]
    %v1403 = vld [vmem:[#allocation5 + $0x170] sm:$0xff]
    %v1404 = vld [vmem:[#allocation5 + $0x178] sm:$0xff]
    %v1405 = vld [vmem:[#allocation5 + $0x180] sm:$0xff]
    %v1406 = vld [vmem:[#allocation5 + $0x188] sm:$0xff]
    %v1407 = vld [vmem:[#allocation5 + $0x190] sm:$0xff]
    %v1408 = vld [vmem:[#allocation5 + $0x198] sm:$0xff]
    %v1409 = vld [vmem:[#allocation5 + $0x1a0] sm:$0xff]
    %v1410 = vld [vmem:[#allocation5 + $0x1a8] sm:$0xff]
    %v1411 = vld [vmem:[#allocation5 + $0x1b0] sm:$0xff]
    %v1412 = vld [vmem:[#allocation5 + $0x1b8] sm:$0xff]
    %v1413 = vld [vmem:[#allocation5 + $0x1c0] sm:$0xff]
    %v1414 = vld [vmem:[#allocation5 + $0x1c8] sm:$0xff]
    %v1415 = vld [vmem:[#allocation5 + $0x1d0] sm:$0xff]
    %v1416 = vld [vmem:[#allocation5 + $0x1d8] sm:$0xff]
    %v1417 = vld [vmem:[#allocation5 + $0x1e0] sm:$0xff]
    %v1418 = vld [vmem:[#allocation5 + $0x1e8] sm:$0xff]
    %v1419 = vld [vmem:[#allocation5 + $0x1f0] sm:$0xff]
    %v1420 = vld [vmem:[#allocation5 + $0x1f8] sm:$0xff]
    %1421 = vmatprep.subr.mxu0 %v1358
    %1422 = vmatpush1.msra.mxu0 %v1357
    %1423 = vmatprep.subr.mxu0 %v1362
    %1424 = vmatpush1.msra.mxu0 %v1361
    %1425 = vmatprep.subr.mxu0 %v1366
    %1426 = vmatpush1.msra.mxu0 %v1365
    %1427 = vmatprep.subr.mxu0 %v1370
    %1428 = vmatpush1.msra.mxu0 %v1369
    %1429 = vmatprep.subr.mxu0 %v1374
    %1430 = vmatpush1.msra.mxu0 %v1373
    %1431 = vmatprep.subr.mxu0 %v1378
    %1432 = vmatpush1.msra.mxu0 %v1377
    %1433 = vmatprep.subr.mxu0 %v1382
    %1434 = vmatpush1.msra.mxu0 %v1381
    %1435 = vmatprep.subr.mxu0 %v1386
    %1436 = vmatpush1.msra.mxu0 %v1385
    %1437 = vmatprep.subr.mxu0 %v1390
    %1438 = vmatpush1.msra.mxu0 %v1389
    %1439 = vmatprep.subr.mxu0 %v1394
    %1440 = vmatpush1.msra.mxu0 %v1393
    %1441 = vmatprep.subr.mxu0 %v1398
    %1442 = vmatpush1.msra.mxu0 %v1397
    %1443 = vmatprep.subr.mxu0 %v1402
    %1444 = vmatpush1.msra.mxu0 %v1401
    %1445 = vmatprep.subr.mxu0 %v1406
    %1446 = vmatpush1.msra.mxu0 %v1405
    %1447 = vmatprep.subr.mxu0 %v1410
    %1448 = vmatpush1.msra.mxu0 %v1409
    %1449 = vmatprep.subr.mxu0 %v1414
    %1450 = vmatpush1.msra.mxu0 %v1413
    %1451 = vmatprep.subr.mxu0 %v1418
    %1452 = vmatpush1.msra.mxu0 %v1417
    %1453 = vmatprep.subr.mxu0 0.0
    %1454 = vmatpush1.msra.mxu0 0.0
    %1455 = vmatprep.subr.mxu0 0.0
    %1456 = vmatpush1.msra.mxu0 0.0
    %1457 = vmatprep.subr.mxu0 0.0
    %1458 = vmatpush1.msra.mxu0 0.0
    %1459 = vmatprep.subr.mxu0 0.0
    %1460 = vmatpush1.msra.mxu0 0.0
    %1461 = vmatprep.subr.mxu0 0.0
    %1462 = vmatpush1.msra.mxu0 0.0
    %1463 = vmatprep.subr.mxu0 0.0
    %1464 = vmatpush1.msra.mxu0 0.0
    %1465 = vmatprep.subr.mxu0 0.0
    %1466 = vmatpush1.msra.mxu0 0.0
    %1467 = vmatprep.subr.mxu0 0.0
    %1468 = vmatpush1.msra.mxu0 0.0
    %1469 = vmatprep.subr.mxu0 0.0
    %1470 = vmatpush1.msra.mxu0 0.0
    %1471 = vmatprep.subr.mxu0 0.0
    %1472 = vmatpush1.msra.mxu0 0.0
    %1473 = vmatprep.subr.mxu0 0.0
    %1474 = vmatpush1.msra.mxu0 0.0
    %1475 = vmatprep.subr.mxu0 0.0
    %1476 = vmatpush1.msra.mxu0 0.0
    %1477 = vmatprep.subr.mxu0 0.0
    %1478 = vmatpush1.msra.mxu0 0.0
    %1479 = vmatprep.subr.mxu0 0.0
    %1480 = vmatpush1.msra.mxu0 0.0
    %1481 = vmatprep.subr.mxu0 0.0
    %1482 = vmatpush1.msra.mxu0 0.0
    %1483 = vmatprep.subr.mxu0 0.0
    %1484 = vmatpush1.msra.mxu0 0.0
    %1485 = vmatprep.mubr.f32.mxu0 0.0
    %1486 = vmatmul.mubr.f32.gmra.mrb[0].mxu0 %v1347
    %v1487 = vpop.f32.mrb[0].mxu0
    %v1488 = vadd.f32 0.0, %v1487
    %v1489 = vpop.f32.mrb[0].mxu0
    %v1490 = vadd.f32 0.0, %v1489
    %1491 = vdwg.mxu0
    %1492 = vmatprep.subr.mxu0 %v1360
    %1493 = vmatpush1.msra.mxu0 %v1359
    %1494 = vmatprep.subr.mxu0 %v1364
    %1495 = vmatpush1.msra.mxu0 %v1363
    %1496 = vmatprep.subr.mxu0 %v1368
    %1497 = vmatpush1.msra.mxu0 %v1367
    %1498 = vmatprep.subr.mxu0 %v1372
    %1499 = vmatpush1.msra.mxu0 %v1371
    %1500 = vmatprep.subr.mxu0 %v1376
    %1501 = vmatpush1.msra.mxu0 %v1375
    %1502 = vmatprep.subr.mxu0 %v1380
    %1503 = vmatpush1.msra.mxu0 %v1379
    %1504 = vmatprep.subr.mxu0 %v1384
    %1505 = vmatpush1.msra.mxu0 %v1383
    %1506 = vmatprep.subr.mxu0 %v1388
    %1507 = vmatpush1.msra.mxu0 %v1387
    %1508 = vmatprep.subr.mxu0 %v1392
    %1509 = vmatpush1.msra.mxu0 %v1391
    %1510 = vmatprep.subr.mxu0 %v1396
    %1511 = vmatpush1.msra.mxu0 %v1395
    %1512 = vmatprep.subr.mxu0 %v1400
    %1513 = vmatpush1.msra.mxu0 %v1399
    %1514 = vmatprep.subr.mxu0 %v1404
    %1515 = vmatpush1.msra.mxu0 %v1403
    %1516 = vmatprep.subr.mxu0 %v1408
    %1517 = vmatpush1.msra.mxu0 %v1407
    %1518 = vmatprep.subr.mxu0 %v1412
    %1519 = vmatpush1.msra.mxu0 %v1411
    %1520 = vmatprep.subr.mxu0 %v1416
    %1521 = vmatpush1.msra.mxu0 %v1415
    %1522 = vmatprep.subr.mxu0 %v1420
    %1523 = vmatpush1.msra.mxu0 %v1419
    %1524 = vmatprep.subr.mxu0 0.0
    %1525 = vmatpush1.msra.mxu0 0.0
    %1526 = vmatprep.subr.mxu0 0.0
    %1527 = vmatpush1.msra.mxu0 0.0
    %1528 = vmatprep.subr.mxu0 0.0
    %1529 = vmatpush1.msra.mxu0 0.0
    %1530 = vmatprep.subr.mxu0 0.0
    %1531 = vmatpush1.msra.mxu0 0.0
    %1532 = vmatprep.subr.mxu0 0.0
    %1533 = vmatpush1.msra.mxu0 0.0
    %1534 = vmatprep.subr.mxu0 0.0
    %1535 = vmatpush1.msra.mxu0 0.0
    %1536 = vmatprep.subr.mxu0 0.0
    %1537 = vmatpush1.msra.mxu0 0.0
    %1538 = vmatprep.subr.mxu0 0.0
    %1539 = vmatpush1.msra.mxu0 0.0
    %1540 = vmatprep.subr.mxu0 0.0
    %1541 = vmatpush1.msra.mxu0 0.0
    %1542 = vmatprep.subr.mxu0 0.0
    %1543 = vmatpush1.msra.mxu0 0.0
    %1544 = vmatprep.subr.mxu0 0.0
    %1545 = vmatpush1.msra.mxu0 0.0
    %1546 = vmatprep.subr.mxu0 0.0
    %1547 = vmatpush1.msra.mxu0 0.0
    %1548 = vmatprep.subr.mxu0 0.0
    %1549 = vmatpush1.msra.mxu0 0.0
    %1550 = vmatprep.subr.mxu0 0.0
    %1551 = vmatpush1.msra.mxu0 0.0
    %1552 = vmatprep.subr.mxu0 0.0
    %1553 = vmatpush1.msra.mxu0 0.0
    %1554 = vmatprep.subr.mxu0 0.0
    %1555 = vmatpush1.msra.mxu0 0.0
    %1556 = vmatprep.mubr.f32.mxu0 0.0
    %1557 = vmatmul.mubr.f32.gmra.mrb[0].mxu0 %v1347
    %v1558 = vpop.f32.mrb[0].mxu0
    %v1559 = vadd.f32 0.0, %v1558
    %v1560 = vpop.f32.mrb[0].mxu0
    %v1561 = vadd.f32 0.0, %v1560
    %1562 = vdwg.mxu0
    %v1563 = vadd.f32 %v1353, %v1488
    %v1564 = vadd.f32 %v1354, %v1490
    %v1565 = vadd.f32 %v1355, %v1559
    %v1566 = vadd.f32 %v1356, %v1561
    %v1567 = vxor.u32 %v1563, 2147483648
    %v1568 = vmul.f32 %v1567, 1.442695
    %v1569 = vpow.pop %v1568
    %v1570 = vadd.f32 %v1569, 1.0
    %v1571 = vrcp.pop %v1570
    %v1572 = vmul.f32 1.0, %v1571
    %v1573 = vxor.u32 %v1564, 2147483648
    %v1574 = vmul.f32 %v1573, 1.442695
    %v1575 = vpow.pop %v1574
    %v1576 = vadd.f32 %v1575, 1.0
    %v1577 = vrcp.pop %v1576
    %v1578 = vmul.f32 1.0, %v1577
    %v1579 = vtanh.pop %v1565
    %v1580 = vxor.u32 %v1566, 2147483648
    %v1581 = vmul.f32 %v1580, 1.442695
    %v1582 = vpow.pop %v1581
    %v1583 = vadd.f32 %v1582, 1.0
    %v1584 = vrcp.pop %v1583
    %v1585 = vmul.f32 1.0, %v1584
    %v1586 = vmul.f32 %v1578, %v1345
    %v1587 = vmul.f32 %v1572, %v1579
    %v1588 = vadd.f32 %v1586, %v1587
    %v1589 = vtanh.pop %v1588
    %v1590 = vmul.f32 %v1585, %v1589
    %s1591 = scalar_lea.vmem [#allocation3], 32
    %1592 = vst [vmem:[%s1591] sm:$0xff] %v1590
    %s1593 = smul.u32 5, 4
    %s1594 = smul.addr %s1593, 8
    %s1595 = scalar_lea.vmem [#allocation2], %s1594
    %v1596 = vld [vmem:[%s1595] sm:$0xff]
    %v1597 = vld [vmem:[%s1595 + $0x8] sm:$0xff]
    %v1598 = vld [vmem:[%s1595 + $0x10] sm:$0xff]
    %v1599 = vld [vmem:[%s1595 + $0x18] sm:$0xff]
    %v1600 = vld [vmem:[#allocation5] sm:$0xff]
    %v1601 = vld [vmem:[#allocation5 + $0x8] sm:$0xff]
    %v1602 = vld [vmem:[#allocation5 + $0x10] sm:$0xff]
    %v1603 = vld [vmem:[#allocation5 + $0x18] sm:$0xff]
    %v1604 = vld [vmem:[#allocation5 + $0x20] sm:$0xff]
    %v1605 = vld [vmem:[#allocation5 + $0x28] sm:$0xff]
    %v1606 = vld [vmem:[#allocation5 + $0x30] sm:$0xff]
    %v1607 = vld [vmem:[#allocation5 + $0x38] sm:$0xff]
    %v1608 = vld [vmem:[#allocation5 + $0x40] sm:$0xff]
    %v1609 = vld [vmem:[#allocation5 + $0x48] sm:$0xff]
    %v1610 = vld [vmem:[#allocation5 + $0x50] sm:$0xff]
    %v1611 = vld [vmem:[#allocation5 + $0x58] sm:$0xff]
    %v1612 = vld [vmem:[#allocation5 + $0x60] sm:$0xff]
    %v1613 = vld [vmem:[#allocation5 + $0x68] sm:$0xff]
    %v1614 = vld [vmem:[#allocation5 + $0x70] sm:$0xff]
    %v1615 = vld [vmem:[#allocation5 + $0x78] sm:$0xff]
    %v1616 = vld [vmem:[#allocation5 + $0x80] sm:$0xff]
    %v1617 = vld [vmem:[#allocation5 + $0x88] sm:$0xff]
    %v1618 = vld [vmem:[#allocation5 + $0x90] sm:$0xff]
    %v1619 = vld [vmem:[#allocation5 + $0x98] sm:$0xff]
    %v1620 = vld [vmem:[#allocation5 + $0xa0] sm:$0xff]
    %v1621 = vld [vmem:[#allocation5 + $0xa8] sm:$0xff]
    %v1622 = vld [vmem:[#allocation5 + $0xb0] sm:$0xff]
    %v1623 = vld [vmem:[#allocation5 + $0xb8] sm:$0xff]
    %v1624 = vld [vmem:[#allocation5 + $0xc0] sm:$0xff]
    %v1625 = vld [vmem:[#allocation5 + $0xc8] sm:$0xff]
    %v1626 = vld [vmem:[#allocation5 + $0xd0] sm:$0xff]
    %v1627 = vld [vmem:[#allocation5 + $0xd8] sm:$0xff]
    %v1628 = vld [vmem:[#allocation5 + $0xe0] sm:$0xff]
    %v1629 = vld [vmem:[#allocation5 + $0xe8] sm:$0xff]
    %v1630 = vld [vmem:[#allocation5 + $0xf0] sm:$0xff]
    %v1631 = vld [vmem:[#allocation5 + $0xf8] sm:$0xff]
    %v1632 = vld [vmem:[#allocation5 + $0x100] sm:$0xff]
    %v1633 = vld [vmem:[#allocation5 + $0x108] sm:$0xff]
    %v1634 = vld [vmem:[#allocation5 + $0x110] sm:$0xff]
    %v1635 = vld [vmem:[#allocation5 + $0x118] sm:$0xff]
    %v1636 = vld [vmem:[#allocation5 + $0x120] sm:$0xff]
    %v1637 = vld [vmem:[#allocation5 + $0x128] sm:$0xff]
    %v1638 = vld [vmem:[#allocation5 + $0x130] sm:$0xff]
    %v1639 = vld [vmem:[#allocation5 + $0x138] sm:$0xff]
    %v1640 = vld [vmem:[#allocation5 + $0x140] sm:$0xff]
    %v1641 = vld [vmem:[#allocation5 + $0x148] sm:$0xff]
    %v1642 = vld [vmem:[#allocation5 + $0x150] sm:$0xff]
    %v1643 = vld [vmem:[#allocation5 + $0x158] sm:$0xff]
    %v1644 = vld [vmem:[#allocation5 + $0x160] sm:$0xff]
    %v1645 = vld [vmem:[#allocation5 + $0x168] sm:$0xff]
    %v1646 = vld [vmem:[#allocation5 + $0x170] sm:$0xff]
    %v1647 = vld [vmem:[#allocation5 + $0x178] sm:$0xff]
    %v1648 = vld [vmem:[#allocation5 + $0x180] sm:$0xff]
    %v1649 = vld [vmem:[#allocation5 + $0x188] sm:$0xff]
    %v1650 = vld [vmem:[#allocation5 + $0x190] sm:$0xff]
    %v1651 = vld [vmem:[#allocation5 + $0x198] sm:$0xff]
    %v1652 = vld [vmem:[#allocation5 + $0x1a0] sm:$0xff]
    %v1653 = vld [vmem:[#allocation5 + $0x1a8] sm:$0xff]
    %v1654 = vld [vmem:[#allocation5 + $0x1b0] sm:$0xff]
    %v1655 = vld [vmem:[#allocation5 + $0x1b8] sm:$0xff]
    %v1656 = vld [vmem:[#allocation5 + $0x1c0] sm:$0xff]
    %v1657 = vld [vmem:[#allocation5 + $0x1c8] sm:$0xff]
    %v1658 = vld [vmem:[#allocation5 + $0x1d0] sm:$0xff]
    %v1659 = vld [vmem:[#allocation5 + $0x1d8] sm:$0xff]
    %v1660 = vld [vmem:[#allocation5 + $0x1e0] sm:$0xff]
    %v1661 = vld [vmem:[#allocation5 + $0x1e8] sm:$0xff]
    %v1662 = vld [vmem:[#allocation5 + $0x1f0] sm:$0xff]
    %v1663 = vld [vmem:[#allocation5 + $0x1f8] sm:$0xff]
    %1664 = vmatprep.subr.mxu0 %v1601
    %1665 = vmatpush1.msra.mxu0 %v1600
    %1666 = vmatprep.subr.mxu0 %v1605
    %1667 = vmatpush1.msra.mxu0 %v1604
    %1668 = vmatprep.subr.mxu0 %v1609
    %1669 = vmatpush1.msra.mxu0 %v1608
    %1670 = vmatprep.subr.mxu0 %v1613
    %1671 = vmatpush1.msra.mxu0 %v1612
    %1672 = vmatprep.subr.mxu0 %v1617
    %1673 = vmatpush1.msra.mxu0 %v1616
    %1674 = vmatprep.subr.mxu0 %v1621
    %1675 = vmatpush1.msra.mxu0 %v1620
    %1676 = vmatprep.subr.mxu0 %v1625
    %1677 = vmatpush1.msra.mxu0 %v1624
    %1678 = vmatprep.subr.mxu0 %v1629
    %1679 = vmatpush1.msra.mxu0 %v1628
    %1680 = vmatprep.subr.mxu0 %v1633
    %1681 = vmatpush1.msra.mxu0 %v1632
    %1682 = vmatprep.subr.mxu0 %v1637
    %1683 = vmatpush1.msra.mxu0 %v1636
    %1684 = vmatprep.subr.mxu0 %v1641
    %1685 = vmatpush1.msra.mxu0 %v1640
    %1686 = vmatprep.subr.mxu0 %v1645
    %1687 = vmatpush1.msra.mxu0 %v1644
    %1688 = vmatprep.subr.mxu0 %v1649
    %1689 = vmatpush1.msra.mxu0 %v1648
    %1690 = vmatprep.subr.mxu0 %v1653
    %1691 = vmatpush1.msra.mxu0 %v1652
    %1692 = vmatprep.subr.mxu0 %v1657
    %1693 = vmatpush1.msra.mxu0 %v1656
    %1694 = vmatprep.subr.mxu0 %v1661
    %1695 = vmatpush1.msra.mxu0 %v1660
    %1696 = vmatprep.subr.mxu0 0.0
    %1697 = vmatpush1.msra.mxu0 0.0
    %1698 = vmatprep.subr.mxu0 0.0
    %1699 = vmatpush1.msra.mxu0 0.0
    %1700 = vmatprep.subr.mxu0 0.0
    %1701 = vmatpush1.msra.mxu0 0.0
    %1702 = vmatprep.subr.mxu0 0.0
    %1703 = vmatpush1.msra.mxu0 0.0
    %1704 = vmatprep.subr.mxu0 0.0
    %1705 = vmatpush1.msra.mxu0 0.0
    %1706 = vmatprep.subr.mxu0 0.0
    %1707 = vmatpush1.msra.mxu0 0.0
    %1708 = vmatprep.subr.mxu0 0.0
    %1709 = vmatpush1.msra.mxu0 0.0
    %1710 = vmatprep.subr.mxu0 0.0
    %1711 = vmatpush1.msra.mxu0 0.0
    %1712 = vmatprep.subr.mxu0 0.0
    %1713 = vmatpush1.msra.mxu0 0.0
    %1714 = vmatprep.subr.mxu0 0.0
    %1715 = vmatpush1.msra.mxu0 0.0
    %1716 = vmatprep.subr.mxu0 0.0
    %1717 = vmatpush1.msra.mxu0 0.0
    %1718 = vmatprep.subr.mxu0 0.0
    %1719 = vmatpush1.msra.mxu0 0.0
    %1720 = vmatprep.subr.mxu0 0.0
    %1721 = vmatpush1.msra.mxu0 0.0
    %1722 = vmatprep.subr.mxu0 0.0
    %1723 = vmatpush1.msra.mxu0 0.0
    %1724 = vmatprep.subr.mxu0 0.0
    %1725 = vmatpush1.msra.mxu0 0.0
    %1726 = vmatprep.subr.mxu0 0.0
    %1727 = vmatpush1.msra.mxu0 0.0
    %1728 = vmatprep.mubr.f32.mxu0 0.0
    %1729 = vmatmul.mubr.f32.gmra.mrb[0].mxu0 %v1590
    %v1730 = vpop.f32.mrb[0].mxu0
    %v1731 = vadd.f32 0.0, %v1730
    %v1732 = vpop.f32.mrb[0].mxu0
    %v1733 = vadd.f32 0.0, %v1732
    %1734 = vdwg.mxu0
    %1735 = vmatprep.subr.mxu0 %v1603
    %1736 = vmatpush1.msra.mxu0 %v1602
    %1737 = vmatprep.subr.mxu0 %v1607
    %1738 = vmatpush1.msra.mxu0 %v1606
    %1739 = vmatprep.subr.mxu0 %v1611
    %1740 = vmatpush1.msra.mxu0 %v1610
    %1741 = vmatprep.subr.mxu0 %v1615
    %1742 = vmatpush1.msra.mxu0 %v1614
    %1743 = vmatprep.subr.mxu0 %v1619
    %1744 = vmatpush1.msra.mxu0 %v1618
    %1745 = vmatprep.subr.mxu0 %v1623
    %1746 = vmatpush1.msra.mxu0 %v1622
    %1747 = vmatprep.subr.mxu0 %v1627
    %1748 = vmatpush1.msra.mxu0 %v1626
    %1749 = vmatprep.subr.mxu0 %v1631
    %1750 = vmatpush1.msra.mxu0 %v1630
    %1751 = vmatprep.subr.mxu0 %v1635
    %1752 = vmatpush1.msra.mxu0 %v1634
    %1753 = vmatprep.subr.mxu0 %v1639
    %1754 = vmatpush1.msra.mxu0 %v1638
    %1755 = vmatprep.subr.mxu0 %v1643
    %1756 = vmatpush1.msra.mxu0 %v1642
    %1757 = vmatprep.subr.mxu0 %v1647
    %1758 = vmatpush1.msra.mxu0 %v1646
    %1759 = vmatprep.subr.mxu0 %v1651
    %1760 = vmatpush1.msra.mxu0 %v1650
    %1761 = vmatprep.subr.mxu0 %v1655
    %1762 = vmatpush1.msra.mxu0 %v1654
    %1763 = vmatprep.subr.mxu0 %v1659
    %1764 = vmatpush1.msra.mxu0 %v1658
    %1765 = vmatprep.subr.mxu0 %v1663
    %1766 = vmatpush1.msra.mxu0 %v1662
    %1767 = vmatprep.subr.mxu0 0.0
    %1768 = vmatpush1.msra.mxu0 0.0
    %1769 = vmatprep.subr.mxu0 0.0
    %1770 = vmatpush1.msra.mxu0 0.0
    %1771 = vmatprep.subr.mxu0 0.0
    %1772 = vmatpush1.msra.mxu0 0.0
    %1773 = vmatprep.subr.mxu0 0.0
    %1774 = vmatpush1.msra.mxu0 0.0
    %1775 = vmatprep.subr.mxu0 0.0
    %1776 = vmatpush1.msra.mxu0 0.0
    %1777 = vmatprep.subr.mxu0 0.0
    %1778 = vmatpush1.msra.mxu0 0.0
    %1779 = vmatprep.subr.mxu0 0.0
    %1780 = vmatpush1.msra.mxu0 0.0
    %1781 = vmatprep.subr.mxu0 0.0
    %1782 = vmatpush1.msra.mxu0 0.0
    %1783 = vmatprep.subr.mxu0 0.0
    %1784 = vmatpush1.msra.mxu0 0.0
    %1785 = vmatprep.subr.mxu0 0.0
    %1786 = vmatpush1.msra.mxu0 0.0
    %1787 = vmatprep.subr.mxu0 0.0
    %1788 = vmatpush1.msra.mxu0 0.0
    %1789 = vmatprep.subr.mxu0 0.0
    %1790 = vmatpush1.msra.mxu0 0.0
    %1791 = vmatprep.subr.mxu0 0.0
    %1792 = vmatpush1.msra.mxu0 0.0
    %1793 = vmatprep.subr.mxu0 0.0
    %1794 = vmatpush1.msra.mxu0 0.0
    %1795 = vmatprep.subr.mxu0 0.0
    %1796 = vmatpush1.msra.mxu0 0.0
    %1797 = vmatprep.subr.mxu0 0.0
    %1798 = vmatpush1.msra.mxu0 0.0
    %1799 = vmatprep.mubr.f32.mxu0 0.0
    %1800 = vmatmul.mubr.f32.gmra.mrb[0].mxu0 %v1590
    %v1801 = vpop.f32.mrb[0].mxu0
    %v1802 = vadd.f32 0.0, %v1801
    %v1803 = vpop.f32.mrb[0].mxu0
    %v1804 = vadd.f32 0.0, %v1803
    %1805 = vdwg.mxu0
    %v1806 = vadd.f32 %v1596, %v1731
    %v1807 = vadd.f32 %v1597, %v1733
    %v1808 = vadd.f32 %v1598, %v1802
    %v1809 = vadd.f32 %v1599, %v1804
    %v1810 = vxor.u32 %v1806, 2147483648
    %v1811 = vmul.f32 %v1810, 1.442695
    %v1812 = vpow.pop %v1811
    %v1813 = vadd.f32 %v1812, 1.0
    %v1814 = vrcp.pop %v1813
    %v1815 = vmul.f32 1.0, %v1814
    %v1816 = vxor.u32 %v1807, 2147483648
    %v1817 = vmul.f32 %v1816, 1.442695
    %v1818 = vpow.pop %v1817
    %v1819 = vadd.f32 %v1818, 1.0
    %v1820 = vrcp.pop %v1819
    %v1821 = vmul.f32 1.0, %v1820
    %v1822 = vtanh.pop %v1808
    %v1823 = vxor.u32 %v1809, 2147483648
    %v1824 = vmul.f32 %v1823, 1.442695
    %v1825 = vpow.pop %v1824
    %v1826 = vadd.f32 %v1825, 1.0
    %v1827 = vrcp.pop %v1826
    %v1828 = vmul.f32 1.0, %v1827
    %v1829 = vmul.f32 %v1821, %v1588
    %v1830 = vmul.f32 %v1815, %v1822
    %v1831 = vadd.f32 %v1829, %v1830
    %v1832 = vtanh.pop %v1831
    %v1833 = vmul.f32 %v1828, %v1832
    %s1834 = scalar_lea.vmem [#allocation3], 40
    %1835 = vst [vmem:[%s1834] sm:$0xff] %v1833
    %s1836 = smul.u32 6, 4
    %s1837 = smul.addr %s1836, 8
    %s1838 = scalar_lea.vmem [#allocation2], %s1837
    %v1839 = vld [vmem:[%s1838] sm:$0xff]
    %v1840 = vld [vmem:[%s1838 + $0x8] sm:$0xff]
    %v1841 = vld [vmem:[%s1838 + $0x10] sm:$0xff]
    %v1842 = vld [vmem:[%s1838 + $0x18] sm:$0xff]
    %v1843 = vld [vmem:[#allocation5] sm:$0xff]
    %v1844 = vld [vmem:[#allocation5 + $0x8] sm:$0xff]
    %v1845 = vld [vmem:[#allocation5 + $0x10] sm:$0xff]
    %v1846 = vld [vmem:[#allocation5 + $0x18] sm:$0xff]
    %v1847 = vld [vmem:[#allocation5 + $0x20] sm:$0xff]
    %v1848 = vld [vmem:[#allocation5 + $0x28] sm:$0xff]
    %v1849 = vld [vmem:[#allocation5 + $0x30] sm:$0xff]
    %v1850 = vld [vmem:[#allocation5 + $0x38] sm:$0xff]
    %v1851 = vld [vmem:[#allocation5 + $0x40] sm:$0xff]
    %v1852 = vld [vmem:[#allocation5 + $0x48] sm:$0xff]
    %v1853 = vld [vmem:[#allocation5 + $0x50] sm:$0xff]
    %v1854 = vld [vmem:[#allocation5 + $0x58] sm:$0xff]
    %v1855 = vld [vmem:[#allocation5 + $0x60] sm:$0xff]
    %v1856 = vld [vmem:[#allocation5 + $0x68] sm:$0xff]
    %v1857 = vld [vmem:[#allocation5 + $0x70] sm:$0xff]
    %v1858 = vld [vmem:[#allocation5 + $0x78] sm:$0xff]
    %v1859 = vld [vmem:[#allocation5 + $0x80] sm:$0xff]
    %v1860 = vld [vmem:[#allocation5 + $0x88] sm:$0xff]
    %v1861 = vld [vmem:[#allocation5 + $0x90] sm:$0xff]
    %v1862 = vld [vmem:[#allocation5 + $0x98] sm:$0xff]
    %v1863 = vld [vmem:[#allocation5 + $0xa0] sm:$0xff]
    %v1864 = vld [vmem:[#allocation5 + $0xa8] sm:$0xff]
    %v1865 = vld [vmem:[#allocation5 + $0xb0] sm:$0xff]
    %v1866 = vld [vmem:[#allocation5 + $0xb8] sm:$0xff]
    %v1867 = vld [vmem:[#allocation5 + $0xc0] sm:$0xff]
    %v1868 = vld [vmem:[#allocation5 + $0xc8] sm:$0xff]
    %v1869 = vld [vmem:[#allocation5 + $0xd0] sm:$0xff]
    %v1870 = vld [vmem:[#allocation5 + $0xd8] sm:$0xff]
    %v1871 = vld [vmem:[#allocation5 + $0xe0] sm:$0xff]
    %v1872 = vld [vmem:[#allocation5 + $0xe8] sm:$0xff]
    %v1873 = vld [vmem:[#allocation5 + $0xf0] sm:$0xff]
    %v1874 = vld [vmem:[#allocation5 + $0xf8] sm:$0xff]
    %v1875 = vld [vmem:[#allocation5 + $0x100] sm:$0xff]
    %v1876 = vld [vmem:[#allocation5 + $0x108] sm:$0xff]
    %v1877 = vld [vmem:[#allocation5 + $0x110] sm:$0xff]
    %v1878 = vld [vmem:[#allocation5 + $0x118] sm:$0xff]
    %v1879 = vld [vmem:[#allocation5 + $0x120] sm:$0xff]
    %v1880 = vld [vmem:[#allocation5 + $0x128] sm:$0xff]
    %v1881 = vld [vmem:[#allocation5 + $0x130] sm:$0xff]
    %v1882 = vld [vmem:[#allocation5 + $0x138] sm:$0xff]
    %v1883 = vld [vmem:[#allocation5 + $0x140] sm:$0xff]
    %v1884 = vld [vmem:[#allocation5 + $0x148] sm:$0xff]
    %v1885 = vld [vmem:[#allocation5 + $0x150] sm:$0xff]
    %v1886 = vld [vmem:[#allocation5 + $0x158] sm:$0xff]
    %v1887 = vld [vmem:[#allocation5 + $0x160] sm:$0xff]
    %v1888 = vld [vmem:[#allocation5 + $0x168] sm:$0xff]
    %v1889 = vld [vmem:[#allocation5 + $0x170] sm:$0xff]
    %v1890 = vld [vmem:[#allocation5 + $0x178] sm:$0xff]
    %v1891 = vld [vmem:[#allocation5 + $0x180] sm:$0xff]
    %v1892 = vld [vmem:[#allocation5 + $0x188] sm:$0xff]
    %v1893 = vld [vmem:[#allocation5 + $0x190] sm:$0xff]
    %v1894 = vld [vmem:[#allocation5 + $0x198] sm:$0xff]
    %v1895 = vld [vmem:[#allocation5 + $0x1a0] sm:$0xff]
    %v1896 = vld [vmem:[#allocation5 + $0x1a8] sm:$0xff]
    %v1897 = vld [vmem:[#allocation5 + $0x1b0] sm:$0xff]
    %v1898 = vld [vmem:[#allocation5 + $0x1b8] sm:$0xff]
    %v1899 = vld [vmem:[#allocation5 + $0x1c0] sm:$0xff]
    %v1900 = vld [vmem:[#allocation5 + $0x1c8] sm:$0xff]
    %v1901 = vld [vmem:[#allocation5 + $0x1d0] sm:$0xff]
    %v1902 = vld [vmem:[#allocation5 + $0x1d8] sm:$0xff]
    %v1903 = vld [vmem:[#allocation5 + $0x1e0] sm:$0xff]
    %v1904 = vld [vmem:[#allocation5 + $0x1e8] sm:$0xff]
    %v1905 = vld [vmem:[#allocation5 + $0x1f0] sm:$0xff]
    %v1906 = vld [vmem:[#allocation5 + $0x1f8] sm:$0xff]
    %1907 = vmatprep.subr.mxu0 %v1844
    %1908 = vmatpush1.msra.mxu0 %v1843
    %1909 = vmatprep.subr.mxu0 %v1848
    %1910 = vmatpush1.msra.mxu0 %v1847
    %1911 = vmatprep.subr.mxu0 %v1852
    %1912 = vmatpush1.msra.mxu0 %v1851
    %1913 = vmatprep.subr.mxu0 %v1856
    %1914 = vmatpush1.msra.mxu0 %v1855
    %1915 = vmatprep.subr.mxu0 %v1860
    %1916 = vmatpush1.msra.mxu0 %v1859
    %1917 = vmatprep.subr.mxu0 %v1864
    %1918 = vmatpush1.msra.mxu0 %v1863
    %1919 = vmatprep.subr.mxu0 %v1868
    %1920 = vmatpush1.msra.mxu0 %v1867
    %1921 = vmatprep.subr.mxu0 %v1872
    %1922 = vmatpush1.msra.mxu0 %v1871
    %1923 = vmatprep.subr.mxu0 %v1876
    %1924 = vmatpush1.msra.mxu0 %v1875
    %1925 = vmatprep.subr.mxu0 %v1880
    %1926 = vmatpush1.msra.mxu0 %v1879
    %1927 = vmatprep.subr.mxu0 %v1884
    %1928 = vmatpush1.msra.mxu0 %v1883
    %1929 = vmatprep.subr.mxu0 %v1888
    %1930 = vmatpush1.msra.mxu0 %v1887
    %1931 = vmatprep.subr.mxu0 %v1892
    %1932 = vmatpush1.msra.mxu0 %v1891
    %1933 = vmatprep.subr.mxu0 %v1896
    %1934 = vmatpush1.msra.mxu0 %v1895
    %1935 = vmatprep.subr.mxu0 %v1900
    %1936 = vmatpush1.msra.mxu0 %v1899
    %1937 = vmatprep.subr.mxu0 %v1904
    %1938 = vmatpush1.msra.mxu0 %v1903
    %1939 = vmatprep.subr.mxu0 0.0
    %1940 = vmatpush1.msra.mxu0 0.0
    %1941 = vmatprep.subr.mxu0 0.0
    %1942 = vmatpush1.msra.mxu0 0.0
    %1943 = vmatprep.subr.mxu0 0.0
    %1944 = vmatpush1.msra.mxu0 0.0
    %1945 = vmatprep.subr.mxu0 0.0
    %1946 = vmatpush1.msra.mxu0 0.0
    %1947 = vmatprep.subr.mxu0 0.0
    %1948 = vmatpush1.msra.mxu0 0.0
    %1949 = vmatprep.subr.mxu0 0.0
    %1950 = vmatpush1.msra.mxu0 0.0
    %1951 = vmatprep.subr.mxu0 0.0
    %1952 = vmatpush1.msra.mxu0 0.0
    %1953 = vmatprep.subr.mxu0 0.0
    %1954 = vmatpush1.msra.mxu0 0.0
    %1955 = vmatprep.subr.mxu0 0.0
    %1956 = vmatpush1.msra.mxu0 0.0
    %1957 = vmatprep.subr.mxu0 0.0
    %1958 = vmatpush1.msra.mxu0 0.0
    %1959 = vmatprep.subr.mxu0 0.0
    %1960 = vmatpush1.msra.mxu0 0.0
    %1961 = vmatprep.subr.mxu0 0.0
    %1962 = vmatpush1.msra.mxu0 0.0
    %1963 = vmatprep.subr.mxu0 0.0
    %1964 = vmatpush1.msra.mxu0 0.0
    %1965 = vmatprep.subr.mxu0 0.0
    %1966 = vmatpush1.msra.mxu0 0.0
    %1967 = vmatprep.subr.mxu0 0.0
    %1968 = vmatpush1.msra.mxu0 0.0
    %1969 = vmatprep.subr.mxu0 0.0
    %1970 = vmatpush1.msra.mxu0 0.0
    %1971 = vmatprep.mubr.f32.mxu0 0.0
    %1972 = vmatmul.mubr.f32.gmra.mrb[0].mxu0 %v1833
    %v1973 = vpop.f32.mrb[0].mxu0
    %v1974 = vadd.f32 0.0, %v1973
    %v1975 = vpop.f32.mrb[0].mxu0
    %v1976 = vadd.f32 0.0, %v1975
    %1977 = vdwg.mxu0
    %1978 = vmatprep.subr.mxu0 %v1846
    %1979 = vmatpush1.msra.mxu0 %v1845
    %1980 = vmatprep.subr.mxu0 %v1850
    %1981 = vmatpush1.msra.mxu0 %v1849
    %1982 = vmatprep.subr.mxu0 %v1854
    %1983 = vmatpush1.msra.mxu0 %v1853
    %1984 = vmatprep.subr.mxu0 %v1858
    %1985 = vmatpush1.msra.mxu0 %v1857
    %1986 = vmatprep.subr.mxu0 %v1862
    %1987 = vmatpush1.msra.mxu0 %v1861
    %1988 = vmatprep.subr.mxu0 %v1866
    %1989 = vmatpush1.msra.mxu0 %v1865
    %1990 = vmatprep.subr.mxu0 %v1870
    %1991 = vmatpush1.msra.mxu0 %v1869
    %1992 = vmatprep.subr.mxu0 %v1874
    %1993 = vmatpush1.msra.mxu0 %v1873
    %1994 = vmatprep.subr.mxu0 %v1878
    %1995 = vmatpush1.msra.mxu0 %v1877
    %1996 = vmatprep.subr.mxu0 %v1882
    %1997 = vmatpush1.msra.mxu0 %v1881
    %1998 = vmatprep.subr.mxu0 %v1886
    %1999 = vmatpush1.msra.mxu0 %v1885
    %2000 = vmatprep.subr.mxu0 %v1890
    %2001 = vmatpush1.msra.mxu0 %v1889
    %2002 = vmatprep.subr.mxu0 %v1894
    %2003 = vmatpush1.msra.mxu0 %v1893
    %2004 = vmatprep.subr.mxu0 %v1898
    %2005 = vmatpush1.msra.mxu0 %v1897
    %2006 = vmatprep.subr.mxu0 %v1902
    %2007 = vmatpush1.msra.mxu0 %v1901
    %2008 = vmatprep.subr.mxu0 %v1906
    %2009 = vmatpush1.msra.mxu0 %v1905
    %2010 = vmatprep.subr.mxu0 0.0
    %2011 = vmatpush1.msra.mxu0 0.0
    %2012 = vmatprep.subr.mxu0 0.0
    %2013 = vmatpush1.msra.mxu0 0.0
    %2014 = vmatprep.subr.mxu0 0.0
    %2015 = vmatpush1.msra.mxu0 0.0
    %2016 = vmatprep.subr.mxu0 0.0
    %2017 = vmatpush1.msra.mxu0 0.0
    %2018 = vmatprep.subr.mxu0 0.0
    %2019 = vmatpush1.msra.mxu0 0.0
    %2020 = vmatprep.subr.mxu0 0.0
    %2021 = vmatpush1.msra.mxu0 0.0
    %2022 = vmatprep.subr.mxu0 0.0
    %2023 = vmatpush1.msra.mxu0 0.0
    %2024 = vmatprep.subr.mxu0 0.0
    %2025 = vmatpush1.msra.mxu0 0.0
    %2026 = vmatprep.subr.mxu0 0.0
    %2027 = vmatpush1.msra.mxu0 0.0
    %2028 = vmatprep.subr.mxu0 0.0
    %2029 = vmatpush1.msra.mxu0 0.0
    %2030 = vmatprep.subr.mxu0 0.0
    %2031 = vmatpush1.msra.mxu0 0.0
    %2032 = vmatprep.subr.mxu0 0.0
    %2033 = vmatpush1.msra.mxu0 0.0
    %2034 = vmatprep.subr.mxu0 0.0
    %2035 = vmatpush1.msra.mxu0 0.0
    %2036 = vmatprep.subr.mxu0 0.0
    %2037 = vmatpush1.msra.mxu0 0.0
    %2038 = vmatprep.subr.mxu0 0.0
    %2039 = vmatpush1.msra.mxu0 0.0
    %2040 = vmatprep.subr.mxu0 0.0
    %2041 = vmatpush1.msra.mxu0 0.0
    %2042 = vmatprep.mubr.f32.mxu0 0.0
    %2043 = vmatmul.mubr.f32.gmra.mrb[0].mxu0 %v1833
    %v2044 = vpop.f32.mrb[0].mxu0
    %v2045 = vadd.f32 0.0, %v2044
    %v2046 = vpop.f32.mrb[0].mxu0
    %v2047 = vadd.f32 0.0, %v2046
    %2048 = vdwg.mxu0
    %v2049 = vadd.f32 %v1839, %v1974
    %v2050 = vadd.f32 %v1840, %v1976
    %v2051 = vadd.f32 %v1841, %v2045
    %v2052 = vadd.f32 %v1842, %v2047
    %v2053 = vxor.u32 %v2049, 2147483648
    %v2054 = vmul.f32 %v2053, 1.442695
    %v2055 = vpow.pop %v2054
    %v2056 = vadd.f32 %v2055, 1.0
    %v2057 = vrcp.pop %v2056
    %v2058 = vmul.f32 1.0, %v2057
    %v2059 = vxor.u32 %v2050, 2147483648
    %v2060 = vmul.f32 %v2059, 1.442695
    %v2061 = vpow.pop %v2060
    %v2062 = vadd.f32 %v2061, 1.0
    %v2063 = vrcp.pop %v2062
    %v2064 = vmul.f32 1.0, %v2063
    %v2065 = vtanh.pop %v2051
    %v2066 = vxor.u32 %v2052, 2147483648
    %v2067 = vmul.f32 %v2066, 1.442695
    %v2068 = vpow.pop %v2067
    %v2069 = vadd.f32 %v2068, 1.0
    %v2070 = vrcp.pop %v2069
    %v2071 = vmul.f32 1.0, %v2070
    %v2072 = vmul.f32 %v2064, %v1831
    %v2073 = vmul.f32 %v2058, %v2065
    %v2074 = vadd.f32 %v2072, %v2073
    %v2075 = vtanh.pop %v2074
    %v2076 = vmul.f32 %v2071, %v2075
    %s2077 = scalar_lea.vmem [#allocation3], 48
    %2078 = vst [vmem:[%s2077] sm:$0xff] %v2076
    %s2079 = smul.u32 7, 4
    %s2080 = smul.addr %s2079, 8
    %s2081 = scalar_lea.vmem [#allocation2], %s2080
    %v2082 = vld [vmem:[%s2081] sm:$0xff]
    %v2083 = vld [vmem:[%s2081 + $0x8] sm:$0xff]
    %v2084 = vld [vmem:[%s2081 + $0x10] sm:$0xff]
    %v2085 = vld [vmem:[%s2081 + $0x18] sm:$0xff]
    %v2086 = vld [vmem:[#allocation5] sm:$0xff]
    %v2087 = vld [vmem:[#allocation5 + $0x8] sm:$0xff]
    %v2088 = vld [vmem:[#allocation5 + $0x10] sm:$0xff]
    %v2089 = vld [vmem:[#allocation5 + $0x18] sm:$0xff]
    %v2090 = vld [vmem:[#allocation5 + $0x20] sm:$0xff]
    %v2091 = vld [vmem:[#allocation5 + $0x28] sm:$0xff]
    %v2092 = vld [vmem:[#allocation5 + $0x30] sm:$0xff]
    %v2093 = vld [vmem:[#allocation5 + $0x38] sm:$0xff]
    %v2094 = vld [vmem:[#allocation5 + $0x40] sm:$0xff]
    %v2095 = vld [vmem:[#allocation5 + $0x48] sm:$0xff]
    %v2096 = vld [vmem:[#allocation5 + $0x50] sm:$0xff]
    %v2097 = vld [vmem:[#allocation5 + $0x58] sm:$0xff]
    %v2098 = vld [vmem:[#allocation5 + $0x60] sm:$0xff]
    %v2099 = vld [vmem:[#allocation5 + $0x68] sm:$0xff]
    %v2100 = vld [vmem:[#allocation5 + $0x70] sm:$0xff]
    %v2101 = vld [vmem:[#allocation5 + $0x78] sm:$0xff]
    %v2102 = vld [vmem:[#allocation5 + $0x80] sm:$0xff]
    %v2103 = vld [vmem:[#allocation5 + $0x88] sm:$0xff]
    %v2104 = vld [vmem:[#allocation5 + $0x90] sm:$0xff]
    %v2105 = vld [vmem:[#allocation5 + $0x98] sm:$0xff]
    %v2106 = vld [vmem:[#allocation5 + $0xa0] sm:$0xff]
    %v2107 = vld [vmem:[#allocation5 + $0xa8] sm:$0xff]
    %v2108 = vld [vmem:[#allocation5 + $0xb0] sm:$0xff]
    %v2109 = vld [vmem:[#allocation5 + $0xb8] sm:$0xff]
    %v2110 = vld [vmem:[#allocation5 + $0xc0] sm:$0xff]
    %v2111 = vld [vmem:[#allocation5 + $0xc8] sm:$0xff]
    %v2112 = vld [vmem:[#allocation5 + $0xd0] sm:$0xff]
    %v2113 = vld [vmem:[#allocation5 + $0xd8] sm:$0xff]
    %v2114 = vld [vmem:[#allocation5 + $0xe0] sm:$0xff]
    %v2115 = vld [vmem:[#allocation5 + $0xe8] sm:$0xff]
    %v2116 = vld [vmem:[#allocation5 + $0xf0] sm:$0xff]
    %v2117 = vld [vmem:[#allocation5 + $0xf8] sm:$0xff]
    %v2118 = vld [vmem:[#allocation5 + $0x100] sm:$0xff]
    %v2119 = vld [vmem:[#allocation5 + $0x108] sm:$0xff]
    %v2120 = vld [vmem:[#allocation5 + $0x110] sm:$0xff]
    %v2121 = vld [vmem:[#allocation5 + $0x118] sm:$0xff]
    %v2122 = vld [vmem:[#allocation5 + $0x120] sm:$0xff]
    %v2123 = vld [vmem:[#allocation5 + $0x128] sm:$0xff]
    %v2124 = vld [vmem:[#allocation5 + $0x130] sm:$0xff]
    %v2125 = vld [vmem:[#allocation5 + $0x138] sm:$0xff]
    %v2126 = vld [vmem:[#allocation5 + $0x140] sm:$0xff]
    %v2127 = vld [vmem:[#allocation5 + $0x148] sm:$0xff]
    %v2128 = vld [vmem:[#allocation5 + $0x150] sm:$0xff]
    %v2129 = vld [vmem:[#allocation5 + $0x158] sm:$0xff]
    %v2130 = vld [vmem:[#allocation5 + $0x160] sm:$0xff]
    %v2131 = vld [vmem:[#allocation5 + $0x168] sm:$0xff]
    %v2132 = vld [vmem:[#allocation5 + $0x170] sm:$0xff]
    %v2133 = vld [vmem:[#allocation5 + $0x178] sm:$0xff]
    %v2134 = vld [vmem:[#allocation5 + $0x180] sm:$0xff]
    %v2135 = vld [vmem:[#allocation5 + $0x188] sm:$0xff]
    %v2136 = vld [vmem:[#allocation5 + $0x190] sm:$0xff]
    %v2137 = vld [vmem:[#allocation5 + $0x198] sm:$0xff]
    %v2138 = vld [vmem:[#allocation5 + $0x1a0] sm:$0xff]
    %v2139 = vld [vmem:[#allocation5 + $0x1a8] sm:$0xff]
    %v2140 = vld [vmem:[#allocation5 + $0x1b0] sm:$0xff]
    %v2141 = vld [vmem:[#allocation5 + $0x1b8] sm:$0xff]
    %v2142 = vld [vmem:[#allocation5 + $0x1c0] sm:$0xff]
    %v2143 = vld [vmem:[#allocation5 + $0x1c8] sm:$0xff]
    %v2144 = vld [vmem:[#allocation5 + $0x1d0] sm:$0xff]
    %v2145 = vld [vmem:[#allocation5 + $0x1d8] sm:$0xff]
    %v2146 = vld [vmem:[#allocation5 + $0x1e0] sm:$0xff]
    %v2147 = vld [vmem:[#allocation5 + $0x1e8] sm:$0xff]
    %v2148 = vld [vmem:[#allocation5 + $0x1f0] sm:$0xff]
    %v2149 = vld [vmem:[#allocation5 + $0x1f8] sm:$0xff]
    %2150 = vmatprep.subr.mxu0 %v2087
    %2151 = vmatpush1.msra.mxu0 %v2086
    %2152 = vmatprep.subr.mxu0 %v2091
    %2153 = vmatpush1.msra.mxu0 %v2090
    %2154 = vmatprep.subr.mxu0 %v2095
    %2155 = vmatpush1.msra.mxu0 %v2094
    %2156 = vmatprep.subr.mxu0 %v2099
    %2157 = vmatpush1.msra.mxu0 %v2098
    %2158 = vmatprep.subr.mxu0 %v2103
    %2159 = vmatpush1.msra.mxu0 %v2102
    %2160 = vmatprep.subr.mxu0 %v2107
    %2161 = vmatpush1.msra.mxu0 %v2106
    %2162 = vmatprep.subr.mxu0 %v2111
    %2163 = vmatpush1.msra.mxu0 %v2110
    %2164 = vmatprep.subr.mxu0 %v2115
    %2165 = vmatpush1.msra.mxu0 %v2114
    %2166 = vmatprep.subr.mxu0 %v2119
    %2167 = vmatpush1.msra.mxu0 %v2118
    %2168 = vmatprep.subr.mxu0 %v2123
    %2169 = vmatpush1.msra.mxu0 %v2122
    %2170 = vmatprep.subr.mxu0 %v2127
    %2171 = vmatpush1.msra.mxu0 %v2126
    %2172 = vmatprep.subr.mxu0 %v2131
    %2173 = vmatpush1.msra.mxu0 %v2130
    %2174 = vmatprep.subr.mxu0 %v2135
    %2175 = vmatpush1.msra.mxu0 %v2134
    %2176 = vmatprep.subr.mxu0 %v2139
    %2177 = vmatpush1.msra.mxu0 %v2138
    %2178 = vmatprep.subr.mxu0 %v2143
    %2179 = vmatpush1.msra.mxu0 %v2142
    %2180 = vmatprep.subr.mxu0 %v2147
    %2181 = vmatpush1.msra.mxu0 %v2146
    %2182 = vmatprep.subr.mxu0 0.0
    %2183 = vmatpush1.msra.mxu0 0.0
    %2184 = vmatprep.subr.mxu0 0.0
    %2185 = vmatpush1.msra.mxu0 0.0
    %2186 = vmatprep.subr.mxu0 0.0
    %2187 = vmatpush1.msra.mxu0 0.0
    %2188 = vmatprep.subr.mxu0 0.0
    %2189 = vmatpush1.msra.mxu0 0.0
    %2190 = vmatprep.subr.mxu0 0.0
    %2191 = vmatpush1.msra.mxu0 0.0
    %2192 = vmatprep.subr.mxu0 0.0
    %2193 = vmatpush1.msra.mxu0 0.0
    %2194 = vmatprep.subr.mxu0 0.0
    %2195 = vmatpush1.msra.mxu0 0.0
    %2196 = vmatprep.subr.mxu0 0.0
    %2197 = vmatpush1.msra.mxu0 0.0
    %2198 = vmatprep.subr.mxu0 0.0
    %2199 = vmatpush1.msra.mxu0 0.0
    %2200 = vmatprep.subr.mxu0 0.0
    %2201 = vmatpush1.msra.mxu0 0.0
    %2202 = vmatprep.subr.mxu0 0.0
    %2203 = vmatpush1.msra.mxu0 0.0
    %2204 = vmatprep.subr.mxu0 0.0
    %2205 = vmatpush1.msra.mxu0 0.0
    %2206 = vmatprep.subr.mxu0 0.0
    %2207 = vmatpush1.msra.mxu0 0.0
    %2208 = vmatprep.subr.mxu0 0.0
    %2209 = vmatpush1.msra.mxu0 0.0
    %2210 = vmatprep.subr.mxu0 0.0
    %2211 = vmatpush1.msra.mxu0 0.0
    %2212 = vmatprep.subr.mxu0 0.0
    %2213 = vmatpush1.msra.mxu0 0.0
    %2214 = vmatprep.mubr.f32.mxu0 0.0
    %2215 = vmatmul.mubr.f32.gmra.mrb[0].mxu0 %v2076
    %v2216 = vpop.f32.mrb[0].mxu0
    %v2217 = vadd.f32 0.0, %v2216
    %v2218 = vpop.f32.mrb[0].mxu0
    %v2219 = vadd.f32 0.0, %v2218
    %2220 = vdwg.mxu0
    %2221 = vmatprep.subr.mxu0 %v2089
    %2222 = vmatpush1.msra.mxu0 %v2088
    %2223 = vmatprep.subr.mxu0 %v2093
    %2224 = vmatpush1.msra.mxu0 %v2092
    %2225 = vmatprep.subr.mxu0 %v2097
    %2226 = vmatpush1.msra.mxu0 %v2096
    %2227 = vmatprep.subr.mxu0 %v2101
    %2228 = vmatpush1.msra.mxu0 %v2100
    %2229 = vmatprep.subr.mxu0 %v2105
    %2230 = vmatpush1.msra.mxu0 %v2104
    %2231 = vmatprep.subr.mxu0 %v2109
    %2232 = vmatpush1.msra.mxu0 %v2108
    %2233 = vmatprep.subr.mxu0 %v2113
    %2234 = vmatpush1.msra.mxu0 %v2112
    %2235 = vmatprep.subr.mxu0 %v2117
    %2236 = vmatpush1.msra.mxu0 %v2116
    %2237 = vmatprep.subr.mxu0 %v2121
    %2238 = vmatpush1.msra.mxu0 %v2120
    %2239 = vmatprep.subr.mxu0 %v2125
    %2240 = vmatpush1.msra.mxu0 %v2124
    %2241 = vmatprep.subr.mxu0 %v2129
    %2242 = vmatpush1.msra.mxu0 %v2128
    %2243 = vmatprep.subr.mxu0 %v2133
    %2244 = vmatpush1.msra.mxu0 %v2132
    %2245 = vmatprep.subr.mxu0 %v2137
    %2246 = vmatpush1.msra.mxu0 %v2136
    %2247 = vmatprep.subr.mxu0 %v2141
    %2248 = vmatpush1.msra.mxu0 %v2140
    %2249 = vmatprep.subr.mxu0 %v2145
    %2250 = vmatpush1.msra.mxu0 %v2144
    %2251 = vmatprep.subr.mxu0 %v2149
    %2252 = vmatpush1.msra.mxu0 %v2148
    %2253 = vmatprep.subr.mxu0 0.0
    %2254 = vmatpush1.msra.mxu0 0.0
    %2255 = vmatprep.subr.mxu0 0.0
    %2256 = vmatpush1.msra.mxu0 0.0
    %2257 = vmatprep.subr.mxu0 0.0
    %2258 = vmatpush1.msra.mxu0 0.0
    %2259 = vmatprep.subr.mxu0 0.0
    %2260 = vmatpush1.msra.mxu0 0.0
    %2261 = vmatprep.subr.mxu0 0.0
    %2262 = vmatpush1.msra.mxu0 0.0
    %2263 = vmatprep.subr.mxu0 0.0
    %2264 = vmatpush1.msra.mxu0 0.0
    %2265 = vmatprep.subr.mxu0 0.0
    %2266 = vmatpush1.msra.mxu0 0.0
    %2267 = vmatprep.subr.mxu0 0.0
    %2268 = vmatpush1.msra.mxu0 0.0
    %2269 = vmatprep.subr.mxu0 0.0
    %2270 = vmatpush1.msra.mxu0 0.0
    %2271 = vmatprep.subr.mxu0 0.0
    %2272 = vmatpush1.msra.mxu0 0.0
    %2273 = vmatprep.subr.mxu0 0.0
    %2274 = vmatpush1.msra.mxu0 0.0
    %2275 = vmatprep.subr.mxu0 0.0
    %2276 = vmatpush1.msra.mxu0 0.0
    %2277 = vmatprep.subr.mxu0 0.0
    %2278 = vmatpush1.msra.mxu0 0.0
    %2279 = vmatprep.subr.mxu0 0.0
    %2280 = vmatpush1.msra.mxu0 0.0
    %2281 = vmatprep.subr.mxu0 0.0
    %2282 = vmatpush1.msra.mxu0 0.0
    %2283 = vmatprep.subr.mxu0 0.0
    %2284 = vmatpush1.msra.mxu0 0.0
    %2285 = vmatprep.mubr.f32.mxu0 0.0
    %2286 = vmatmul.mubr.f32.gmra.mrb[0].mxu0 %v2076
    %v2287 = vpop.f32.mrb[0].mxu0
    %v2288 = vadd.f32 0.0, %v2287
    %v2289 = vpop.f32.mrb[0].mxu0
    %v2290 = vadd.f32 0.0, %v2289
    %2291 = vdwg.mxu0
    %v2292 = vadd.f32 %v2082, %v2217
    %v2293 = vadd.f32 %v2083, %v2219
    %v2294 = vadd.f32 %v2084, %v2288
    %v2295 = vadd.f32 %v2085, %v2290
    %v2296 = vxor.u32 %v2292, 2147483648
    %v2297 = vmul.f32 %v2296, 1.442695
    %v2298 = vpow.pop %v2297
    %v2299 = vadd.f32 %v2298, 1.0
    %v2300 = vrcp.pop %v2299
    %v2301 = vmul.f32 1.0, %v2300
    %v2302 = vxor.u32 %v2293, 2147483648
    %v2303 = vmul.f32 %v2302, 1.442695
    %v2304 = vpow.pop %v2303
    %v2305 = vadd.f32 %v2304, 1.0
    %v2306 = vrcp.pop %v2305
    %v2307 = vmul.f32 1.0, %v2306
    %v2308 = vtanh.pop %v2294
    %v2309 = vxor.u32 %v2295, 2147483648
    %v2310 = vmul.f32 %v2309, 1.442695
    %v2311 = vpow.pop %v2310
    %v2312 = vadd.f32 %v2311, 1.0
    %v2313 = vrcp.pop %v2312
    %v2314 = vmul.f32 1.0, %v2313
    %v2315 = vmul.f32 %v2307, %v2074
    %v2316 = vmul.f32 %v2301, %v2308
    %v2317 = vadd.f32 %v2315, %v2316
    %v2318 = vtanh.pop %v2317
    %v2319 = vmul.f32 %v2314, %v2318
    %s2320 = scalar_lea.vmem [#allocation3], 56
    %2321 = vst [vmem:[%s2320] sm:$0xff] %v2319
    %v2322 = vld [vmem:[#allocation3] sm:$0xff]
    %v2323 = vld [vmem:[#allocation3 + $0x8] sm:$0xff]
    %v2324 = vld [vmem:[#allocation3 + $0x10] sm:$0xff]
    %v2325 = vld [vmem:[#allocation3 + $0x18] sm:$0xff]
    %v2326 = vld [vmem:[#allocation3 + $0x20] sm:$0xff]
    %v2327 = vld [vmem:[#allocation3 + $0x28] sm:$0xff]
    %v2328 = vld [vmem:[#allocation3 + $0x30] sm:$0xff]
    %v2329 = vld [vmem:[#allocation3 + $0x38] sm:$0xff]
    %v2330 = vld [vmem:[%s4] sm:$0xff]
    %v2331 = vld [vmem:[%s4 + $0x8] sm:$0xff]
    %v2332 = vld [vmem:[%s4 + $0x10] sm:$0xff]
    %v2333 = vld [vmem:[%s4 + $0x18] sm:$0xff]
    %v2334 = vld [vmem:[%s4 + $0x20] sm:$0xff]
    %v2335 = vld [vmem:[%s4 + $0x28] sm:$0xff]
    %v2336 = vld [vmem:[%s4 + $0x30] sm:$0xff]
    %v2337 = vld [vmem:[%s4 + $0x38] sm:$0xff]
    %v2338 = vld [vmem:[%s4 + $0x40] sm:$0xff]
    %v2339 = vld [vmem:[%s4 + $0x48] sm:$0xff]
    %v2340 = vld [vmem:[%s4 + $0x50] sm:$0xff]
    %v2341 = vld [vmem:[%s4 + $0x58] sm:$0xff]
    %v2342 = vld [vmem:[%s4 + $0x60] sm:$0xff]
    %v2343 = vld [vmem:[%s4 + $0x68] sm:$0xff]
    %v2344 = vld [vmem:[%s4 + $0x70] sm:$0xff]
    %v2345 = vld [vmem:[%s4 + $0x78] sm:$0xff]
    %v2346 = vld [vmem:[%s5] sm:$0x1]
    %v2348 = vlaneseq
    %v2349 = vshrl.u32 %v2348, 7
    %v2350 = vsub.s32 0, %v2349
    %v2351 = vrot.slane %v2346, %v2350
    %2353 = vmatprep.subr.mxu0 0.0
    %2354 = vmatpush1.msra.mxu0 %v2330
    %2355 = vmatprep.subr.mxu0 0.0
    %2356 = vmatpush1.msra.mxu0 %v2331
    %2357 = vmatprep.subr.mxu0 0.0
    %2358 = vmatpush1.msra.mxu0 %v2332
    %2359 = vmatprep.subr.mxu0 0.0
    %2360 = vmatpush1.msra.mxu0 %v2333
    %2361 = vmatprep.subr.mxu0 0.0
    %2362 = vmatpush1.msra.mxu0 %v2334
    %2363 = vmatprep.subr.mxu0 0.0
    %2364 = vmatpush1.msra.mxu0 %v2335
    %2365 = vmatprep.subr.mxu0 0.0
    %2366 = vmatpush1.msra.mxu0 %v2336
    %2367 = vmatprep.subr.mxu0 0.0
    %2368 = vmatpush1.msra.mxu0 %v2337
    %2369 = vmatprep.subr.mxu0 0.0
    %2370 = vmatpush1.msra.mxu0 %v2338
    %2371 = vmatprep.subr.mxu0 0.0
    %2372 = vmatpush1.msra.mxu0 %v2339
    %2373 = vmatprep.subr.mxu0 0.0
    %2374 = vmatpush1.msra.mxu0 %v2340
    %2375 = vmatprep.subr.mxu0 0.0
    %2376 = vmatpush1.msra.mxu0 %v2341
    %2377 = vmatprep.subr.mxu0 0.0
    %2378 = vmatpush1.msra.mxu0 %v2342
    %2379 = vmatprep.subr.mxu0 0.0
    %2380 = vmatpush1.msra.mxu0 %v2343
    %2381 = vmatprep.subr.mxu0 0.0
    %2382 = vmatpush1.msra.mxu0 %v2344
    %2383 = vmatprep.subr.mxu0 0.0
    %2384 = vmatpush1.msra.mxu0 %v2345
    %2385 = vmatprep.subr.mxu0 0.0
    %2386 = vmatpush1.msra.mxu0 0.0
    %2387 = vmatprep.subr.mxu0 0.0
    %2388 = vmatpush1.msra.mxu0 0.0
    %2389 = vmatprep.subr.mxu0 0.0
    %2390 = vmatpush1.msra.mxu0 0.0
    %2391 = vmatprep.subr.mxu0 0.0
    %2392 = vmatpush1.msra.mxu0 0.0
    %2393 = vmatprep.subr.mxu0 0.0
    %2394 = vmatpush1.msra.mxu0 0.0
    %2395 = vmatprep.subr.mxu0 0.0
    %2396 = vmatpush1.msra.mxu0 0.0
    %2397 = vmatprep.subr.mxu0 0.0
    %2398 = vmatpush1.msra.mxu0 0.0
    %2399 = vmatprep.subr.mxu0 0.0
    %2400 = vmatpush1.msra.mxu0 0.0
    %2401 = vmatprep.subr.mxu0 0.0
    %2402 = vmatpush1.msra.mxu0 0.0
    %2403 = vmatprep.subr.mxu0 0.0
    %2404 = vmatpush1.msra.mxu0 0.0
    %2405 = vmatprep.subr.mxu0 0.0
    %2406 = vmatpush1.msra.mxu0 0.0
    %2407 = vmatprep.subr.mxu0 0.0
    %2408 = vmatpush1.msra.mxu0 0.0
    %2409 = vmatprep.subr.mxu0 0.0
    %2410 = vmatpush1.msra.mxu0 0.0
    %2411 = vmatprep.subr.mxu0 0.0
    %2412 = vmatpush1.msra.mxu0 0.0
    %2413 = vmatprep.subr.mxu0 0.0
    %2414 = vmatpush1.msra.mxu0 0.0
    %2415 = vmatprep.subr.mxu0 0.0
    %2416 = vmatpush1.msra.mxu0 0.0
    %2417 = vmatprep.mubr.f32.mxu0 0.0
    %2418 = vmatmul.mubr.f32.gmra.mrb[0].mxu0 %v2322
    %v2419 = vpop.f32.mrb[0].mxu0
    %v2420 = vadd.f32 %v2351, %v2419
    %v2421 = vpop.f32.mrb[0].mxu0
    %2422 = vmatprep.mubr.f32.mxu0 0.0
    %2423 = vmatmul.mubr.f32.gmra.mrb[0].mxu0 %v2323
    %v2424 = vpop.f32.mrb[0].mxu0
    %v2425 = vadd.f32 %v2351, %v2424
    %v2426 = vpop.f32.mrb[0].mxu0
    %2427 = vmatprep.mubr.f32.mxu0 0.0
    %2428 = vmatmul.mubr.f32.gmra.mrb[0].mxu0 %v2324
    %v2429 = vpop.f32.mrb[0].mxu0
    %v2430 = vadd.f32 %v2351, %v2429
    %v2431 = vpop.f32.mrb[0].mxu0
    %2432 = vmatprep.mubr.f32.mxu0 0.0
    %2433 = vmatmul.mubr.f32.gmra.mrb[0].mxu0 %v2325
    %v2434 = vpop.f32.mrb[0].mxu0
    %v2435 = vadd.f32 %v2351, %v2434
    %v2436 = vpop.f32.mrb[0].mxu0
    %2437 = vmatprep.mubr.f32.mxu0 0.0
    %2438 = vmatmul.mubr.f32.gmra.mrb[0].mxu0 %v2326
    %v2439 = vpop.f32.mrb[0].mxu0
    %v2440 = vadd.f32 %v2351, %v2439
    %v2441 = vpop.f32.mrb[0].mxu0
    %2442 = vmatprep.mubr.f32.mxu0 0.0
    %2443 = vmatmul.mubr.f32.gmra.mrb[0].mxu0 %v2327
    %v2444 = vpop.f32.mrb[0].mxu0
    %v2445 = vadd.f32 %v2351, %v2444
    %v2446 = vpop.f32.mrb[0].mxu0
    %2447 = vmatprep.mubr.f32.mxu0 0.0
    %2448 = vmatmul.mubr.f32.gmra.mrb[0].mxu0 %v2328
    %v2449 = vpop.f32.mrb[0].mxu0
    %v2450 = vadd.f32 %v2351, %v2449
    %v2451 = vpop.f32.mrb[0].mxu0
    %2452 = vmatprep.mubr.f32.mxu0 0.0
    %2453 = vmatmul.mubr.f32.gmra.mrb[0].mxu0 %v2329
    %v2454 = vpop.f32.mrb[0].mxu0
    %v2455 = vadd.f32 %v2351, %v2454
    %v2456 = vpop.f32.mrb[0].mxu0
    %2457 = vdwg.mxu0
    %v2458 = vmax.f32 %v2420, 0.0
    %v2459 = vmax.f32 %v2425, 0.0
    %v2460 = vmax.f32 %v2430, 0.0
    %v2461 = vmax.f32 %v2435, 0.0
    %v2462 = vmax.f32 %v2440, 0.0
    %v2463 = vmax.f32 %v2445, 0.0
    %v2464 = vmax.f32 %v2450, 0.0
    %v2465 = vmax.f32 %v2455, 0.0
    %v2466 = vld [vmem:[%s6] sm:$0x1]
    %v2468 = vlaneseq
    %v2469 = vshrl.u32 %v2468, 7
    %v2470 = vsub.s32 0, %v2469
    %v2471 = vrot.slane %v2466, %v2470
    %v2473 = vmul.f32 %v2458, %v2471
    %v2474 = vmul.f32 %v2459, %v2471
    %v2475 = vmul.f32 %v2460, %v2471
    %v2476 = vmul.f32 %v2461, %v2471
    %v2477 = vmul.f32 %v2462, %v2471
    %v2478 = vmul.f32 %v2463, %v2471
    %v2479 = vmul.f32 %v2464, %v2471
    %v2480 = vmul.f32 %v2465, %v2471
    %vm2481 = vcmask 523264
    %v2482 = vsel %vm2481, %v2473, 0.0
    %2483 = vadd.xlane.f32.xlu0 %v2482
    %v2484 = vpop.xlane.xlu0 %2483
    %v2485 = vsel %vm2481, %v2474, 0.0
    %2486 = vadd.xlane.f32.xlu0 %v2485
    %v2487 = vpop.xlane.xlu0 %2486
    %v2488 = vsel %vm2481, %v2475, 0.0
    %2489 = vadd.xlane.f32.xlu0 %v2488
    %v2490 = vpop.xlane.xlu0 %2489
    %v2491 = vsel %vm2481, %v2476, 0.0
    %2492 = vadd.xlane.f32.xlu0 %v2491
    %v2493 = vpop.xlane.xlu0 %2492
    %v2494 = vsel %vm2481, %v2477, 0.0
    %2495 = vadd.xlane.f32.xlu0 %v2494
    %v2496 = vpop.xlane.xlu0 %2495
    %v2497 = vsel %vm2481, %v2478, 0.0
    %2498 = vadd.xlane.f32.xlu0 %v2497
    %v2499 = vpop.xlane.xlu0 %2498
    %v2500 = vsel %vm2481, %v2479, 0.0
    %2501 = vadd.xlane.f32.xlu0 %v2500
    %v2502 = vpop.xlane.xlu0 %2501
    %v2503 = vsel %vm2481, %v2480, 0.0
    %2504 = vadd.xlane.f32.xlu0 %v2503
    %v2505 = vpop.xlane.xlu0 %2504
    %v2506 = vld [vmem:[#allocation4] sm:$0x1]
    %v2508 = vlaneseq
    %v2509 = vshrl.u32 %v2508, 7
    %v2510 = vsub.s32 0, %v2509
    %v2511 = vrot.slane %v2506, %v2510
    %v2513 = vadd.f32 %v2484, %v2511
    %v2514 = vadd.f32 %v2487, %v2511
    %v2515 = vadd.f32 %v2490, %v2511
    %v2516 = vadd.f32 %v2493, %v2511
    %v2517 = vadd.f32 %v2496, %v2511
    %v2518 = vadd.f32 %v2499, %v2511
    %v2519 = vadd.f32 %v2502, %v2511
    %v2520 = vadd.f32 %v2505, %v2511
    %v2521 = vtanh.pop %v2513
    %v2522 = vtanh.pop %v2514
    %v2523 = vtanh.pop %v2515
    %v2524 = vtanh.pop %v2516
    %v2525 = vtanh.pop %v2517
    %v2526 = vtanh.pop %v2518
    %v2527 = vtanh.pop %v2519
    %v2528 = vtanh.pop %v2520
    %vm2529 = vcmask 7168
    %2530 = vst.msk [vmem:[%s8] sm:$0xff] %vm2529, %v2521
    %2531 = vst.msk [vmem:[%s8 + $0x8] sm:$0xff] %vm2529, %v2522
    %2532 = vst.msk [vmem:[%s8 + $0x10] sm:$0xff] %vm2529, %v2523
    %2533 = vst.msk [vmem:[%s8 + $0x18] sm:$0xff] %vm2529, %v2524
    %2534 = vst.msk [vmem:[%s8 + $0x20] sm:$0xff] %vm2529, %v2525
    %2535 = vst.msk [vmem:[%s8 + $0x28] sm:$0xff] %vm2529, %v2526
    %2536 = vst.msk [vmem:[%s8 + $0x30] sm:$0xff] %vm2529, %v2527
    %2537 = vst.msk [vmem:[%s8 + $0x38] sm:$0xff] %vm2529, %v2528
    // Predicated region
    $region38: #{tpu_custom_call.1} parent=1 // pred_check
      _
    $region39: #{tpu_custom_call.1} parent=1 // pred_check_branch
      %2539 = sbr.rel (0) target = $region41
    $region40: #{tpu_custom_call.1} parent=1 // pred_region
      _
    $region41: #{tpu_custom_call.1} parent=1 // pred_fallthru
      _
    // Predicated region
    $region42: #{tpu_custom_call.1} parent=1 // pred_check
      _
    $region43: #{tpu_custom_call.1} parent=1 // pred_check_branch
      %2541 = sbr.rel (0) target = $region45
    $region44: #{tpu_custom_call.1} parent=1 // pred_region
      _
    $region45: #{tpu_custom_call.1} parent=1 // pred_fallthru
      _
    %2542 = vsyncpa [#allocation6], 1

</llo_original>
